<compile_context>
chip_gen: v7x
topology: tpu7x:2x2x1
jax: 0.10.0
libtpu: 0.0.40
codegen_flags: <defaults>
</compile_context>

<pallas_src>
import math

import jax
import jax.numpy as jnp
from jax.experimental import pallas as pl
from jax.experimental.pallas import tpu as pltpu

P_THRESHOLD = 0.6


def _softmax_lastdim(x):
    m = jnp.max(x, axis=-1, keepdims=True)
    e = jnp.exp(x - m)
    denom = jnp.sum(e, axis=-1, keepdims=True)
    return e * pl.reciprocal(denom, approx=True)


def _dot(a, b):
    # a @ b (standard (1, 0) contraction)
    return jax.lax.dot_general(a, b, (((1,), (0,)), ((), ())),
                               preferred_element_type=jnp.float32)


def _dot_nt(a, b):
    # a @ b.T -- only used with operands computed in-kernel (k_feat); all weights
    # are pre-transposed in the wrapper so they take the standard contraction.
    return jax.lax.dot_general(a, b, (((1,), (1,)), ((), ())),
                               preferred_element_type=jnp.float32)


def _make_kernel(n_tok, feat_dim, num_classes, max_ch, attn_scaling, b_tile):
    np1 = n_tok + 1
    fd = feat_dim
    scale = (1.0 / math.sqrt(fd)) if attn_scaling else 1.0

    def kernel(xe_ref, w3_ref, b3_ref, viswt_ref, visb_ref, navb_ref,
               logits_ref, feats_ref, maps_ref, nbmap_ref, mmap_scr):
        # Grid-invariant operands: read once per grid step.
        w3 = w3_ref[...]            # [C, 3C]  = [qnav_w | q_w.T | k_w.T]
        b3 = b3_ref[...]            # [1, 3C]
        vis_wt = viswt_ref[...]     # [C, num_classes]
        vis_b = visb_ref[...]       # [1, num_classes]
        navb = navb_ref[...]        # [1, 1]
        # One-hot for the EOS position (= last row of nb_map and the EOS lane mask).
        eos_oh = (jax.lax.broadcasted_iota(jnp.int32, (1, np1), 1)
                  == (np1 - 1)).astype(jnp.float32)            # [1, N+1]

        for s in range(b_tile):                                # unrolled over the sample block
            xe = xe_ref[s]                                     # [N+1, C] (EOS already appended)

            # Fused projection: a single MXU pass yields qnav / q / k features.
            proj = _dot(xe, w3) + b3                           # [N+1, 3C]
            qnav_feat = proj[:n_tok, 0:fd]                     # [N, C]  (= q_fc(x) @ nav_w)
            q_start = jnp.mean(proj[:n_tok, fd:2 * fd],
                               axis=0, keepdims=True)          # [1, C]  (= q_fc(mean(x)))
            k_feat = proj[:, 2 * fd:3 * fd]                    # [N+1, C] (= k_fc(x_ext))

            # start_map = softmax(k_feat @ q_start / sqrt(C)), held as [1, N+1].
            start_map = _softmax_lastdim(_dot_nt(q_start, k_feat) * scale)

            # Neighbor map, rows 0..N-1; the "EOS maps to itself" row stays implicit.
            nb = _softmax_lastdim((_dot_nt(qnav_feat, k_feat) + navb) * scale)   # [N, N+1]
            nbmap_ref[s, 0:n_tok, :] = nb
            nbmap_ref[s, n_tok:np1, :] = eos_oh

            # align_chars (training branch), statically unrolled over max_ch.
            cm = start_map                                     # [1, N+1]
            fin = jnp.zeros((1, 1), jnp.float32)
            for i in range(max_ch):
                maps_ref[s, i:i + 1, :] = cm                   # direct row store (no concat)
                mask_i = (fin == 0.0).astype(jnp.float32)      # [1, 1]
                mmap_scr[i:i + 1, :] = cm * mask_i             # masked copy for char_feats
                if i == max_ch - 1:
                    break
                cm_last = jnp.sum(cm * eos_oh, axis=1, keepdims=True)   # [1, 1]
                fin = fin + (cm_last > P_THRESHOLD).astype(jnp.float32)
                # cm @ nb_map  ==  cm[:, :N] @ nb  +  cm[EOS] * e_EOS
                cm = _dot(cm[:, 0:n_tok], nb) + cm_last * eos_oh

            char_feats = _dot(mmap_scr[...], xe)               # [max_ch, C] (mask pre-applied)
            feats_ref[s] = char_feats
            logits_ref[s] = _dot(char_feats, vis_wt) + vis_b   # [max_ch, num_classes]

    return kernel


def _pick_b_tile(b, np1):
    """Samples per grid step: amortize per-step pipeline overhead (~0.35us) while
    keeping >= 2 grid steps so v7x megacore can shard steps across its 2 TCs."""
    if b <= 1:
        return 1
    row_target = max(1, 256 // np1)       # aim for ~256 MXU rows per projection pass
    best = 1
    for t in range(1, b + 1):
        if b % t == 0 and t <= row_target and (b // t) >= 2:
            best = t
    return best


def neighbor_decoder_forward(x_nchw, params, max_char, attn_scaling=True):
    b, c, h, w = x_nchw.shape
    n_tok = h * w
    np1 = n_tok + 1
    num_classes = params['vis_w'].shape[0]
    hi = jax.lax.Precision.HIGHEST

    # NCHW -> [B, N, C], then append the EOS row once here (not per grid step).
    x = x_nchw.reshape(b, c, n_tok).transpose(0, 2, 1).astype(jnp.float32)
    eos = jnp.broadcast_to(params['eos'].astype(jnp.float32)[None], (b, 1, c))
    x_ext = jnp.concatenate([x, eos], axis=1)                       # [B, N+1, C]

    # Pre-transpose / pre-fuse the grid-invariant weights (done once in XLA).
    q_wt = params['q_w'].T.astype(jnp.float32)                      # [C, C]
    k_wt = params['k_w'].T.astype(jnp.float32)                      # [C, C]
    nav_w = params['nav_w'].astype(jnp.float32)                     # [C, C]
    q_b = params['q_b'].astype(jnp.float32)                         # [1, C]
    k_b = params['k_b'].astype(jnp.float32)                         # [1, C]
    qnav_w = jnp.matmul(q_wt, nav_w, precision=hi)                  # fold bilinear W into q path
    qnav_b = jnp.matmul(q_b, nav_w, precision=hi)                   # [1, C]
    w3 = jnp.concatenate([qnav_w, q_wt, k_wt], axis=1)              # [C, 3C]
    b3 = jnp.concatenate([qnav_b, q_b, k_b], axis=1)                # [1, 3C]
    vis_wt = params['vis_w'].T.astype(jnp.float32)                  # [C, num_classes]
    vis_b = params['vis_b'].astype(jnp.float32)                     # [1, num_classes]
    nav_b = params['nav_b'].astype(jnp.float32)                     # [1, 1]

    b_tile = _pick_b_tile(b, np1)
    grid = (b // b_tile,)
    kernel = _make_kernel(n_tok, c, num_classes, max_char, attn_scaling, b_tile)

    def const_spec(shape):
        return pl.BlockSpec(shape, lambda i: (0, 0))

    in_specs = [
        pl.BlockSpec((b_tile, np1, c), lambda i: (i, 0, 0)),        # x_ext
        const_spec((c, 3 * c)), const_spec((1, 3 * c)),             # fused projection W / b
        const_spec((c, num_classes)), const_spec((1, num_classes)),  # vis_cls
        const_spec((1, 1)),                                         # navigator bias
    ]
    out_shape = (
        jax.ShapeDtypeStruct((b, max_char, num_classes), jnp.float32),  # logits
        jax.ShapeDtypeStruct((b, max_char, c), jnp.float32),            # char_feats
        jax.ShapeDtypeStruct((b, max_char, np1), jnp.float32),          # char_maps
        jax.ShapeDtypeStruct((b, np1, np1), jnp.float32),               # nb_map
    )
    out_specs = (
        pl.BlockSpec((b_tile, max_char, num_classes), lambda i: (i, 0, 0)),
        pl.BlockSpec((b_tile, max_char, c), lambda i: (i, 0, 0)),
        pl.BlockSpec((b_tile, max_char, np1), lambda i: (i, 0, 0)),
        pl.BlockSpec((b_tile, np1, np1), lambda i: (i, 0, 0)),
    )

    logits, char_feats, char_maps, nb_map = pl.pallas_call(
        kernel,
        out_shape=out_shape,
        grid=grid,
        in_specs=in_specs,
        out_specs=out_specs,
        scratch_shapes=[pltpu.VMEM((max_char, np1), jnp.float32)],
        compiler_params=pltpu.CompilerParams(
            dimension_semantics=("parallel",)),
    )(x_ext, w3, b3, vis_wt, vis_b, nav_b)

    # char_masks recomputed here (avoids a 1-lane-wide masked store per grid step):
    # mask_i = 1 iff no earlier char_map had P(EOS) > threshold.
    exceeded = (char_maps[:, :, -1] > P_THRESHOLD).astype(jnp.float32)
    prior = jnp.cumsum(exceeded, axis=1) - exceeded                  # exclusive cumsum
    char_masks = (prior == 0.0).astype(jnp.float32)

    return dict(logits=logits, char_feats=char_feats, char_maps=char_maps,
                char_masks=char_masks, h=h, nb_map=nb_map)


def reference_forward(x_nchw, params, max_char, attn_scaling=True):
    """Plain-JAX reference (mirrors the PyTorch forward, training-mode align)."""
    b, c, h, w = x_nchw.shape
    n = h * w
    x = x_nchw.reshape(b, c, n).transpose(0, 2, 1)
    g = x.mean(axis=1)
    eos = jnp.broadcast_to(params['eos'][0], (b, 1, c))
    x_ext = jnp.concatenate([x, eos], axis=1)
    q_start = g @ params['q_w'].T + params['q_b'][0]
    k_feat = x_ext @ params['k_w'].T + params['k_b'][0]
    start_map = jnp.einsum('bnc,bc->bn', k_feat, q_start)
    if attn_scaling:
        start_map = start_map / math.sqrt(c)
    start_map = jax.nn.softmax(start_map, axis=1)
    q_feat = x @ params['q_w'].T + params['q_b'][0]
    nb = jnp.einsum('bim,mn,bjn->bij', q_feat, params['nav_w'], k_feat)
    nb = nb + params['nav_b'][0, 0]
    if attn_scaling:
        nb = nb / math.sqrt(c)
    nb = jax.nn.softmax(nb, axis=2)
    last = jnp.zeros((n + 1,), jnp.float32).at[-1].set(1.0)
    nb_map = jnp.concatenate([nb, jnp.broadcast_to(last, (b, 1, n + 1))], axis=1)

    cm = start_map
    fin = jnp.zeros((b,), jnp.float32)
    maps, masks = [], []
    for i in range(max_char):
        maps.append(cm)
        masks.append((fin == 0).astype(jnp.float32))
        if i == max_char - 1:
            break
        fin = fin + (cm[:, -1] > P_THRESHOLD).astype(jnp.float32)
        cm = jnp.einsum('bn,bnm->bm', cm, nb_map)
    char_maps = jnp.stack(maps, axis=1)
    char_masks = jnp.stack(masks, axis=1)
    char_feats = jnp.einsum('btn,bnc->btc', char_maps, x_ext) * char_masks[..., None]
    logits = char_feats @ params['vis_w'].T + params['vis_b'][0]
    return dict(logits=logits, char_feats=char_feats, char_maps=char_maps,
                char_masks=char_masks, h=h, nb_map=nb_map)


if __name__ == "__main__":
    B, C, H, W = 8, 32, 8, 8          # feat_dim = 32, N = 64  -> b_tile = 2, grid = (4,)
    NUM_CLASSES = 16
    MAX_CHAR = 6

    key = jax.random.PRNGKey(0)
    ks = jax.random.split(key, 8)
    params = dict(
        eos=(0.02 * jax.random.normal(ks[0], (1, C))).astype(jnp.float32),
        q_w=(0.1 * jax.random.normal(ks[1], (C, C))).astype(jnp.float32),
        q_b=(0.01 * jax.random.normal(ks[2], (1, C))).astype(jnp.float32),
        k_w=(0.1 * jax.random.normal(ks[3], (C, C))).astype(jnp.float32),
        k_b=(0.01 * jax.random.normal(ks[4], (1, C))).astype(jnp.float32),
        nav_w=(0.05 * jax.random.normal(ks[5], (C, C))).astype(jnp.float32),  # xavier_normal(0.1)
        nav_b=jnp.zeros((1, 1), jnp.float32),
        vis_w=(0.1 * jax.random.normal(ks[6], (NUM_CLASSES, C))).astype(jnp.float32),
        vis_b=jnp.zeros((1, NUM_CLASSES), jnp.float32),
    )
    x = jax.random.normal(ks[7], (B, C, H, W), dtype=jnp.float32)

    out = neighbor_decoder_forward(x, params, MAX_CHAR, attn_scaling=True)
    out = jax.tree_util.tree_map(
        lambda a: jax.block_until_ready(a) if isinstance(a, jax.Array) else a, out)

    with jax.default_matmul_precision('highest'):
        ref = reference_forward(x, params, MAX_CHAR, attn_scaling=True)

    for name in ("logits", "char_feats", "char_maps", "char_masks", "nb_map"):
        diff = float(jnp.max(jnp.abs(out[name] - ref[name])))
        if diff > 2e-3:
            raise AssertionError(f"mismatch in {name}: max abs diff {diff}")

    print("KERNEL_OK")
</pallas_src>

<mosaic_0001>
module attributes {stable_mosaic.version = 11 : i64} {
  func.func @kernel(%arg0: i32, %arg1: memref<2x65x32xf32, #tpu.memory_space<vmem>>, %arg2: memref<32x96xf32, #tpu.memory_space<vmem>>, %arg3: memref<1x96xf32, #tpu.memory_space<vmem>>, %arg4: memref<32x16xf32, #tpu.memory_space<vmem>>, %arg5: memref<1x16xf32, #tpu.memory_space<vmem>>, %arg6: memref<1x1xf32, #tpu.memory_space<vmem>>, %arg7: memref<2x6x16xf32, #tpu.memory_space<vmem>>, %arg8: memref<2x6x32xf32, #tpu.memory_space<vmem>>, %arg9: memref<2x6x65xf32, #tpu.memory_space<vmem>>, %arg10: memref<2x65x65xf32, #tpu.memory_space<vmem>>, %arg11: memref<6x65xf32, #tpu.memory_space<vmem>>) attributes {dimension_semantics = [#tpu.dimension_semantics<parallel>], iteration_bounds = array<i64: 4>, scalar_prefetch = 0 : i64, scratch_operands = 1 : i64, tpu.core_type = #tpu.core_type<tc>, window_params = [{transform_indices = @transform_0, window_bounds = array<i64: 2, 65, 32>}, {pipeline_mode = #tpu.pipeline_mode<synchronous>, transform_indices = @transform_1, window_bounds = array<i64: 32, 96>}, {pipeline_mode = #tpu.pipeline_mode<synchronous>, transform_indices = @transform_2, window_bounds = array<i64: 1, 96>}, {pipeline_mode = #tpu.pipeline_mode<synchronous>, transform_indices = @transform_3, window_bounds = array<i64: 32, 16>}, {pipeline_mode = #tpu.pipeline_mode<synchronous>, transform_indices = @transform_4, window_bounds = array<i64: 1, 16>}, {pipeline_mode = #tpu.pipeline_mode<synchronous>, transform_indices = @transform_5, window_bounds = array<i64: 1, 1>}, {transform_indices = @transform_6, window_bounds = array<i64: 2, 6, 16>}, {transform_indices = @transform_7, window_bounds = array<i64: 2, 6, 32>}, {transform_indices = @transform_8, window_bounds = array<i64: 2, 6, 65>}, {transform_indices = @transform_9, window_bounds = array<i64: 2, 65, 65>}]} {
    %c0 = arith.constant 0 : index
    %c0_0 = arith.constant 0 : index
    %0 = vector.load %arg2[%c0, %c0_0] : memref<32x96xf32, #tpu.memory_space<vmem>>, vector<32x96xf32>
    %c0_1 = arith.constant 0 : index
    %c0_2 = arith.constant 0 : index
    %1 = vector.load %arg3[%c0_1, %c0_2] : memref<1x96xf32, #tpu.memory_space<vmem>>, vector<1x96xf32>
    %c0_3 = arith.constant 0 : index
    %c0_4 = arith.constant 0 : index
    %2 = vector.load %arg4[%c0_3, %c0_4] : memref<32x16xf32, #tpu.memory_space<vmem>>, vector<32x16xf32>
    %c0_5 = arith.constant 0 : index
    %c0_6 = arith.constant 0 : index
    %3 = vector.load %arg5[%c0_5, %c0_6] : memref<1x16xf32, #tpu.memory_space<vmem>>, vector<1x16xf32>
    %c0_7 = arith.constant 0 : index
    %c0_8 = arith.constant 0 : index
    %4 = vector.load %arg6[%c0_7, %c0_8] : memref<1x1xf32, #tpu.memory_space<vmem>>, vector<1x1xf32>
    %5 = tpu.iota {dimensions = array<i32: 1>} : vector<1x65xi32>
    %c64_i32 = arith.constant 64 : i32
    %6 = vector.broadcast %c64_i32 : i32 to vector<1x65xi32>
    %7 = arith.cmpi eq, %5, %6 : vector<1x65xi32>
    %8 = arith.extui %7 : vector<1x65xi1> to vector<1x65xi32>
    %9 = arith.sitofp %8 : vector<1x65xi32> to vector<1x65xf32>
    %c0_9 = arith.constant 0 : index
    %c0_10 = arith.constant 0 : index
    %c0_11 = arith.constant 0 : index
    %10 = vector.load %arg1[%c0_9, %c0_10, %c0_11] : memref<2x65x32xf32, #tpu.memory_space<vmem>>, vector<1x65x32xf32>
    %11 = vector.shape_cast %10 : vector<1x65x32xf32> to vector<65x32xf32>
    %cst = arith.constant dense<0.000000e+00> : vector<65x96xf32>
    %12 = tpu.matmul %11, %0, %cst {dimension_numbers = #tpu.dot_dimension_numbers<[1], [0], [0], [1], [0, 0, 1, 1], [], []>} : vector<65x32xf32>, vector<32x96xf32>, vector<65x96xf32> -> vector<65x96xf32>
    %13 = vector.broadcast %1 : vector<1x96xf32> to vector<65x96xf32>
    %14 = arith.addf %12, %13 : vector<65x96xf32>
    %15 = vector.extract_strided_slice %14 {offsets = [0, 0], sizes = [64, 32], strides = [1, 1]} : vector<65x96xf32> to vector<64x32xf32>
    %16 = vector.extract_strided_slice %14 {offsets = [0, 32], sizes = [64, 32], strides = [1, 1]} : vector<65x96xf32> to vector<64x32xf32>
    %cst_12 = arith.constant dense<0.000000e+00> : vector<32xf32>
    %17 = vector.multi_reduction <add>, %16, %cst_12 [0] : vector<64x32xf32> to vector<32xf32>
    %18 = vector.shape_cast %17 : vector<32xf32> to vector<1x32xf32>
    %cst_13 = arith.constant 6.400000e+01 : f32
    %19 = vector.broadcast %cst_13 : f32 to vector<1x32xf32>
    %20 = arith.divf %18, %19 : vector<1x32xf32>
    %21 = vector.extract_strided_slice %14 {offsets = [0, 64], sizes = [65, 32], strides = [1, 1]} : vector<65x96xf32> to vector<65x32xf32>
    %cst_14 = arith.constant dense<0.000000e+00> : vector<1x65xf32>
    %22 = tpu.matmul %20, %21, %cst_14 {dimension_numbers = #tpu.dot_dimension_numbers<[1], [1], [0], [0], [0, 0, 1, 0], [], []>} : vector<1x32xf32>, vector<65x32xf32>, vector<1x65xf32> -> vector<1x65xf32>
    %cst_15 = arith.constant 0.176776692 : f32
    %23 = vector.broadcast %cst_15 : f32 to vector<1x65xf32>
    %24 = arith.mulf %22, %23 : vector<1x65xf32>
    %cst_16 = arith.constant dense<0xFF800000> : vector<1xf32>
    %25 = vector.multi_reduction <maximumf>, %24, %cst_16 [1] : vector<1x65xf32> to vector<1xf32>
    %26 = vector.shape_cast %25 : vector<1xf32> to vector<1x1xf32>
    %27 = vector.broadcast %26 : vector<1x1xf32> to vector<1x65xf32>
    %28 = arith.subf %24, %27 : vector<1x65xf32>
    %29 = math.exp %28 : vector<1x65xf32>
    %cst_17 = arith.constant dense<0.000000e+00> : vector<1xf32>
    %30 = vector.multi_reduction <add>, %29, %cst_17 [1] : vector<1x65xf32> to vector<1xf32>
    %31 = vector.shape_cast %30 : vector<1xf32> to vector<1x1xf32>
    %32 = tpu.reciprocal %31 {approx = true} : vector<1x1xf32> -> vector<1x1xf32>
    %33 = vector.broadcast %32 : vector<1x1xf32> to vector<1x65xf32>
    %34 = arith.mulf %29, %33 : vector<1x65xf32>
    %cst_18 = arith.constant dense<0.000000e+00> : vector<64x65xf32>
    %35 = tpu.matmul %15, %21, %cst_18 {dimension_numbers = #tpu.dot_dimension_numbers<[1], [1], [0], [0], [0, 0, 1, 0], [], []>} : vector<64x32xf32>, vector<65x32xf32>, vector<64x65xf32> -> vector<64x65xf32>
    %36 = vector.broadcast %4 : vector<1x1xf32> to vector<64x65xf32>
    %37 = arith.addf %35, %36 : vector<64x65xf32>
    %cst_19 = arith.constant 0.176776692 : f32
    %38 = vector.broadcast %cst_19 : f32 to vector<64x65xf32>
    %39 = arith.mulf %37, %38 : vector<64x65xf32>
    %cst_20 = arith.constant dense<0xFF800000> : vector<64xf32>
    %40 = vector.multi_reduction <maximumf>, %39, %cst_20 [1] : vector<64x65xf32> to vector<64xf32>
    %41 = vector.shape_cast %40 : vector<64xf32> to vector<64x1xf32>
    %42 = vector.broadcast %41 : vector<64x1xf32> to vector<64x65xf32>
    %43 = arith.subf %39, %42 : vector<64x65xf32>
    %44 = math.exp %43 : vector<64x65xf32>
    %cst_21 = arith.constant dense<0.000000e+00> : vector<64xf32>
    %45 = vector.multi_reduction <add>, %44, %cst_21 [1] : vector<64x65xf32> to vector<64xf32>
    %46 = vector.shape_cast %45 : vector<64xf32> to vector<64x1xf32>
    %47 = tpu.reciprocal %46 {approx = true} : vector<64x1xf32> -> vector<64x1xf32>
    %48 = vector.broadcast %47 : vector<64x1xf32> to vector<64x65xf32>
    %49 = arith.mulf %44, %48 : vector<64x65xf32>
    %c0_22 = arith.constant 0 : index
    %c0_23 = arith.constant 0 : index
    %c0_24 = arith.constant 0 : index
    %50 = vector.load %arg10[%c0_22, %c0_23, %c0_24] : memref<2x65x65xf32, #tpu.memory_space<vmem>>, vector<1x64x65xf32>
    %51 = vector.shape_cast %50 : vector<1x64x65xf32> to vector<64x65xf32>
    %52 = vector.shape_cast %49 : vector<64x65xf32> to vector<1x64x65xf32>
    tpu.vector_store %arg10[%c0_22, %c0_23, %c0_24], %52 {strides = array<i32>} : memref<2x65x65xf32, #tpu.memory_space<vmem>>, vector<1x64x65xf32>,
    %c0_25 = arith.constant 0 : index
    %c64 = arith.constant 64 : index
    %c0_26 = arith.constant 0 : index
    %53 = vector.load %arg10[%c0_25, %c64, %c0_26] : memref<2x65x65xf32, #tpu.memory_space<vmem>>, vector<1x1x65xf32>
    %54 = vector.shape_cast %53 : vector<1x1x65xf32> to vector<1x65xf32>
    %55 = vector.shape_cast %9 : vector<1x65xf32> to vector<1x1x65xf32>
    tpu.vector_store %arg10[%c0_25, %c64, %c0_26], %55 {strides = array<i32>} : memref<2x65x65xf32, #tpu.memory_space<vmem>>, vector<1x1x65xf32>,
    %cst_27 = arith.constant 0.000000e+00 : f32
    %56 = vector.broadcast %cst_27 : f32 to vector<1x1xf32>
    %c0_28 = arith.constant 0 : index
    %c0_29 = arith.constant 0 : index
    %c0_30 = arith.constant 0 : index
    %57 = vector.load %arg9[%c0_28, %c0_29, %c0_30] : memref<2x6x65xf32, #tpu.memory_space<vmem>>, vector<1x1x65xf32>
    %58 = vector.shape_cast %57 : vector<1x1x65xf32> to vector<1x65xf32>
    %59 = vector.shape_cast %34 : vector<1x65xf32> to vector<1x1x65xf32>
    tpu.vector_store %arg9[%c0_28, %c0_29, %c0_30], %59 {strides = array<i32>} : memref<2x6x65xf32, #tpu.memory_space<vmem>>, vector<1x1x65xf32>,
    %cst_31 = arith.constant 0.000000e+00 : f32
    %60 = vector.broadcast %cst_31 : f32 to vector<1x1xf32>
    %61 = arith.cmpf oeq, %56, %60 : vector<1x1xf32>
    %62 = arith.extui %61 : vector<1x1xi1> to vector<1x1xi32>
    %63 = arith.sitofp %62 : vector<1x1xi32> to vector<1x1xf32>
    %64 = vector.broadcast %63 : vector<1x1xf32> to vector<1x65xf32>
    %65 = arith.mulf %34, %64 : vector<1x65xf32>
    %c0_32 = arith.constant 0 : index
    %c0_33 = arith.constant 0 : index
    %66 = vector.load %arg11[%c0_32, %c0_33] : memref<6x65xf32, #tpu.memory_space<vmem>>, vector<1x65xf32>
    tpu.vector_store %arg11[%c0_32, %c0_33], %65 {strides = array<i32>} : memref<6x65xf32, #tpu.memory_space<vmem>>, vector<1x65xf32>,
    %67 = arith.mulf %34, %9 : vector<1x65xf32>
    %cst_34 = arith.constant dense<0.000000e+00> : vector<1xf32>
    %68 = vector.multi_reduction <add>, %67, %cst_34 [1] : vector<1x65xf32> to vector<1xf32>
    %69 = vector.shape_cast %68 : vector<1xf32> to vector<1x1xf32>
    %cst_35 = arith.constant 6.000000e-01 : f32
    %70 = vector.broadcast %cst_35 : f32 to vector<1x1xf32>
    %71 = arith.cmpf ogt, %69, %70 : vector<1x1xf32>
    %72 = arith.extui %71 : vector<1x1xi1> to vector<1x1xi32>
    %73 = arith.sitofp %72 : vector<1x1xi32> to vector<1x1xf32>
    %74 = arith.addf %56, %73 : vector<1x1xf32>
    %75 = vector.extract_strided_slice %34 {offsets = [0, 0], sizes = [1, 64], strides = [1, 1]} : vector<1x65xf32> to vector<1x64xf32>
    %cst_36 = arith.constant dense<0.000000e+00> : vector<1x65xf32>
    %76 = tpu.matmul %75, %49, %cst_36 {dimension_numbers = #tpu.dot_dimension_numbers<[1], [0], [0], [1], [0, 0, 1, 1], [], []>} : vector<1x64xf32>, vector<64x65xf32>, vector<1x65xf32> -> vector<1x65xf32>
    %77 = vector.broadcast %69 : vector<1x1xf32> to vector<1x65xf32>
    %78 = arith.mulf %77, %9 : vector<1x65xf32>
    %79 = arith.addf %76, %78 : vector<1x65xf32>
    %c0_37 = arith.constant 0 : index
    %c1 = arith.constant 1 : index
    %c0_38 = arith.constant 0 : index
    %80 = vector.load %arg9[%c0_37, %c1, %c0_38] : memref<2x6x65xf32, #tpu.memory_space<vmem>>, vector<1x1x65xf32>
    %81 = vector.shape_cast %80 : vector<1x1x65xf32> to vector<1x65xf32>
    %82 = vector.shape_cast %79 : vector<1x65xf32> to vector<1x1x65xf32>
    tpu.vector_store %arg9[%c0_37, %c1, %c0_38], %82 {strides = array<i32>} : memref<2x6x65xf32, #tpu.memory_space<vmem>>, vector<1x1x65xf32>,
    %cst_39 = arith.constant 0.000000e+00 : f32
    %83 = vector.broadcast %cst_39 : f32 to vector<1x1xf32>
    %84 = arith.cmpf oeq, %74, %83 : vector<1x1xf32>
    %85 = arith.extui %84 : vector<1x1xi1> to vector<1x1xi32>
    %86 = arith.sitofp %85 : vector<1x1xi32> to vector<1x1xf32>
    %87 = vector.broadcast %86 : vector<1x1xf32> to vector<1x65xf32>
    %88 = arith.mulf %79, %87 : vector<1x65xf32>
    %c1_40 = arith.constant 1 : index
    %c0_41 = arith.constant 0 : index
    %89 = vector.load %arg11[%c1_40, %c0_41] : memref<6x65xf32, #tpu.memory_space<vmem>>, vector<1x65xf32>
    tpu.vector_store %arg11[%c1_40, %c0_41], %88 {strides = array<i32>} : memref<6x65xf32, #tpu.memory_space<vmem>>, vector<1x65xf32>,
    %90 = arith.mulf %79, %9 : vector<1x65xf32>
    %cst_42 = arith.constant dense<0.000000e+00> : vector<1xf32>
    %91 = vector.multi_reduction <add>, %90, %cst_42 [1] : vector<1x65xf32> to vector<1xf32>
    %92 = vector.shape_cast %91 : vector<1xf32> to vector<1x1xf32>
    %cst_43 = arith.constant 6.000000e-01 : f32
    %93 = vector.broadcast %cst_43 : f32 to vector<1x1xf32>
    %94 = arith.cmpf ogt, %92, %93 : vector<1x1xf32>
    %95 = arith.extui %94 : vector<1x1xi1> to vector<1x1xi32>
    %96 = arith.sitofp %95 : vector<1x1xi32> to vector<1x1xf32>
    %97 = arith.addf %74, %96 : vector<1x1xf32>
    %98 = vector.extract_strided_slice %79 {offsets = [0, 0], sizes = [1, 64], strides = [1, 1]} : vector<1x65xf32> to vector<1x64xf32>
    %cst_44 = arith.constant dense<0.000000e+00> : vector<1x65xf32>
    %99 = tpu.matmul %98, %49, %cst_44 {dimension_numbers = #tpu.dot_dimension_numbers<[1], [0], [0], [1], [0, 0, 1, 1], [], []>} : vector<1x64xf32>, vector<64x65xf32>, vector<1x65xf32> -> vector<1x65xf32>
    %100 = vector.broadcast %92 : vector<1x1xf32> to vector<1x65xf32>
    %101 = arith.mulf %100, %9 : vector<1x65xf32>
    %102 = arith.addf %99, %101 : vector<1x65xf32>
    %c0_45 = arith.constant 0 : index
    %c2 = arith.constant 2 : index
    %c0_46 = arith.constant 0 : index
    %103 = vector.load %arg9[%c0_45, %c2, %c0_46] : memref<2x6x65xf32, #tpu.memory_space<vmem>>, vector<1x1x65xf32>
    %104 = vector.shape_cast %103 : vector<1x1x65xf32> to vector<1x65xf32>
    %105 = vector.shape_cast %102 : vector<1x65xf32> to vector<1x1x65xf32>
    tpu.vector_store %arg9[%c0_45, %c2, %c0_46], %105 {strides = array<i32>} : memref<2x6x65xf32, #tpu.memory_space<vmem>>, vector<1x1x65xf32>,
    %cst_47 = arith.constant 0.000000e+00 : f32
    %106 = vector.broadcast %cst_47 : f32 to vector<1x1xf32>
    %107 = arith.cmpf oeq, %97, %106 : vector<1x1xf32>
    %108 = arith.extui %107 : vector<1x1xi1> to vector<1x1xi32>
    %109 = arith.sitofp %108 : vector<1x1xi32> to vector<1x1xf32>
    %110 = vector.broadcast %109 : vector<1x1xf32> to vector<1x65xf32>
    %111 = arith.mulf %102, %110 : vector<1x65xf32>
    %c2_48 = arith.constant 2 : index
    %c0_49 = arith.constant 0 : index
    %112 = vector.load %arg11[%c2_48, %c0_49] : memref<6x65xf32, #tpu.memory_space<vmem>>, vector<1x65xf32>
    tpu.vector_store %arg11[%c2_48, %c0_49], %111 {strides = array<i32>} : memref<6x65xf32, #tpu.memory_space<vmem>>, vector<1x65xf32>,
    %113 = arith.mulf %102, %9 : vector<1x65xf32>
    %cst_50 = arith.constant dense<0.000000e+00> : vector<1xf32>
    %114 = vector.multi_reduction <add>, %113, %cst_50 [1] : vector<1x65xf32> to vector<1xf32>
    %115 = vector.shape_cast %114 : vector<1xf32> to vector<1x1xf32>
    %cst_51 = arith.constant 6.000000e-01 : f32
    %116 = vector.broadcast %cst_51 : f32 to vector<1x1xf32>
    %117 = arith.cmpf ogt, %115, %116 : vector<1x1xf32>
    %118 = arith.extui %117 : vector<1x1xi1> to vector<1x1xi32>
    %119 = arith.sitofp %118 : vector<1x1xi32> to vector<1x1xf32>
    %120 = arith.addf %97, %119 : vector<1x1xf32>
    %121 = vector.extract_strided_slice %102 {offsets = [0, 0], sizes = [1, 64], strides = [1, 1]} : vector<1x65xf32> to vector<1x64xf32>
    %cst_52 = arith.constant dense<0.000000e+00> : vector<1x65xf32>
    %122 = tpu.matmul %121, %49, %cst_52 {dimension_numbers = #tpu.dot_dimension_numbers<[1], [0], [0], [1], [0, 0, 1, 1], [], []>} : vector<1x64xf32>, vector<64x65xf32>, vector<1x65xf32> -> vector<1x65xf32>
    %123 = vector.broadcast %115 : vector<1x1xf32> to vector<1x65xf32>
    %124 = arith.mulf %123, %9 : vector<1x65xf32>
    %125 = arith.addf %122, %124 : vector<1x65xf32>
    %c0_53 = arith.constant 0 : index
    %c3 = arith.constant 3 : index
    %c0_54 = arith.constant 0 : index
    %126 = vector.load %arg9[%c0_53, %c3, %c0_54] : memref<2x6x65xf32, #tpu.memory_space<vmem>>, vector<1x1x65xf32>
    %127 = vector.shape_cast %126 : vector<1x1x65xf32> to vector<1x65xf32>
    %128 = vector.shape_cast %125 : vector<1x65xf32> to vector<1x1x65xf32>
    tpu.vector_store %arg9[%c0_53, %c3, %c0_54], %128 {strides = array<i32>} : memref<2x6x65xf32, #tpu.memory_space<vmem>>, vector<1x1x65xf32>,
    %cst_55 = arith.constant 0.000000e+00 : f32
    %129 = vector.broadcast %cst_55 : f32 to vector<1x1xf32>
    %130 = arith.cmpf oeq, %120, %129 : vector<1x1xf32>
    %131 = arith.extui %130 : vector<1x1xi1> to vector<1x1xi32>
    %132 = arith.sitofp %131 : vector<1x1xi32> to vector<1x1xf32>
    %133 = vector.broadcast %132 : vector<1x1xf32> to vector<1x65xf32>
    %134 = arith.mulf %125, %133 : vector<1x65xf32>
    %c3_56 = arith.constant 3 : index
    %c0_57 = arith.constant 0 : index
    %135 = vector.load %arg11[%c3_56, %c0_57] : memref<6x65xf32, #tpu.memory_space<vmem>>, vector<1x65xf32>
    tpu.vector_store %arg11[%c3_56, %c0_57], %134 {strides = array<i32>} : memref<6x65xf32, #tpu.memory_space<vmem>>, vector<1x65xf32>,
    %136 = arith.mulf %125, %9 : vector<1x65xf32>
    %cst_58 = arith.constant dense<0.000000e+00> : vector<1xf32>
    %137 = vector.multi_reduction <add>, %136, %cst_58 [1] : vector<1x65xf32> to vector<1xf32>
    %138 = vector.shape_cast %137 : vector<1xf32> to vector<1x1xf32>
    %cst_59 = arith.constant 6.000000e-01 : f32
    %139 = vector.broadcast %cst_59 : f32 to vector<1x1xf32>
    %140 = arith.cmpf ogt, %138, %139 : vector<1x1xf32>
    %141 = arith.extui %140 : vector<1x1xi1> to vector<1x1xi32>
    %142 = arith.sitofp %141 : vector<1x1xi32> to vector<1x1xf32>
    %143 = arith.addf %120, %142 : vector<1x1xf32>
    %144 = vector.extract_strided_slice %125 {offsets = [0, 0], sizes = [1, 64], strides = [1, 1]} : vector<1x65xf32> to vector<1x64xf32>
    %cst_60 = arith.constant dense<0.000000e+00> : vector<1x65xf32>
    %145 = tpu.matmul %144, %49, %cst_60 {dimension_numbers = #tpu.dot_dimension_numbers<[1], [0], [0], [1], [0, 0, 1, 1], [], []>} : vector<1x64xf32>, vector<64x65xf32>, vector<1x65xf32> -> vector<1x65xf32>
    %146 = vector.broadcast %138 : vector<1x1xf32> to vector<1x65xf32>
    %147 = arith.mulf %146, %9 : vector<1x65xf32>
    %148 = arith.addf %145, %147 : vector<1x65xf32>
    %c0_61 = arith.constant 0 : index
    %c4 = arith.constant 4 : index
    %c0_62 = arith.constant 0 : index
    %149 = vector.load %arg9[%c0_61, %c4, %c0_62] : memref<2x6x65xf32, #tpu.memory_space<vmem>>, vector<1x1x65xf32>
    %150 = vector.shape_cast %149 : vector<1x1x65xf32> to vector<1x65xf32>
    %151 = vector.shape_cast %148 : vector<1x65xf32> to vector<1x1x65xf32>
    tpu.vector_store %arg9[%c0_61, %c4, %c0_62], %151 {strides = array<i32>} : memref<2x6x65xf32, #tpu.memory_space<vmem>>, vector<1x1x65xf32>,
    %cst_63 = arith.constant 0.000000e+00 : f32
    %152 = vector.broadcast %cst_63 : f32 to vector<1x1xf32>
    %153 = arith.cmpf oeq, %143, %152 : vector<1x1xf32>
    %154 = arith.extui %153 : vector<1x1xi1> to vector<1x1xi32>
    %155 = arith.sitofp %154 : vector<1x1xi32> to vector<1x1xf32>
    %156 = vector.broadcast %155 : vector<1x1xf32> to vector<1x65xf32>
    %157 = arith.mulf %148, %156 : vector<1x65xf32>
    %c4_64 = arith.constant 4 : index
    %c0_65 = arith.constant 0 : index
    %158 = vector.load %arg11[%c4_64, %c0_65] : memref<6x65xf32, #tpu.memory_space<vmem>>, vector<1x65xf32>
    tpu.vector_store %arg11[%c4_64, %c0_65], %157 {strides = array<i32>} : memref<6x65xf32, #tpu.memory_space<vmem>>, vector<1x65xf32>,
    %159 = arith.mulf %148, %9 : vector<1x65xf32>
    %cst_66 = arith.constant dense<0.000000e+00> : vector<1xf32>
    %160 = vector.multi_reduction <add>, %159, %cst_66 [1] : vector<1x65xf32> to vector<1xf32>
    %161 = vector.shape_cast %160 : vector<1xf32> to vector<1x1xf32>
    %cst_67 = arith.constant 6.000000e-01 : f32
    %162 = vector.broadcast %cst_67 : f32 to vector<1x1xf32>
    %163 = arith.cmpf ogt, %161, %162 : vector<1x1xf32>
    %164 = arith.extui %163 : vector<1x1xi1> to vector<1x1xi32>
    %165 = arith.sitofp %164 : vector<1x1xi32> to vector<1x1xf32>
    %166 = arith.addf %143, %165 : vector<1x1xf32>
    %167 = vector.extract_strided_slice %148 {offsets = [0, 0], sizes = [1, 64], strides = [1, 1]} : vector<1x65xf32> to vector<1x64xf32>
    %cst_68 = arith.constant dense<0.000000e+00> : vector<1x65xf32>
    %168 = tpu.matmul %167, %49, %cst_68 {dimension_numbers = #tpu.dot_dimension_numbers<[1], [0], [0], [1], [0, 0, 1, 1], [], []>} : vector<1x64xf32>, vector<64x65xf32>, vector<1x65xf32> -> vector<1x65xf32>
    %169 = vector.broadcast %161 : vector<1x1xf32> to vector<1x65xf32>
    %170 = arith.mulf %169, %9 : vector<1x65xf32>
    %171 = arith.addf %168, %170 : vector<1x65xf32>
    %c0_69 = arith.constant 0 : index
    %c5 = arith.constant 5 : index
    %c0_70 = arith.constant 0 : index
    %172 = vector.load %arg9[%c0_69, %c5, %c0_70] : memref<2x6x65xf32, #tpu.memory_space<vmem>>, vector<1x1x65xf32>
    %173 = vector.shape_cast %172 : vector<1x1x65xf32> to vector<1x65xf32>
    %174 = vector.shape_cast %171 : vector<1x65xf32> to vector<1x1x65xf32>
    tpu.vector_store %arg9[%c0_69, %c5, %c0_70], %174 {strides = array<i32>} : memref<2x6x65xf32, #tpu.memory_space<vmem>>, vector<1x1x65xf32>,
    %cst_71 = arith.constant 0.000000e+00 : f32
    %175 = vector.broadcast %cst_71 : f32 to vector<1x1xf32>
    %176 = arith.cmpf oeq, %166, %175 : vector<1x1xf32>
    %177 = arith.extui %176 : vector<1x1xi1> to vector<1x1xi32>
    %178 = arith.sitofp %177 : vector<1x1xi32> to vector<1x1xf32>
    %179 = vector.broadcast %178 : vector<1x1xf32> to vector<1x65xf32>
    %180 = arith.mulf %171, %179 : vector<1x65xf32>
    %c5_72 = arith.constant 5 : index
    %c0_73 = arith.constant 0 : index
    %181 = vector.load %arg11[%c5_72, %c0_73] : memref<6x65xf32, #tpu.memory_space<vmem>>, vector<1x65xf32>
    tpu.vector_store %arg11[%c5_72, %c0_73], %180 {strides = array<i32>} : memref<6x65xf32, #tpu.memory_space<vmem>>, vector<1x65xf32>,
    %c0_74 = arith.constant 0 : index
    %c0_75 = arith.constant 0 : index
    %182 = vector.load %arg11[%c0_74, %c0_75] : memref<6x65xf32, #tpu.memory_space<vmem>>, vector<6x65xf32>
    %cst_76 = arith.constant dense<0.000000e+00> : vector<6x32xf32>
    %183 = tpu.matmul %182, %11, %cst_76 {dimension_numbers = #tpu.dot_dimension_numbers<[1], [0], [0], [1], [0, 0, 1, 1], [], []>} : vector<6x65xf32>, vector<65x32xf32>, vector<6x32xf32> -> vector<6x32xf32>
    %c0_77 = arith.constant 0 : index
    %c0_78 = arith.constant 0 : index
    %c0_79 = arith.constant 0 : index
    %184 = vector.load %arg8[%c0_77, %c0_78, %c0_79] : memref<2x6x32xf32, #tpu.memory_space<vmem>>, vector<1x6x32xf32>
    %185 = vector.shape_cast %184 : vector<1x6x32xf32> to vector<6x32xf32>
    %186 = vector.shape_cast %183 : vector<6x32xf32> to vector<1x6x32xf32>
    tpu.vector_store %arg8[%c0_77, %c0_78, %c0_79], %186 {strides = array<i32>} : memref<2x6x32xf32, #tpu.memory_space<vmem>>, vector<1x6x32xf32>,
    %cst_80 = arith.constant dense<0.000000e+00> : vector<6x16xf32>
    %187 = tpu.matmul %183, %2, %cst_80 {dimension_numbers = #tpu.dot_dimension_numbers<[1], [0], [0], [1], [0, 0, 1, 1], [], []>} : vector<6x32xf32>, vector<32x16xf32>, vector<6x16xf32> -> vector<6x16xf32>
    %188 = vector.broadcast %3 : vector<1x16xf32> to vector<6x16xf32>
    %189 = arith.addf %187, %188 : vector<6x16xf32>
    %c0_81 = arith.constant 0 : index
    %c0_82 = arith.constant 0 : index
    %c0_83 = arith.constant 0 : index
    %190 = vector.load %arg7[%c0_81, %c0_82, %c0_83] : memref<2x6x16xf32, #tpu.memory_space<vmem>>, vector<1x6x16xf32>
    %191 = vector.shape_cast %190 : vector<1x6x16xf32> to vector<6x16xf32>
    %192 = vector.shape_cast %189 : vector<6x16xf32> to vector<1x6x16xf32>
    tpu.vector_store %arg7[%c0_81, %c0_82, %c0_83], %192 {strides = array<i32>} : memref<2x6x16xf32, #tpu.memory_space<vmem>>, vector<1x6x16xf32>,
    %c1_84 = arith.constant 1 : index
    %c0_85 = arith.constant 0 : index
    %c0_86 = arith.constant 0 : index
    %193 = vector.load %arg1[%c1_84, %c0_85, %c0_86] : memref<2x65x32xf32, #tpu.memory_space<vmem>>, vector<1x65x32xf32>
    %194 = vector.shape_cast %193 : vector<1x65x32xf32> to vector<65x32xf32>
    %cst_87 = arith.constant dense<0.000000e+00> : vector<65x96xf32>
    %195 = tpu.matmul %194, %0, %cst_87 {dimension_numbers = #tpu.dot_dimension_numbers<[1], [0], [0], [1], [0, 0, 1, 1], [], []>} : vector<65x32xf32>, vector<32x96xf32>, vector<65x96xf32> -> vector<65x96xf32>
    %196 = vector.broadcast %1 : vector<1x96xf32> to vector<65x96xf32>
    %197 = arith.addf %195, %196 : vector<65x96xf32>
    %198 = vector.extract_strided_slice %197 {offsets = [0, 0], sizes = [64, 32], strides = [1, 1]} : vector<65x96xf32> to vector<64x32xf32>
    %199 = vector.extract_strided_slice %197 {offsets = [0, 32], sizes = [64, 32], strides = [1, 1]} : vector<65x96xf32> to vector<64x32xf32>
    %cst_88 = arith.constant dense<0.000000e+00> : vector<32xf32>
    %200 = vector.multi_reduction <add>, %199, %cst_88 [0] : vector<64x32xf32> to vector<32xf32>
    %201 = vector.shape_cast %200 : vector<32xf32> to vector<1x32xf32>
    %cst_89 = arith.constant 6.400000e+01 : f32
    %202 = vector.broadcast %cst_89 : f32 to vector<1x32xf32>
    %203 = arith.divf %201, %202 : vector<1x32xf32>
    %204 = vector.extract_strided_slice %197 {offsets = [0, 64], sizes = [65, 32], strides = [1, 1]} : vector<65x96xf32> to vector<65x32xf32>
    %cst_90 = arith.constant dense<0.000000e+00> : vector<1x65xf32>
    %205 = tpu.matmul %203, %204, %cst_90 {dimension_numbers = #tpu.dot_dimension_numbers<[1], [1], [0], [0], [0, 0, 1, 0], [], []>} : vector<1x32xf32>, vector<65x32xf32>, vector<1x65xf32> -> vector<1x65xf32>
    %cst_91 = arith.constant 0.176776692 : f32
    %206 = vector.broadcast %cst_91 : f32 to vector<1x65xf32>
    %207 = arith.mulf %205, %206 : vector<1x65xf32>
    %cst_92 = arith.constant dense<0xFF800000> : vector<1xf32>
    %208 = vector.multi_reduction <maximumf>, %207, %cst_92 [1] : vector<1x65xf32> to vector<1xf32>
    %209 = vector.shape_cast %208 : vector<1xf32> to vector<1x1xf32>
    %210 = vector.broadcast %209 : vector<1x1xf32> to vector<1x65xf32>
    %211 = arith.subf %207, %210 : vector<1x65xf32>
    %212 = math.exp %211 : vector<1x65xf32>
    %cst_93 = arith.constant dense<0.000000e+00> : vector<1xf32>
    %213 = vector.multi_reduction <add>, %212, %cst_93 [1] : vector<1x65xf32> to vector<1xf32>
    %214 = vector.shape_cast %213 : vector<1xf32> to vector<1x1xf32>
    %215 = tpu.reciprocal %214 {approx = true} : vector<1x1xf32> -> vector<1x1xf32>
    %216 = vector.broadcast %215 : vector<1x1xf32> to vector<1x65xf32>
    %217 = arith.mulf %212, %216 : vector<1x65xf32>
    %cst_94 = arith.constant dense<0.000000e+00> : vector<64x65xf32>
    %218 = tpu.matmul %198, %204, %cst_94 {dimension_numbers = #tpu.dot_dimension_numbers<[1], [1], [0], [0], [0, 0, 1, 0], [], []>} : vector<64x32xf32>, vector<65x32xf32>, vector<64x65xf32> -> vector<64x65xf32>
    %219 = vector.broadcast %4 : vector<1x1xf32> to vector<64x65xf32>
    %220 = arith.addf %218, %219 : vector<64x65xf32>
    %cst_95 = arith.constant 0.176776692 : f32
    %221 = vector.broadcast %cst_95 : f32 to vector<64x65xf32>
    %222 = arith.mulf %220, %221 : vector<64x65xf32>
    %cst_96 = arith.constant dense<0xFF800000> : vector<64xf32>
    %223 = vector.multi_reduction <maximumf>, %222, %cst_96 [1] : vector<64x65xf32> to vector<64xf32>
    %224 = vector.shape_cast %223 : vector<64xf32> to vector<64x1xf32>
    %225 = vector.broadcast %224 : vector<64x1xf32> to vector<64x65xf32>
    %226 = arith.subf %222, %225 : vector<64x65xf32>
    %227 = math.exp %226 : vector<64x65xf32>
    %cst_97 = arith.constant dense<0.000000e+00> : vector<64xf32>
    %228 = vector.multi_reduction <add>, %227, %cst_97 [1] : vector<64x65xf32> to vector<64xf32>
    %229 = vector.shape_cast %228 : vector<64xf32> to vector<64x1xf32>
    %230 = tpu.reciprocal %229 {approx = true} : vector<64x1xf32> -> vector<64x1xf32>
    %231 = vector.broadcast %230 : vector<64x1xf32> to vector<64x65xf32>
    %232 = arith.mulf %227, %231 : vector<64x65xf32>
    %c1_98 = arith.constant 1 : index
    %c0_99 = arith.constant 0 : index
    %c0_100 = arith.constant 0 : index
    %233 = vector.load %arg10[%c1_98, %c0_99, %c0_100] : memref<2x65x65xf32, #tpu.memory_space<vmem>>, vector<1x64x65xf32>
    %234 = vector.shape_cast %233 : vector<1x64x65xf32> to vector<64x65xf32>
    %235 = vector.shape_cast %232 : vector<64x65xf32> to vector<1x64x65xf32>
    tpu.vector_store %arg10[%c1_98, %c0_99, %c0_100], %235 {strides = array<i32>} : memref<2x65x65xf32, #tpu.memory_space<vmem>>, vector<1x64x65xf32>,
    %c1_101 = arith.constant 1 : index
    %c64_102 = arith.constant 64 : index
    %c0_103 = arith.constant 0 : index
    %236 = vector.load %arg10[%c1_101, %c64_102, %c0_103] : memref<2x65x65xf32, #tpu.memory_space<vmem>>, vector<1x1x65xf32>
    %237 = vector.shape_cast %236 : vector<1x1x65xf32> to vector<1x65xf32>
    %238 = vector.shape_cast %9 : vector<1x65xf32> to vector<1x1x65xf32>
    tpu.vector_store %arg10[%c1_101, %c64_102, %c0_103], %238 {strides = array<i32>} : memref<2x65x65xf32, #tpu.memory_space<vmem>>, vector<1x1x65xf32>,
    %cst_104 = arith.constant 0.000000e+00 : f32
    %239 = vector.broadcast %cst_104 : f32 to vector<1x1xf32>
    %c1_105 = arith.constant 1 : index
    %c0_106 = arith.constant 0 : index
    %c0_107 = arith.constant 0 : index
    %240 = vector.load %arg9[%c1_105, %c0_106, %c0_107] : memref<2x6x65xf32, #tpu.memory_space<vmem>>, vector<1x1x65xf32>
    %241 = vector.shape_cast %240 : vector<1x1x65xf32> to vector<1x65xf32>
    %242 = vector.shape_cast %217 : vector<1x65xf32> to vector<1x1x65xf32>
    tpu.vector_store %arg9[%c1_105, %c0_106, %c0_107], %242 {strides = array<i32>} : memref<2x6x65xf32, #tpu.memory_space<vmem>>, vector<1x1x65xf32>,
    %cst_108 = arith.constant 0.000000e+00 : f32
    %243 = vector.broadcast %cst_108 : f32 to vector<1x1xf32>
    %244 = arith.cmpf oeq, %239, %243 : vector<1x1xf32>
    %245 = arith.extui %244 : vector<1x1xi1> to vector<1x1xi32>
    %246 = arith.sitofp %245 : vector<1x1xi32> to vector<1x1xf32>
    %247 = vector.broadcast %246 : vector<1x1xf32> to vector<1x65xf32>
    %248 = arith.mulf %217, %247 : vector<1x65xf32>
    %c0_109 = arith.constant 0 : index
    %c0_110 = arith.constant 0 : index
    %249 = vector.load %arg11[%c0_109, %c0_110] : memref<6x65xf32, #tpu.memory_space<vmem>>, vector<1x65xf32>
    tpu.vector_store %arg11[%c0_109, %c0_110], %248 {strides = array<i32>} : memref<6x65xf32, #tpu.memory_space<vmem>>, vector<1x65xf32>,
    %250 = arith.mulf %217, %9 : vector<1x65xf32>
    %cst_111 = arith.constant dense<0.000000e+00> : vector<1xf32>
    %251 = vector.multi_reduction <add>, %250, %cst_111 [1] : vector<1x65xf32> to vector<1xf32>
    %252 = vector.shape_cast %251 : vector<1xf32> to vector<1x1xf32>
    %cst_112 = arith.constant 6.000000e-01 : f32
    %253 = vector.broadcast %cst_112 : f32 to vector<1x1xf32>
    %254 = arith.cmpf ogt, %252, %253 : vector<1x1xf32>
    %255 = arith.extui %254 : vector<1x1xi1> to vector<1x1xi32>
    %256 = arith.sitofp %255 : vector<1x1xi32> to vector<1x1xf32>
    %257 = arith.addf %239, %256 : vector<1x1xf32>
    %258 = vector.extract_strided_slice %217 {offsets = [0, 0], sizes = [1, 64], strides = [1, 1]} : vector<1x65xf32> to vector<1x64xf32>
    %cst_113 = arith.constant dense<0.000000e+00> : vector<1x65xf32>
    %259 = tpu.matmul %258, %232, %cst_113 {dimension_numbers = #tpu.dot_dimension_numbers<[1], [0], [0], [1], [0, 0, 1, 1], [], []>} : vector<1x64xf32>, vector<64x65xf32>, vector<1x65xf32> -> vector<1x65xf32>
    %260 = vector.broadcast %252 : vector<1x1xf32> to vector<1x65xf32>
    %261 = arith.mulf %260, %9 : vector<1x65xf32>
    %262 = arith.addf %259, %261 : vector<1x65xf32>
    %c1_114 = arith.constant 1 : index
    %c1_115 = arith.constant 1 : index
    %c0_116 = arith.constant 0 : index
    %263 = vector.load %arg9[%c1_114, %c1_115, %c0_116] : memref<2x6x65xf32, #tpu.memory_space<vmem>>, vector<1x1x65xf32>
    %264 = vector.shape_cast %263 : vector<1x1x65xf32> to vector<1x65xf32>
    %265 = vector.shape_cast %262 : vector<1x65xf32> to vector<1x1x65xf32>
    tpu.vector_store %arg9[%c1_114, %c1_115, %c0_116], %265 {strides = array<i32>} : memref<2x6x65xf32, #tpu.memory_space<vmem>>, vector<1x1x65xf32>,
    %cst_117 = arith.constant 0.000000e+00 : f32
    %266 = vector.broadcast %cst_117 : f32 to vector<1x1xf32>
    %267 = arith.cmpf oeq, %257, %266 : vector<1x1xf32>
    %268 = arith.extui %267 : vector<1x1xi1> to vector<1x1xi32>
    %269 = arith.sitofp %268 : vector<1x1xi32> to vector<1x1xf32>
    %270 = vector.broadcast %269 : vector<1x1xf32> to vector<1x65xf32>
    %271 = arith.mulf %262, %270 : vector<1x65xf32>
    %c1_118 = arith.constant 1 : index
    %c0_119 = arith.constant 0 : index
    %272 = vector.load %arg11[%c1_118, %c0_119] : memref<6x65xf32, #tpu.memory_space<vmem>>, vector<1x65xf32>
    tpu.vector_store %arg11[%c1_118, %c0_119], %271 {strides = array<i32>} : memref<6x65xf32, #tpu.memory_space<vmem>>, vector<1x65xf32>,
    %273 = arith.mulf %262, %9 : vector<1x65xf32>
    %cst_120 = arith.constant dense<0.000000e+00> : vector<1xf32>
    %274 = vector.multi_reduction <add>, %273, %cst_120 [1] : vector<1x65xf32> to vector<1xf32>
    %275 = vector.shape_cast %274 : vector<1xf32> to vector<1x1xf32>
    %cst_121 = arith.constant 6.000000e-01 : f32
    %276 = vector.broadcast %cst_121 : f32 to vector<1x1xf32>
    %277 = arith.cmpf ogt, %275, %276 : vector<1x1xf32>
    %278 = arith.extui %277 : vector<1x1xi1> to vector<1x1xi32>
    %279 = arith.sitofp %278 : vector<1x1xi32> to vector<1x1xf32>
    %280 = arith.addf %257, %279 : vector<1x1xf32>
    %281 = vector.extract_strided_slice %262 {offsets = [0, 0], sizes = [1, 64], strides = [1, 1]} : vector<1x65xf32> to vector<1x64xf32>
    %cst_122 = arith.constant dense<0.000000e+00> : vector<1x65xf32>
    %282 = tpu.matmul %281, %232, %cst_122 {dimension_numbers = #tpu.dot_dimension_numbers<[1], [0], [0], [1], [0, 0, 1, 1], [], []>} : vector<1x64xf32>, vector<64x65xf32>, vector<1x65xf32> -> vector<1x65xf32>
    %283 = vector.broadcast %275 : vector<1x1xf32> to vector<1x65xf32>
    %284 = arith.mulf %283, %9 : vector<1x65xf32>
    %285 = arith.addf %282, %284 : vector<1x65xf32>
    %c1_123 = arith.constant 1 : index
    %c2_124 = arith.constant 2 : index
    %c0_125 = arith.constant 0 : index
    %286 = vector.load %arg9[%c1_123, %c2_124, %c0_125] : memref<2x6x65xf32, #tpu.memory_space<vmem>>, vector<1x1x65xf32>
    %287 = vector.shape_cast %286 : vector<1x1x65xf32> to vector<1x65xf32>
    %288 = vector.shape_cast %285 : vector<1x65xf32> to vector<1x1x65xf32>
    tpu.vector_store %arg9[%c1_123, %c2_124, %c0_125], %288 {strides = array<i32>} : memref<2x6x65xf32, #tpu.memory_space<vmem>>, vector<1x1x65xf32>,
    %cst_126 = arith.constant 0.000000e+00 : f32
    %289 = vector.broadcast %cst_126 : f32 to vector<1x1xf32>
    %290 = arith.cmpf oeq, %280, %289 : vector<1x1xf32>
    %291 = arith.extui %290 : vector<1x1xi1> to vector<1x1xi32>
    %292 = arith.sitofp %291 : vector<1x1xi32> to vector<1x1xf32>
    %293 = vector.broadcast %292 : vector<1x1xf32> to vector<1x65xf32>
    %294 = arith.mulf %285, %293 : vector<1x65xf32>
    %c2_127 = arith.constant 2 : index
    %c0_128 = arith.constant 0 : index
    %295 = vector.load %arg11[%c2_127, %c0_128] : memref<6x65xf32, #tpu.memory_space<vmem>>, vector<1x65xf32>
    tpu.vector_store %arg11[%c2_127, %c0_128], %294 {strides = array<i32>} : memref<6x65xf32, #tpu.memory_space<vmem>>, vector<1x65xf32>,
    %296 = arith.mulf %285, %9 : vector<1x65xf32>
    %cst_129 = arith.constant dense<0.000000e+00> : vector<1xf32>
    %297 = vector.multi_reduction <add>, %296, %cst_129 [1] : vector<1x65xf32> to vector<1xf32>
    %298 = vector.shape_cast %297 : vector<1xf32> to vector<1x1xf32>
    %cst_130 = arith.constant 6.000000e-01 : f32
    %299 = vector.broadcast %cst_130 : f32 to vector<1x1xf32>
    %300 = arith.cmpf ogt, %298, %299 : vector<1x1xf32>
    %301 = arith.extui %300 : vector<1x1xi1> to vector<1x1xi32>
    %302 = arith.sitofp %301 : vector<1x1xi32> to vector<1x1xf32>
    %303 = arith.addf %280, %302 : vector<1x1xf32>
    %304 = vector.extract_strided_slice %285 {offsets = [0, 0], sizes = [1, 64], strides = [1, 1]} : vector<1x65xf32> to vector<1x64xf32>
    %cst_131 = arith.constant dense<0.000000e+00> : vector<1x65xf32>
    %305 = tpu.matmul %304, %232, %cst_131 {dimension_numbers = #tpu.dot_dimension_numbers<[1], [0], [0], [1], [0, 0, 1, 1], [], []>} : vector<1x64xf32>, vector<64x65xf32>, vector<1x65xf32> -> vector<1x65xf32>
    %306 = vector.broadcast %298 : vector<1x1xf32> to vector<1x65xf32>
    %307 = arith.mulf %306, %9 : vector<1x65xf32>
    %308 = arith.addf %305, %307 : vector<1x65xf32>
    %c1_132 = arith.constant 1 : index
    %c3_133 = arith.constant 3 : index
    %c0_134 = arith.constant 0 : index
    %309 = vector.load %arg9[%c1_132, %c3_133, %c0_134] : memref<2x6x65xf32, #tpu.memory_space<vmem>>, vector<1x1x65xf32>
    %310 = vector.shape_cast %309 : vector<1x1x65xf32> to vector<1x65xf32>
    %311 = vector.shape_cast %308 : vector<1x65xf32> to vector<1x1x65xf32>
    tpu.vector_store %arg9[%c1_132, %c3_133, %c0_134], %311 {strides = array<i32>} : memref<2x6x65xf32, #tpu.memory_space<vmem>>, vector<1x1x65xf32>,
    %cst_135 = arith.constant 0.000000e+00 : f32
    %312 = vector.broadcast %cst_135 : f32 to vector<1x1xf32>
    %313 = arith.cmpf oeq, %303, %312 : vector<1x1xf32>
    %314 = arith.extui %313 : vector<1x1xi1> to vector<1x1xi32>
    %315 = arith.sitofp %314 : vector<1x1xi32> to vector<1x1xf32>
    %316 = vector.broadcast %315 : vector<1x1xf32> to vector<1x65xf32>
    %317 = arith.mulf %308, %316 : vector<1x65xf32>
    %c3_136 = arith.constant 3 : index
    %c0_137 = arith.constant 0 : index
    %318 = vector.load %arg11[%c3_136, %c0_137] : memref<6x65xf32, #tpu.memory_space<vmem>>, vector<1x65xf32>
    tpu.vector_store %arg11[%c3_136, %c0_137], %317 {strides = array<i32>} : memref<6x65xf32, #tpu.memory_space<vmem>>, vector<1x65xf32>,
    %319 = arith.mulf %308, %9 : vector<1x65xf32>
    %cst_138 = arith.constant dense<0.000000e+00> : vector<1xf32>
    %320 = vector.multi_reduction <add>, %319, %cst_138 [1] : vector<1x65xf32> to vector<1xf32>
    %321 = vector.shape_cast %320 : vector<1xf32> to vector<1x1xf32>
    %cst_139 = arith.constant 6.000000e-01 : f32
    %322 = vector.broadcast %cst_139 : f32 to vector<1x1xf32>
    %323 = arith.cmpf ogt, %321, %322 : vector<1x1xf32>
    %324 = arith.extui %323 : vector<1x1xi1> to vector<1x1xi32>
    %325 = arith.sitofp %324 : vector<1x1xi32> to vector<1x1xf32>
    %326 = arith.addf %303, %325 : vector<1x1xf32>
    %327 = vector.extract_strided_slice %308 {offsets = [0, 0], sizes = [1, 64], strides = [1, 1]} : vector<1x65xf32> to vector<1x64xf32>
    %cst_140 = arith.constant dense<0.000000e+00> : vector<1x65xf32>
    %328 = tpu.matmul %327, %232, %cst_140 {dimension_numbers = #tpu.dot_dimension_numbers<[1], [0], [0], [1], [0, 0, 1, 1], [], []>} : vector<1x64xf32>, vector<64x65xf32>, vector<1x65xf32> -> vector<1x65xf32>
    %329 = vector.broadcast %321 : vector<1x1xf32> to vector<1x65xf32>
    %330 = arith.mulf %329, %9 : vector<1x65xf32>
    %331 = arith.addf %328, %330 : vector<1x65xf32>
    %c1_141 = arith.constant 1 : index
    %c4_142 = arith.constant 4 : index
    %c0_143 = arith.constant 0 : index
    %332 = vector.load %arg9[%c1_141, %c4_142, %c0_143] : memref<2x6x65xf32, #tpu.memory_space<vmem>>, vector<1x1x65xf32>
    %333 = vector.shape_cast %332 : vector<1x1x65xf32> to vector<1x65xf32>
    %334 = vector.shape_cast %331 : vector<1x65xf32> to vector<1x1x65xf32>
    tpu.vector_store %arg9[%c1_141, %c4_142, %c0_143], %334 {strides = array<i32>} : memref<2x6x65xf32, #tpu.memory_space<vmem>>, vector<1x1x65xf32>,
    %cst_144 = arith.constant 0.000000e+00 : f32
    %335 = vector.broadcast %cst_144 : f32 to vector<1x1xf32>
    %336 = arith.cmpf oeq, %326, %335 : vector<1x1xf32>
    %337 = arith.extui %336 : vector<1x1xi1> to vector<1x1xi32>
    %338 = arith.sitofp %337 : vector<1x1xi32> to vector<1x1xf32>
    %339 = vector.broadcast %338 : vector<1x1xf32> to vector<1x65xf32>
    %340 = arith.mulf %331, %339 : vector<1x65xf32>
    %c4_145 = arith.constant 4 : index
    %c0_146 = arith.constant 0 : index
    %341 = vector.load %arg11[%c4_145, %c0_146] : memref<6x65xf32, #tpu.memory_space<vmem>>, vector<1x65xf32>
    tpu.vector_store %arg11[%c4_145, %c0_146], %340 {strides = array<i32>} : memref<6x65xf32, #tpu.memory_space<vmem>>, vector<1x65xf32>,
    %342 = arith.mulf %331, %9 : vector<1x65xf32>
    %cst_147 = arith.constant dense<0.000000e+00> : vector<1xf32>
    %343 = vector.multi_reduction <add>, %342, %cst_147 [1] : vector<1x65xf32> to vector<1xf32>
    %344 = vector.shape_cast %343 : vector<1xf32> to vector<1x1xf32>
    %cst_148 = arith.constant 6.000000e-01 : f32
    %345 = vector.broadcast %cst_148 : f32 to vector<1x1xf32>
    %346 = arith.cmpf ogt, %344, %345 : vector<1x1xf32>
    %347 = arith.extui %346 : vector<1x1xi1> to vector<1x1xi32>
    %348 = arith.sitofp %347 : vector<1x1xi32> to vector<1x1xf32>
    %349 = arith.addf %326, %348 : vector<1x1xf32>
    %350 = vector.extract_strided_slice %331 {offsets = [0, 0], sizes = [1, 64], strides = [1, 1]} : vector<1x65xf32> to vector<1x64xf32>
    %cst_149 = arith.constant dense<0.000000e+00> : vector<1x65xf32>
    %351 = tpu.matmul %350, %232, %cst_149 {dimension_numbers = #tpu.dot_dimension_numbers<[1], [0], [0], [1], [0, 0, 1, 1], [], []>} : vector<1x64xf32>, vector<64x65xf32>, vector<1x65xf32> -> vector<1x65xf32>
    %352 = vector.broadcast %344 : vector<1x1xf32> to vector<1x65xf32>
    %353 = arith.mulf %352, %9 : vector<1x65xf32>
    %354 = arith.addf %351, %353 : vector<1x65xf32>
    %c1_150 = arith.constant 1 : index
    %c5_151 = arith.constant 5 : index
    %c0_152 = arith.constant 0 : index
    %355 = vector.load %arg9[%c1_150, %c5_151, %c0_152] : memref<2x6x65xf32, #tpu.memory_space<vmem>>, vector<1x1x65xf32>
    %356 = vector.shape_cast %355 : vector<1x1x65xf32> to vector<1x65xf32>
    %357 = vector.shape_cast %354 : vector<1x65xf32> to vector<1x1x65xf32>
    tpu.vector_store %arg9[%c1_150, %c5_151, %c0_152], %357 {strides = array<i32>} : memref<2x6x65xf32, #tpu.memory_space<vmem>>, vector<1x1x65xf32>,
    %cst_153 = arith.constant 0.000000e+00 : f32
    %358 = vector.broadcast %cst_153 : f32 to vector<1x1xf32>
    %359 = arith.cmpf oeq, %349, %358 : vector<1x1xf32>
    %360 = arith.extui %359 : vector<1x1xi1> to vector<1x1xi32>
    %361 = arith.sitofp %360 : vector<1x1xi32> to vector<1x1xf32>
    %362 = vector.broadcast %361 : vector<1x1xf32> to vector<1x65xf32>
    %363 = arith.mulf %354, %362 : vector<1x65xf32>
    %c5_154 = arith.constant 5 : index
    %c0_155 = arith.constant 0 : index
    %364 = vector.load %arg11[%c5_154, %c0_155] : memref<6x65xf32, #tpu.memory_space<vmem>>, vector<1x65xf32>
    tpu.vector_store %arg11[%c5_154, %c0_155], %363 {strides = array<i32>} : memref<6x65xf32, #tpu.memory_space<vmem>>, vector<1x65xf32>,
    %c0_156 = arith.constant 0 : index
    %c0_157 = arith.constant 0 : index
    %365 = vector.load %arg11[%c0_156, %c0_157] : memref<6x65xf32, #tpu.memory_space<vmem>>, vector<6x65xf32>
    %cst_158 = arith.constant dense<0.000000e+00> : vector<6x32xf32>
    %366 = tpu.matmul %365, %194, %cst_158 {dimension_numbers = #tpu.dot_dimension_numbers<[1], [0], [0], [1], [0, 0, 1, 1], [], []>} : vector<6x65xf32>, vector<65x32xf32>, vector<6x32xf32> -> vector<6x32xf32>
    %c1_159 = arith.constant 1 : index
    %c0_160 = arith.constant 0 : index
    %c0_161 = arith.constant 0 : index
    %367 = vector.load %arg8[%c1_159, %c0_160, %c0_161] : memref<2x6x32xf32, #tpu.memory_space<vmem>>, vector<1x6x32xf32>
    %368 = vector.shape_cast %367 : vector<1x6x32xf32> to vector<6x32xf32>
    %369 = vector.shape_cast %366 : vector<6x32xf32> to vector<1x6x32xf32>
    tpu.vector_store %arg8[%c1_159, %c0_160, %c0_161], %369 {strides = array<i32>} : memref<2x6x32xf32, #tpu.memory_space<vmem>>, vector<1x6x32xf32>,
    %cst_162 = arith.constant dense<0.000000e+00> : vector<6x16xf32>
    %370 = tpu.matmul %366, %2, %cst_162 {dimension_numbers = #tpu.dot_dimension_numbers<[1], [0], [0], [1], [0, 0, 1, 1], [], []>} : vector<6x32xf32>, vector<32x16xf32>, vector<6x16xf32> -> vector<6x16xf32>
    %371 = vector.broadcast %3 : vector<1x16xf32> to vector<6x16xf32>
    %372 = arith.addf %370, %371 : vector<6x16xf32>
    %c1_163 = arith.constant 1 : index
    %c0_164 = arith.constant 0 : index
    %c0_165 = arith.constant 0 : index
    %373 = vector.load %arg7[%c1_163, %c0_164, %c0_165] : memref<2x6x16xf32, #tpu.memory_space<vmem>>, vector<1x6x16xf32>
    %374 = vector.shape_cast %373 : vector<1x6x16xf32> to vector<6x16xf32>
    %375 = vector.shape_cast %372 : vector<6x16xf32> to vector<1x6x16xf32>
    tpu.vector_store %arg7[%c1_163, %c0_164, %c0_165], %375 {strides = array<i32>} : memref<2x6x16xf32, #tpu.memory_space<vmem>>, vector<1x6x16xf32>,
    return
  }
  func.func @transform_0(%arg0: i32) -> (i32, i32, i32) {
    %c0_i32 = arith.constant 0 : i32
    %c0_i32_0 = arith.constant 0 : i32
    %c0_i32_1 = arith.constant 0 : i32
    return %arg0, %c0_i32, %c0_i32_0 : i32, i32, i32
  }
  func.func @transform_1(%arg0: i32) -> (i32, i32) {
    %c0_i32 = arith.constant 0 : i32
    %c0_i32_0 = arith.constant 0 : i32
    %c0_i32_1 = arith.constant 0 : i32
    return %c0_i32, %c0_i32_0 : i32, i32
  }
  func.func @transform_2(%arg0: i32) -> (i32, i32) {
    %c0_i32 = arith.constant 0 : i32
    %c0_i32_0 = arith.constant 0 : i32
    %c0_i32_1 = arith.constant 0 : i32
    return %c0_i32, %c0_i32_0 : i32, i32
  }
  func.func @transform_3(%arg0: i32) -> (i32, i32) {
    %c0_i32 = arith.constant 0 : i32
    %c0_i32_0 = arith.constant 0 : i32
    %c0_i32_1 = arith.constant 0 : i32
    return %c0_i32, %c0_i32_0 : i32, i32
  }
  func.func @transform_4(%arg0: i32) -> (i32, i32) {
    %c0_i32 = arith.constant 0 : i32
    %c0_i32_0 = arith.constant 0 : i32
    %c0_i32_1 = arith.constant 0 : i32
    return %c0_i32, %c0_i32_0 : i32, i32
  }
  func.func @transform_5(%arg0: i32) -> (i32, i32) {
    %c0_i32 = arith.constant 0 : i32
    %c0_i32_0 = arith.constant 0 : i32
    %c0_i32_1 = arith.constant 0 : i32
    return %c0_i32, %c0_i32_0 : i32, i32
  }
  func.func @transform_6(%arg0: i32) -> (i32, i32, i32) {
    %c0_i32 = arith.constant 0 : i32
    %c0_i32_0 = arith.constant 0 : i32
    %c0_i32_1 = arith.constant 0 : i32
    return %arg0, %c0_i32, %c0_i32_0 : i32, i32, i32
  }
  func.func @transform_7(%arg0: i32) -> (i32, i32, i32) {
    %c0_i32 = arith.constant 0 : i32
    %c0_i32_0 = arith.constant 0 : i32
    %c0_i32_1 = arith.constant 0 : i32
    return %arg0, %c0_i32, %c0_i32_0 : i32, i32, i32
  }
  func.func @transform_8(%arg0: i32) -> (i32, i32, i32) {
    %c0_i32 = arith.constant 0 : i32
    %c0_i32_0 = arith.constant 0 : i32
    %c0_i32_1 = arith.constant 0 : i32
    return %arg0, %c0_i32, %c0_i32_0 : i32, i32, i32
  }
  func.func @transform_9(%arg0: i32) -> (i32, i32, i32) {
    %c0_i32 = arith.constant 0 : i32
    %c0_i32_0 = arith.constant 0 : i32
    %c0_i32_1 = arith.constant 0 : i32
    return %arg0, %c0_i32, %c0_i32_0 : i32, i32, i32
  }
}

</mosaic_0001>

<llo_original>
// kernel: tpu_custom_call.1
$region0: #{tpu_custom_call.1}
  #allocation0 [shape = 'u32[]', space=smem, size = 0x4, offset = 0x4, fixed_abs, tag = 'smem constant byte address 0x4 - core index']
  #allocation1 [shape = 'u32[144,128]{1,0:T(1,128)}', space=vmem, size = 0x12000, scoped, tag = 'internal scratch']
  #allocation2 [shape = 'f32[6,65]{1,0:T(8,128)}', space=vmem, size = 0x1000, scoped, tag = 'scratch operand']
  #allocation3 [shape = 'f32[1,1]{1,0:T(1,128)S(1)}', space=vmem, size = 0x200, scoped, tag = 'scoped memory for tpu_custom_call.1']
  %s0 = inlined_call_operand.vmem [shape: f32[8,65,32], index: 0, kind: input, shape index: {}]
  %s1 = inlined_call_operand.vmem [shape: f32[32,96], index: 1, kind: input, shape index: {}]
  %s2 = inlined_call_operand.vmem [shape: f32[1,96], index: 2, kind: input, shape index: {}]
  %s3 = inlined_call_operand.vmem [shape: f32[32,16], index: 3, kind: input, shape index: {}]
  %s4 = inlined_call_operand.vmem [shape: f32[1,16], index: 4, kind: input, shape index: {}]
  %s5 = inlined_call_operand.<no memory space> [shape: f32[1,1], index: 5, kind: input, shape index: {}]
  %s6 = inlined_call_operand.vmem [shape: f32[8,6,16], index: 6, kind: output, shape index: {0}]
  %s7 = inlined_call_operand.vmem [shape: f32[8,6,32], index: 7, kind: output, shape index: {1}]
  %s8 = inlined_call_operand.vmem [shape: f32[8,6,65], index: 8, kind: output, shape index: {2}]
  %s9 = inlined_call_operand.vmem [shape: f32[8,65,65], index: 9, kind: output, shape index: {3}]
  %10 = xla_tuple %s6, %s7, %s8, %s9
  %s11 = sld [smem:[#allocation0]]
  $region81: #{tpu_custom_call.1} parent=0
    _
  %s13 = ssub.s32 1, %s11
  %s14 = scalar_select 0, %s13, %s11
  %v15 = vstv %s5
  %16 = vst [vmem:[#allocation3] sm:$0x1] %v15
  loop: start=0, step=1, limit=6
  $region2: #{tpu_custom_call.1} parent=0 // loop_pre_header
    _
  $region3: #{tpu_custom_call.1} parent=0 // loop_header
    %s18 = sphi 0, %s22
    %p19 = scmp.ge.s32.totalorder %s18, 6
    %s28 = sphi 0, %s30
    %s31 = sphi 0, %s28
    %s32 = sphi 0, %s31
    %s48 = sphi 0, %s32
    %s52 = sphi 0, %s52
    %s54 = sphi 0, %s52
    %s55 = sphi 0, %s54
    %s69 = sphi 0, %s55
    %s73 = sphi 0, %s73
    %s75 = sphi 0, %s73
    %s76 = sphi 0, %s75
    %s90 = sphi 0, %s76
    %s94 = sphi 0, %s94
    %s96 = sphi 0, %s94
    %s97 = sphi 0, %s96
    %s111 = sphi 0, %s97
    %s115 = sphi 0, %s115
    %s117 = sphi 0, %s115
    %s118 = sphi 0, %s117
    %s132 = sphi 0, %s118
    %s136 = sphi 0, %s136
    %s138 = sphi 0, %s136
    %s139 = sphi 0, %s138
    %s153 = sphi 0, %s139
    %s159 = sphi 0, %s161
    %s162 = sphi 0, %s159
    %s163 = sphi 0, %s162
    %s179 = sphi 0, %s163
    %s185 = sphi 0, %s187
    %s188 = sphi 0, %s185
    %s189 = sphi 0, %s188
    %s205 = sphi 0, %s189
    %s211 = sphi 0, %s213
    %s214 = sphi 0, %s211
    %s215 = sphi 0, %s214
    %s231 = sphi 0, %s215
    %s237 = sphi 0, %s239
    %s240 = sphi 0, %s237
    %s241 = sphi 0, %s240
    %s257 = sphi 0, %s241
  $region4: #{tpu_custom_call.1} parent=0 // loop_header_branch
    %21 = sbr.rel (%p19) target = $region8
  $region5: #{tpu_custom_call.1} parent=0 // loop_body
    %s23 = ssub.s32 %s18, 1
    %s24 = ssub.s32 %s18, 2
    %s25 = sadd.s32 %s18, 1
    %s26 = ssub.s32 %s18, %s25
    %p27 = scmp.eq.s32.totalorder %s26, 0
    %s29 = sadd.s32 %s28, 1
    %s30 = scalar_select %p27, %s28, %s29
    %p33 = pneg %p27
    %p34 = scmp.eq.s32.totalorder %s18, 3
    %p35 = por %p33, %p34
    %p36 = scmp.ne.s32.totalorder %s28, %s31
    %p37 = scmp.eq.s32.totalorder %s18, 0
    %p38 = por %p36, %p37
    %p39 = scmp.ne.s32.totalorder %s28, %s31
    %p40 = scmp.eq.s32.totalorder %s23, 3
    %p41 = por %p39, %p40
    %p42 = scmp.ne.s32.totalorder %s31, %s32
    %p43 = scmp.eq.s32.totalorder %s23, 0
    %p44 = por %p42, %p43
    %p45 = scmp.ne.s32.totalorder %s31, %s32
    %p46 = scmp.eq.s32.totalorder %s24, 3
    %p47 = por %p45, %p46
    %p49 = scmp.ne.s32.totalorder %s32, %s48
    %p50 = scmp.eq.s32.totalorder %s24, 0
    %p51 = por %p49, %p50
    %s53 = sadd.s32 %s52, 1
    %p56 = scmp.eq.s32.totalorder %s18, 3
    %p57 = scmp.ne.s32.totalorder %s52, %s54
    %p58 = scmp.eq.s32.totalorder %s18, 0
    %p59 = por %p57, %p58
    %p60 = scmp.ne.s32.totalorder %s52, %s54
    %p61 = scmp.eq.s32.totalorder %s23, 3
    %p62 = por %p60, %p61
    %p63 = scmp.ne.s32.totalorder %s54, %s55
    %p64 = scmp.eq.s32.totalorder %s23, 0
    %p65 = por %p63, %p64
    %p66 = scmp.ne.s32.totalorder %s54, %s55
    %p67 = scmp.eq.s32.totalorder %s24, 3
    %p68 = por %p66, %p67
    %p70 = scmp.ne.s32.totalorder %s55, %s69
    %p71 = scmp.eq.s32.totalorder %s24, 0
    %p72 = por %p70, %p71
    %s74 = sadd.s32 %s73, 1
    %p77 = scmp.eq.s32.totalorder %s18, 3
    %p78 = scmp.ne.s32.totalorder %s73, %s75
    %p79 = scmp.eq.s32.totalorder %s18, 0
    %p80 = por %p78, %p79
    %p81 = scmp.ne.s32.totalorder %s73, %s75
    %p82 = scmp.eq.s32.totalorder %s23, 3
    %p83 = por %p81, %p82
    %p84 = scmp.ne.s32.totalorder %s75, %s76
    %p85 = scmp.eq.s32.totalorder %s23, 0
    %p86 = por %p84, %p85
    %p87 = scmp.ne.s32.totalorder %s75, %s76
    %p88 = scmp.eq.s32.totalorder %s24, 3
    %p89 = por %p87, %p88
    %p91 = scmp.ne.s32.totalorder %s76, %s90
    %p92 = scmp.eq.s32.totalorder %s24, 0
    %p93 = por %p91, %p92
    %s95 = sadd.s32 %s94, 1
    %p98 = scmp.eq.s32.totalorder %s18, 3
    %p99 = scmp.ne.s32.totalorder %s94, %s96
    %p100 = scmp.eq.s32.totalorder %s18, 0
    %p101 = por %p99, %p100
    %p102 = scmp.ne.s32.totalorder %s94, %s96
    %p103 = scmp.eq.s32.totalorder %s23, 3
    %p104 = por %p102, %p103
    %p105 = scmp.ne.s32.totalorder %s96, %s97
    %p106 = scmp.eq.s32.totalorder %s23, 0
    %p107 = por %p105, %p106
    %p108 = scmp.ne.s32.totalorder %s96, %s97
    %p109 = scmp.eq.s32.totalorder %s24, 3
    %p110 = por %p108, %p109
    %p112 = scmp.ne.s32.totalorder %s97, %s111
    %p113 = scmp.eq.s32.totalorder %s24, 0
    %p114 = por %p112, %p113
    %s116 = sadd.s32 %s115, 1
    %p119 = scmp.eq.s32.totalorder %s18, 3
    %p120 = scmp.ne.s32.totalorder %s115, %s117
    %p121 = scmp.eq.s32.totalorder %s18, 0
    %p122 = por %p120, %p121
    %p123 = scmp.ne.s32.totalorder %s115, %s117
    %p124 = scmp.eq.s32.totalorder %s23, 3
    %p125 = por %p123, %p124
    %p126 = scmp.ne.s32.totalorder %s117, %s118
    %p127 = scmp.eq.s32.totalorder %s23, 0
    %p128 = por %p126, %p127
    %p129 = scmp.ne.s32.totalorder %s117, %s118
    %p130 = scmp.eq.s32.totalorder %s24, 3
    %p131 = por %p129, %p130
    %p133 = scmp.ne.s32.totalorder %s118, %s132
    %p134 = scmp.eq.s32.totalorder %s24, 0
    %p135 = por %p133, %p134
    %s137 = sadd.s32 %s136, 1
    %p140 = scmp.eq.s32.totalorder %s18, 3
    %p141 = scmp.ne.s32.totalorder %s136, %s138
    %p142 = scmp.eq.s32.totalorder %s18, 0
    %p143 = por %p141, %p142
    %p144 = scmp.ne.s32.totalorder %s136, %s138
    %p145 = scmp.eq.s32.totalorder %s23, 3
    %p146 = por %p144, %p145
    %p147 = scmp.ne.s32.totalorder %s138, %s139
    %p148 = scmp.eq.s32.totalorder %s23, 0
    %p149 = por %p147, %p148
    %p150 = scmp.ne.s32.totalorder %s138, %s139
    %p151 = scmp.eq.s32.totalorder %s24, 3
    %p152 = por %p150, %p151
    %p154 = scmp.ne.s32.totalorder %s139, %s153
    %p155 = scmp.eq.s32.totalorder %s24, 0
    %p156 = por %p154, %p155
    %s157 = ssub.s32 %s18, %s25
    %p158 = scmp.eq.s32.totalorder %s157, 0
    %s160 = sadd.s32 %s159, 1
    %s161 = scalar_select %p158, %s159, %s160
    %p164 = pneg %p158
    %p165 = scmp.eq.s32.totalorder %s18, 3
    %p166 = por %p164, %p165
    %p167 = scmp.ne.s32.totalorder %s159, %s162
    %p168 = scmp.eq.s32.totalorder %s18, 0
    %p169 = por %p167, %p168
    %p170 = scmp.ne.s32.totalorder %s159, %s162
    %p171 = scmp.eq.s32.totalorder %s23, 3
    %p172 = por %p170, %p171
    %p173 = scmp.ne.s32.totalorder %s162, %s163
    %p174 = scmp.eq.s32.totalorder %s23, 0
    %p175 = por %p173, %p174
    %p176 = scmp.ne.s32.totalorder %s162, %s163
    %p177 = scmp.eq.s32.totalorder %s24, 3
    %p178 = por %p176, %p177
    %p180 = scmp.ne.s32.totalorder %s163, %s179
    %p181 = scmp.eq.s32.totalorder %s24, 0
    %p182 = por %p180, %p181
    %s183 = ssub.s32 %s18, %s25
    %p184 = scmp.eq.s32.totalorder %s183, 0
    %s186 = sadd.s32 %s185, 1
    %s187 = scalar_select %p184, %s185, %s186
    %p190 = pneg %p184
    %p191 = scmp.eq.s32.totalorder %s18, 3
    %p192 = por %p190, %p191
    %p193 = scmp.ne.s32.totalorder %s185, %s188
    %p194 = scmp.eq.s32.totalorder %s18, 0
    %p195 = por %p193, %p194
    %p196 = scmp.ne.s32.totalorder %s185, %s188
    %p197 = scmp.eq.s32.totalorder %s23, 3
    %p198 = por %p196, %p197
    %p199 = scmp.ne.s32.totalorder %s188, %s189
    %p200 = scmp.eq.s32.totalorder %s23, 0
    %p201 = por %p199, %p200
    %p202 = scmp.ne.s32.totalorder %s188, %s189
    %p203 = scmp.eq.s32.totalorder %s24, 3
    %p204 = por %p202, %p203
    %p206 = scmp.ne.s32.totalorder %s189, %s205
    %p207 = scmp.eq.s32.totalorder %s24, 0
    %p208 = por %p206, %p207
    %s209 = ssub.s32 %s18, %s25
    %p210 = scmp.eq.s32.totalorder %s209, 0
    %s212 = sadd.s32 %s211, 1
    %s213 = scalar_select %p210, %s211, %s212
    %p216 = pneg %p210
    %p217 = scmp.eq.s32.totalorder %s18, 3
    %p218 = por %p216, %p217
    %p219 = scmp.ne.s32.totalorder %s211, %s214
    %p220 = scmp.eq.s32.totalorder %s18, 0
    %p221 = por %p219, %p220
    %p222 = scmp.ne.s32.totalorder %s211, %s214
    %p223 = scmp.eq.s32.totalorder %s23, 3
    %p224 = por %p222, %p223
    %p225 = scmp.ne.s32.totalorder %s214, %s215
    %p226 = scmp.eq.s32.totalorder %s23, 0
    %p227 = por %p225, %p226
    %p228 = scmp.ne.s32.totalorder %s214, %s215
    %p229 = scmp.eq.s32.totalorder %s24, 3
    %p230 = por %p228, %p229
    %p232 = scmp.ne.s32.totalorder %s215, %s231
    %p233 = scmp.eq.s32.totalorder %s24, 0
    %p234 = por %p232, %p233
    %s235 = ssub.s32 %s18, %s25
    %p236 = scmp.eq.s32.totalorder %s235, 0
    %s238 = sadd.s32 %s237, 1
    %s239 = scalar_select %p236, %s237, %s238
    %p242 = pneg %p236
    %p243 = scmp.eq.s32.totalorder %s18, 3
    %p244 = por %p242, %p243
    %p245 = scmp.ne.s32.totalorder %s237, %s240
    %p246 = scmp.eq.s32.totalorder %s18, 0
    %p247 = por %p245, %p246
    %p248 = scmp.ne.s32.totalorder %s237, %s240
    %p249 = scmp.eq.s32.totalorder %s23, 3
    %p250 = por %p248, %p249
    %p251 = scmp.ne.s32.totalorder %s240, %s241
    %p252 = scmp.eq.s32.totalorder %s23, 0
    %p253 = por %p251, %p252
    %p254 = scmp.ne.s32.totalorder %s240, %s241
    %p255 = scmp.eq.s32.totalorder %s24, 3
    %p256 = por %p254, %p255
    %p258 = scmp.ne.s32.totalorder %s241, %s257
    %p259 = scmp.eq.s32.totalorder %s24, 0
    %p260 = por %p258, %p259
    %p261 = scmp.le.s32.totalorder 1, %s18
    %p262 = scmp.lt.s32.totalorder %s18, 5
    %p263 = pnand %p261, %p262
    %p264 = pneg %p263
    // Predicated region
    $region9: #{tpu_custom_call.1} parent=5 // pred_check
      _
    $region10: #{tpu_custom_call.1} parent=5 // pred_check_branch
      %266 = sbr.rel (%p263) target = $region12
    $region11: #{tpu_custom_call.1} parent=5 // pred_region
      %s267 = ssub.s32 %s18, 1
      // Predicated region
      $region13: #{tpu_custom_call.1} parent=11 // pred_check
        %p268 = pneg %p65
      $region14: #{tpu_custom_call.1} parent=11 // pred_check_branch
        %270 = sbr.rel (%p268) target = $region16
      $region15: #{tpu_custom_call.1} parent=11 // pred_region
        _
      $region16: #{tpu_custom_call.1} parent=11 // pred_fallthru
        _
      // Predicated region
      $region17: #{tpu_custom_call.1} parent=11 // pred_check
        %p271 = pneg %p86
      $region18: #{tpu_custom_call.1} parent=11 // pred_check_branch
        %273 = sbr.rel (%p271) target = $region20
      $region19: #{tpu_custom_call.1} parent=11 // pred_region
        _
      $region20: #{tpu_custom_call.1} parent=11 // pred_fallthru
        _
      // Predicated region
      $region21: #{tpu_custom_call.1} parent=11 // pred_check
        %p274 = pneg %p107
      $region22: #{tpu_custom_call.1} parent=11 // pred_check_branch
        %276 = sbr.rel (%p274) target = $region24
      $region23: #{tpu_custom_call.1} parent=11 // pred_region
        _
      $region24: #{tpu_custom_call.1} parent=11 // pred_fallthru
        _
      // Predicated region
      $region25: #{tpu_custom_call.1} parent=11 // pred_check
        %p277 = pneg %p128
      $region26: #{tpu_custom_call.1} parent=11 // pred_check_branch
        %279 = sbr.rel (%p277) target = $region28
      $region27: #{tpu_custom_call.1} parent=11 // pred_region
        _
      $region28: #{tpu_custom_call.1} parent=11 // pred_fallthru
        _
      // Predicated region
      $region29: #{tpu_custom_call.1} parent=11 // pred_check
        %p280 = pneg %p149
      $region30: #{tpu_custom_call.1} parent=11 // pred_check_branch
        %282 = sbr.rel (%p280) target = $region32
      $region31: #{tpu_custom_call.1} parent=11 // pred_region
        _
      $region32: #{tpu_custom_call.1} parent=11 // pred_fallthru
        _
    $region12: #{tpu_custom_call.1} parent=5 // pred_fallthru
      _
    %p283 = scmp.lt.s32.totalorder %s18, 4
    // Predicated region
    $region33: #{tpu_custom_call.1} parent=5 // pred_check
      %p284 = pneg %p283
    $region34: #{tpu_custom_call.1} parent=5 // pred_check_branch
      %286 = sbr.rel (%p284) target = $region36
    $region35: #{tpu_custom_call.1} parent=5 // pred_region
      // Predicated region
      $region37: #{tpu_custom_call.1} parent=35 // pred_check
        %p287 = pneg %p38
      $region38: #{tpu_custom_call.1} parent=35 // pred_check_branch
        %289 = sbr.rel (%p287) target = $region40
      $region39: #{tpu_custom_call.1} parent=35 // pred_region
        %s290 = smul.u32 2, %s18
        %p291 = scmp.lt.s32.totalorder %s290, 7
        %s292 = scalar_select %p291, %s290, 7
        %s293 = smul.addr %s292, 9
        %s294 = smul.addr %s293, 8
        %s295 = scalar_lea.vmem %s0, %s294
        %s296 = smul.u32 2, %s18
      $region40: #{tpu_custom_call.1} parent=35 // pred_fallthru
        _
    $region36: #{tpu_custom_call.1} parent=5 // pred_fallthru
      _
    %p297 = scmp.le.s32.totalorder 1, %s18
    %p298 = scmp.lt.s32.totalorder %s18, 5
    %p299 = pnand %p297, %p298
    %p300 = pneg %p299
    // Predicated region
    $region41: #{tpu_custom_call.1} parent=5 // pred_check
      _
    $region42: #{tpu_custom_call.1} parent=5 // pred_check_branch
      %302 = sbr.rel (%p299) target = $region44
    $region43: #{tpu_custom_call.1} parent=5 // pred_region
      %s303 = ssub.s32 %s18, 1
      %s304 = smul.u32 2, %s23
      %p305 = scmp.lt.s32.totalorder %s304, 7
      %s306 = scalar_select %p305, %s304, 7
      %s307 = smul.addr %s306, 9
      %s308 = smul.addr %s307, 8
      %s309 = scalar_lea.vmem %s0, %s308
      %p310 = pneg %p44
      %p311 = pneg %p41
      %p312 = pneg %p65
      %p313 = pneg %p62
      %p314 = pneg %p86
      %p315 = pneg %p83
      %p316 = pneg %p107
      %p317 = pneg %p104
      %p318 = pneg %p128
      %p319 = pneg %p125
      %p320 = pneg %p149
      %p321 = pneg %p146
      %p322 = pneg %p175
      %p323 = pneg %p172
      %s324 = smul.u32 2, %s23
      %p325 = scmp.lt.s32.totalorder %s324, 7
      %s326 = scalar_select %p325, %s324, 7
      %s327 = smul.addr %s326, 8
      %s328 = scalar_lea.vmem %s6, %s327
      %p329 = pneg %p201
      %p330 = pneg %p198
      %s331 = smul.u32 2, %s23
      %p332 = scmp.lt.s32.totalorder %s331, 7
      %s333 = scalar_select %p332, %s331, 7
      %s334 = smul.addr %s333, 8
      %s335 = scalar_lea.vmem %s7, %s334
      %p336 = pneg %p227
      %p337 = pneg %p224
      %s338 = smul.u32 2, %s23
      %p339 = scmp.lt.s32.totalorder %s338, 7
      %s340 = scalar_select %p339, %s338, 7
      %s341 = smul.addr %s340, 8
      %s342 = scalar_lea.vmem %s8, %s341
      %p343 = pneg %p253
      %p344 = pneg %p250
      %s345 = smul.u32 2, %s23
      %p346 = scmp.lt.s32.totalorder %s345, 7
      %s347 = scalar_select %p346, %s345, 7
      %s348 = smul.addr %s347, 9
      %s349 = smul.addr %s348, 8
      %s350 = scalar_lea.vmem %s9, %s349
      %s351 = smul.u32 2, %s23
      %p352 = scmp.lt.s32.totalorder %s351, 7
      %s353 = scalar_select %p352, %s351, 7
      %s354 = smul.addr %s353, 9
      %s355 = smul.addr %s354, 8
      %s356 = scalar_lea.vmem %s0, %s355
      %s357 = smul.u32 2, %s23
      %s358 = smul.u32 2, %s23
      %p359 = scmp.lt.s32.totalorder %s358, 7
      %s360 = scalar_select %p359, %s358, 7
      %s361 = smul.addr %s360, 8
      %s362 = scalar_lea.vmem %s6, %s361
      %s363 = smul.u32 2, %s23
      %s364 = smul.u32 2, %s23
      %p365 = scmp.lt.s32.totalorder %s364, 7
      %s366 = scalar_select %p365, %s364, 7
      %s367 = smul.addr %s366, 8
      %s368 = scalar_lea.vmem %s7, %s367
      %s369 = smul.u32 2, %s23
      %s370 = smul.u32 2, %s23
      %p371 = scmp.lt.s32.totalorder %s370, 7
      %s372 = scalar_select %p371, %s370, 7
      %s373 = smul.addr %s372, 8
      %s374 = scalar_lea.vmem %s8, %s373
      %s375 = smul.u32 2, %s23
      %s376 = smul.u32 2, %s23
      %p377 = scmp.lt.s32.totalorder %s376, 7
      %s378 = scalar_select %p377, %s376, 7
      %s379 = smul.addr %s378, 9
      %s380 = smul.addr %s379, 8
      %s381 = scalar_lea.vmem %s9, %s380
      %s382 = smul.u32 2, %s23
      %v383 = vld [vmem:[%s1] sm:$0xff]
      %v384 = vld [vmem:[%s1 + $0x8] sm:$0xff]
      %v385 = vld [vmem:[%s1 + $0x10] sm:$0xff]
      %v386 = vld [vmem:[%s1 + $0x18] sm:$0xff]
      %v387 = vld [vmem:[%s2] sm:$0x1]
      %v388 = vld [vmem:[%s3] sm:$0xff]
      %v389 = vld [vmem:[%s3 + $0x8] sm:$0xff]
      %v390 = vld [vmem:[%s3 + $0x10] sm:$0xff]
      %v391 = vld [vmem:[%s3 + $0x18] sm:$0xff]
      %v392 = vld [vmem:[%s4] sm:$0x1]
      %v393 = vld [vmem:[#allocation3] sm:$0x1]
      %v394 = vlaneseq
      %v395 = vand.u32 %v394, 127
      %vm396 = vcmp.eq.s32.totalorder %v395, 64
      %v397 = vsel %vm396, 1, 0
      %v398 = vcvt.s32.f32 %v397
      %v399 = vld [vmem:[%s356] sm:$0xff]
      %v400 = vld [vmem:[%s356 + $0x8] sm:$0xff]
      %v401 = vld [vmem:[%s356 + $0x10] sm:$0xff]
      %v402 = vld [vmem:[%s356 + $0x18] sm:$0xff]
      %v403 = vld [vmem:[%s356 + $0x20] sm:$0xff]
      %v404 = vld [vmem:[%s356 + $0x28] sm:$0xff]
      %v405 = vld [vmem:[%s356 + $0x30] sm:$0xff]
      %v406 = vld [vmem:[%s356 + $0x38] sm:$0xff]
      %v407 = vld [vmem:[%s356 + $0x40] sm:$0x1]
      %v409 = vlaneseq
      %v410 = vshrl.u32 %v409, 7
      %v411 = vsub.s32 0, %v410
      %v412 = vrot.slane %v387, %v411
      %vm414 = vcmask 261120
      %v416 = vsel %vm414, %v399, 0
      %v419 = vsel %vm414, %v400, 0
      %v422 = vsel %vm414, %v401, 0
      %v425 = vsel %vm414, %v402, 0
      %v428 = vsel %vm414, %v403, 0
      %v431 = vsel %vm414, %v404, 0
      %v434 = vsel %vm414, %v405, 0
      %v437 = vsel %vm414, %v406, 0
      %v440 = vsel %vm414, %v407, 0
      %442 = vmatprep.subr.mxu0 0.0
      %443 = vmatpush1.msra.mxu0 %v383
      %444 = vmatprep.subr.mxu0 0.0
      %445 = vmatpush1.msra.mxu0 %v384
      %446 = vmatprep.subr.mxu0 0.0
      %447 = vmatpush1.msra.mxu0 %v385
      %448 = vmatprep.subr.mxu0 0.0
      %449 = vmatpush1.msra.mxu0 %v386
      %450 = vmatprep.subr.mxu0 0.0
      %451 = vmatpush1.msra.mxu0 0.0
      %452 = vmatprep.subr.mxu0 0.0
      %453 = vmatpush1.msra.mxu0 0.0
      %454 = vmatprep.subr.mxu0 0.0
      %455 = vmatpush1.msra.mxu0 0.0
      %456 = vmatprep.subr.mxu0 0.0
      %457 = vmatpush1.msra.mxu0 0.0
      %458 = vmatprep.subr.mxu0 0.0
      %459 = vmatpush1.msra.mxu0 0.0
      %460 = vmatprep.subr.mxu0 0.0
      %461 = vmatpush1.msra.mxu0 0.0
      %462 = vmatprep.subr.mxu0 0.0
      %463 = vmatpush1.msra.mxu0 0.0
      %464 = vmatprep.subr.mxu0 0.0
      %465 = vmatpush1.msra.mxu0 0.0
      %466 = vmatprep.subr.mxu0 0.0
      %467 = vmatpush1.msra.mxu0 0.0
      %468 = vmatprep.subr.mxu0 0.0
      %469 = vmatpush1.msra.mxu0 0.0
      %470 = vmatprep.subr.mxu0 0.0
      %471 = vmatpush1.msra.mxu0 0.0
      %472 = vmatprep.subr.mxu0 0.0
      %473 = vmatpush1.msra.mxu0 0.0
      %474 = vmatprep.subr.mxu0 0.0
      %475 = vmatpush1.msra.mxu0 0.0
      %476 = vmatprep.subr.mxu0 0.0
      %477 = vmatpush1.msra.mxu0 0.0
      %478 = vmatprep.subr.mxu0 0.0
      %479 = vmatpush1.msra.mxu0 0.0
      %480 = vmatprep.subr.mxu0 0.0
      %481 = vmatpush1.msra.mxu0 0.0
      %482 = vmatprep.subr.mxu0 0.0
      %483 = vmatpush1.msra.mxu0 0.0
      %484 = vmatprep.subr.mxu0 0.0
      %485 = vmatpush1.msra.mxu0 0.0
      %486 = vmatprep.subr.mxu0 0.0
      %487 = vmatpush1.msra.mxu0 0.0
      %488 = vmatprep.subr.mxu0 0.0
      %489 = vmatpush1.msra.mxu0 0.0
      %490 = vmatprep.subr.mxu0 0.0
      %491 = vmatpush1.msra.mxu0 0.0
      %492 = vmatprep.subr.mxu0 0.0
      %493 = vmatpush1.msra.mxu0 0.0
      %494 = vmatprep.subr.mxu0 0.0
      %495 = vmatpush1.msra.mxu0 0.0
      %496 = vmatprep.subr.mxu0 0.0
      %497 = vmatpush1.msra.mxu0 0.0
      %498 = vmatprep.subr.mxu0 0.0
      %499 = vmatpush1.msra.mxu0 0.0
      %500 = vmatprep.subr.mxu0 0.0
      %501 = vmatpush1.msra.mxu0 0.0
      %502 = vmatprep.subr.mxu0 0.0
      %503 = vmatpush1.msra.mxu0 0.0
      %504 = vmatprep.subr.mxu0 0.0
      %505 = vmatpush1.msra.mxu0 0.0
      %506 = vmatprep.mubr.f32.mxu0 0.0
      %507 = vmatmul.mubr.f32.gmra.mrb[0].mxu0 %v416
      %v508 = vpop.f32.mrb[0].mxu0
      %v509 = vadd.f32 %v412, %v508
      %v510 = vpop.f32.mrb[0].mxu0
      %511 = vmatprep.mubr.f32.mxu0 0.0
      %512 = vmatmul.mubr.f32.gmra.mrb[0].mxu0 %v419
      %v513 = vpop.f32.mrb[0].mxu0
      %v514 = vadd.f32 %v412, %v513
      %v515 = vpop.f32.mrb[0].mxu0
      %516 = vmatprep.mubr.f32.mxu0 0.0
      %517 = vmatmul.mubr.f32.gmra.mrb[0].mxu0 %v422
      %v518 = vpop.f32.mrb[0].mxu0
      %v519 = vadd.f32 %v412, %v518
      %v520 = vpop.f32.mrb[0].mxu0
      %521 = vmatprep.mubr.f32.mxu0 0.0
      %522 = vmatmul.mubr.f32.gmra.mrb[0].mxu0 %v425
      %v523 = vpop.f32.mrb[0].mxu0
      %v524 = vadd.f32 %v412, %v523
      %v525 = vpop.f32.mrb[0].mxu0
      %526 = vmatprep.mubr.f32.mxu0 0.0
      %527 = vmatmul.mubr.f32.gmra.mrb[0].mxu0 %v428
      %v528 = vpop.f32.mrb[0].mxu0
      %v529 = vadd.f32 %v412, %v528
      %v530 = vpop.f32.mrb[0].mxu0
      %531 = vmatprep.mubr.f32.mxu0 0.0
      %532 = vmatmul.mubr.f32.gmra.mrb[0].mxu0 %v431
      %v533 = vpop.f32.mrb[0].mxu0
      %v534 = vadd.f32 %v412, %v533
      %v535 = vpop.f32.mrb[0].mxu0
      %536 = vmatprep.mubr.f32.mxu0 0.0
      %537 = vmatmul.mubr.f32.gmra.mrb[0].mxu0 %v434
      %v538 = vpop.f32.mrb[0].mxu0
      %v539 = vadd.f32 %v412, %v538
      %v540 = vpop.f32.mrb[0].mxu0
      %541 = vmatprep.mubr.f32.mxu0 0.0
      %542 = vmatmul.mubr.f32.gmra.mrb[0].mxu0 %v437
      %v543 = vpop.f32.mrb[0].mxu0
      %v544 = vadd.f32 %v412, %v543
      %v545 = vpop.f32.mrb[0].mxu0
      %546 = vmatprep.mubr.f32.mxu0 0.0
      %547 = vmatmul.mubr.f32.gmra.mrb[0].mxu0 %v440
      %v548 = vpop.f32.mrb[0].mxu0
      %v549 = vadd.f32 %v412, %v548
      %v550 = vpop.f32.mrb[0].mxu0
      %551 = vdwg.mxu0
      %vm552 = vcmask 523520
      %v553 = vsel %vm552, %v509, 0.0
      %v554 = vsel %vm552, %v514, 0.0
      %v555 = vadd.f32 %v553, %v554
      %v556 = vsel %vm552, %v519, 0.0
      %v557 = vadd.f32 %v555, %v556
      %v558 = vsel %vm552, %v524, 0.0
      %v559 = vadd.f32 %v557, %v558
      %v560 = vsel %vm552, %v529, 0.0
      %v561 = vadd.f32 %v559, %v560
      %v562 = vsel %vm552, %v534, 0.0
      %v563 = vadd.f32 %v561, %v562
      %v564 = vsel %vm552, %v539, 0.0
      %v565 = vadd.f32 %v563, %v564
      %v566 = vsel %vm552, %v544, 0.0
      %v567 = vadd.f32 %v565, %v566
      %v568 = vrot.slane %v567, 4
      %v569 = vadd.f32 %v567, %v568
      %v570 = vrot.slane %v569, 2
      %v571 = vadd.f32 %v569, %v570
      %v572 = vrot.slane %v571, 1
      %v573 = vadd.f32 %v571, %v572
      %v574 = vrcp.pop 64.0
      %v575 = vmul.f32 %v573, %v574
      %577 = vrot.lane.b32.xlu0 %v575, 96
      %v578 = vpop.permute.xlu0 %577
      %588 = vrot.lane.b32.xlu0 %v509, 64
      %v589 = vpop.permute.xlu0 %588
      %590 = vrot.lane.b32.xlu0 %v514, 64
      %v591 = vpop.permute.xlu0 %590
      %592 = vrot.lane.b32.xlu0 %v519, 64
      %v593 = vpop.permute.xlu0 %592
      %594 = vrot.lane.b32.xlu0 %v524, 64
      %v595 = vpop.permute.xlu0 %594
      %596 = vrot.lane.b32.xlu0 %v529, 64
      %v597 = vpop.permute.xlu0 %596
      %598 = vrot.lane.b32.xlu0 %v534, 64
      %v599 = vpop.permute.xlu0 %598
      %600 = vrot.lane.b32.xlu0 %v539, 64
      %v601 = vpop.permute.xlu0 %600
      %602 = vrot.lane.b32.xlu0 %v544, 64
      %v603 = vpop.permute.xlu0 %602
      %604 = vrot.lane.b32.xlu0 %v549, 64
      %v605 = vpop.permute.xlu0 %604
      %v606 = vsel %vm414, %v578, 0
      %v608 = vsel %vm414, %v589, 0
      %v610 = vsel %vm414, %v591, 0
      %v612 = vsel %vm414, %v593, 0
      %v614 = vsel %vm414, %v595, 0
      %v616 = vsel %vm414, %v597, 0
      %v618 = vsel %vm414, %v599, 0
      %v620 = vsel %vm414, %v601, 0
      %v622 = vsel %vm414, %v603, 0
      %v624 = vsel %vm414, %v605, 0
      %626 = vmatprep.subr.mxu0 0.0
      %627 = vmatpush1.xpose.msra.mxu0 %v608
      %628 = vmatprep.subr.mxu0 0.0
      %629 = vmatpush1.xpose.msra.mxu0 %v610
      %630 = vmatprep.subr.mxu0 0.0
      %631 = vmatpush1.xpose.msra.mxu0 %v612
      %632 = vmatprep.subr.mxu0 0.0
      %633 = vmatpush1.xpose.msra.mxu0 %v614
      %634 = vmatprep.subr.mxu0 0.0
      %635 = vmatpush1.xpose.msra.mxu0 %v616
      %636 = vmatprep.subr.mxu0 0.0
      %637 = vmatpush1.xpose.msra.mxu0 %v618
      %638 = vmatprep.subr.mxu0 0.0
      %639 = vmatpush1.xpose.msra.mxu0 %v620
      %640 = vmatprep.subr.mxu0 0.0
      %641 = vmatpush1.xpose.msra.mxu0 %v622
      %642 = vmatprep.subr.mxu0 0.0
      %643 = vmatpush1.xpose.msra.mxu0 %v624
      %644 = vmatprep.subr.mxu0 0.0
      %645 = vmatpush1.xpose.msra.mxu0 0.0
      %646 = vmatprep.subr.mxu0 0.0
      %647 = vmatpush1.xpose.msra.mxu0 0.0
      %648 = vmatprep.subr.mxu0 0.0
      %649 = vmatpush1.xpose.msra.mxu0 0.0
      %650 = vmatprep.subr.mxu0 0.0
      %651 = vmatpush1.xpose.msra.mxu0 0.0
      %652 = vmatprep.subr.mxu0 0.0
      %653 = vmatpush1.xpose.msra.mxu0 0.0
      %654 = vmatprep.subr.mxu0 0.0
      %655 = vmatpush1.xpose.msra.mxu0 0.0
      %656 = vmatprep.subr.mxu0 0.0
      %657 = vmatpush1.xpose.msra.mxu0 0.0
      %658 = vmatprep.subr.mxu0 0.0
      %659 = vmatpush1.xpose.msra.mxu0 0.0
      %660 = vmatprep.subr.mxu0 0.0
      %661 = vmatpush1.xpose.msra.mxu0 0.0
      %662 = vmatprep.subr.mxu0 0.0
      %663 = vmatpush1.xpose.msra.mxu0 0.0
      %664 = vmatprep.subr.mxu0 0.0
      %665 = vmatpush1.xpose.msra.mxu0 0.0
      %666 = vmatprep.subr.mxu0 0.0
      %667 = vmatpush1.xpose.msra.mxu0 0.0
      %668 = vmatprep.subr.mxu0 0.0
      %669 = vmatpush1.xpose.msra.mxu0 0.0
      %670 = vmatprep.subr.mxu0 0.0
      %671 = vmatpush1.xpose.msra.mxu0 0.0
      %672 = vmatprep.subr.mxu0 0.0
      %673 = vmatpush1.xpose.msra.mxu0 0.0
      %674 = vmatprep.subr.mxu0 0.0
      %675 = vmatpush1.xpose.msra.mxu0 0.0
      %676 = vmatprep.subr.mxu0 0.0
      %677 = vmatpush1.xpose.msra.mxu0 0.0
      %678 = vmatprep.subr.mxu0 0.0
      %679 = vmatpush1.xpose.msra.mxu0 0.0
      %680 = vmatprep.subr.mxu0 0.0
      %681 = vmatpush1.xpose.msra.mxu0 0.0
      %682 = vmatprep.subr.mxu0 0.0
      %683 = vmatpush1.xpose.msra.mxu0 0.0
      %684 = vmatprep.subr.mxu0 0.0
      %685 = vmatpush1.xpose.msra.mxu0 0.0
      %686 = vmatprep.subr.mxu0 0.0
      %687 = vmatpush1.xpose.msra.mxu0 0.0
      %688 = vmatprep.subr.mxu0 0.0
      %689 = vmatpush1.xpose.msra.mxu0 0.0
      %690 = vmatprep.mubr.f32.mxu0 0.0
      %691 = vmatmul.mubr.f32.gmra.mrb[0].mxu0 %v606
      %v692 = vpop.f32.mrb[0].mxu0
      %v693 = vadd.f32 0.0, %v692
      %v694 = vpop.f32.mrb[0].mxu0
      %695 = vdwg.mxu0
      %v696 = vmul.f32 %v693, 0.17677669
      %vm697 = vcmask 524288
      %v698 = vsel %vm697, %v696, -inf
      %699 = vmax.xlane.f32.xlu0 %v698
      %v700 = vpop.xlane.xlu0 %699
      %v701 = vsub.f32 %v696, %v700
      %v702 = vmul.f32 %v701, 1.442695
      %v703 = vpow.pop %v702
      %v704 = vsel %vm697, %v703, 0.0
      %705 = vadd.xlane.f32.xlu0 %v704
      %v706 = vpop.xlane.xlu0 %705
      %v707 = vrcp.pop %v706
      %v708 = vmul.f32 %v703, %v707
      %v710 = vlaneseq
      %v711 = vshrl.u32 %v710, 7
      %v712 = vsub.s32 0, %v711
      %v713 = vrot.slane %v393, %v712
      %714 = vset.pattern.permute.xlu0 0
      %715 = vperm.xlu0 %714, %v713
      %v716 = vpop.permute.xlu0 %715
      %v718 = vsel %vm414, %v509, 0
      %v720 = vsel %vm414, %v514, 0
      %v722 = vsel %vm414, %v519, 0
      %v724 = vsel %vm414, %v524, 0
      %v726 = vsel %vm414, %v529, 0
      %v728 = vsel %vm414, %v534, 0
      %v730 = vsel %vm414, %v539, 0
      %v732 = vsel %vm414, %v544, 0
      %734 = vmatprep.subr.mxu0 0.0
      %735 = vmatpush1.xpose.msra.mxu0 %v608
      %736 = vmatprep.subr.mxu0 0.0
      %737 = vmatpush1.xpose.msra.mxu0 %v610
      %738 = vmatprep.subr.mxu0 0.0
      %739 = vmatpush1.xpose.msra.mxu0 %v612
      %740 = vmatprep.subr.mxu0 0.0
      %741 = vmatpush1.xpose.msra.mxu0 %v614
      %742 = vmatprep.subr.mxu0 0.0
      %743 = vmatpush1.xpose.msra.mxu0 %v616
      %744 = vmatprep.subr.mxu0 0.0
      %745 = vmatpush1.xpose.msra.mxu0 %v618
      %746 = vmatprep.subr.mxu0 0.0
      %747 = vmatpush1.xpose.msra.mxu0 %v620
      %748 = vmatprep.subr.mxu0 0.0
      %749 = vmatpush1.xpose.msra.mxu0 %v622
      %750 = vmatprep.subr.mxu0 0.0
      %751 = vmatpush1.xpose.msra.mxu0 %v624
      %752 = vmatprep.subr.mxu0 0.0
      %753 = vmatpush1.xpose.msra.mxu0 0.0
      %754 = vmatprep.subr.mxu0 0.0
      %755 = vmatpush1.xpose.msra.mxu0 0.0
      %756 = vmatprep.subr.mxu0 0.0
      %757 = vmatpush1.xpose.msra.mxu0 0.0
      %758 = vmatprep.subr.mxu0 0.0
      %759 = vmatpush1.xpose.msra.mxu0 0.0
      %760 = vmatprep.subr.mxu0 0.0
      %761 = vmatpush1.xpose.msra.mxu0 0.0
      %762 = vmatprep.subr.mxu0 0.0
      %763 = vmatpush1.xpose.msra.mxu0 0.0
      %764 = vmatprep.subr.mxu0 0.0
      %765 = vmatpush1.xpose.msra.mxu0 0.0
      %766 = vmatprep.subr.mxu0 0.0
      %767 = vmatpush1.xpose.msra.mxu0 0.0
      %768 = vmatprep.subr.mxu0 0.0
      %769 = vmatpush1.xpose.msra.mxu0 0.0
      %770 = vmatprep.subr.mxu0 0.0
      %771 = vmatpush1.xpose.msra.mxu0 0.0
      %772 = vmatprep.subr.mxu0 0.0
      %773 = vmatpush1.xpose.msra.mxu0 0.0
      %774 = vmatprep.subr.mxu0 0.0
      %775 = vmatpush1.xpose.msra.mxu0 0.0
      %776 = vmatprep.subr.mxu0 0.0
      %777 = vmatpush1.xpose.msra.mxu0 0.0
      %778 = vmatprep.subr.mxu0 0.0
      %779 = vmatpush1.xpose.msra.mxu0 0.0
      %780 = vmatprep.subr.mxu0 0.0
      %781 = vmatpush1.xpose.msra.mxu0 0.0
      %782 = vmatprep.subr.mxu0 0.0
      %783 = vmatpush1.xpose.msra.mxu0 0.0
      %784 = vmatprep.subr.mxu0 0.0
      %785 = vmatpush1.xpose.msra.mxu0 0.0
      %786 = vmatprep.subr.mxu0 0.0
      %787 = vmatpush1.xpose.msra.mxu0 0.0
      %788 = vmatprep.subr.mxu0 0.0
      %789 = vmatpush1.xpose.msra.mxu0 0.0
      %790 = vmatprep.subr.mxu0 0.0
      %791 = vmatpush1.xpose.msra.mxu0 0.0
      %792 = vmatprep.subr.mxu0 0.0
      %793 = vmatpush1.xpose.msra.mxu0 0.0
      %794 = vmatprep.subr.mxu0 0.0
      %795 = vmatpush1.xpose.msra.mxu0 0.0
      %796 = vmatprep.subr.mxu0 0.0
      %797 = vmatpush1.xpose.msra.mxu0 0.0
      %798 = vmatprep.mubr.f32.mxu0 0.0
      %799 = vmatmul.mubr.f32.gmra.mrb[0].mxu0 %v718
      %v800 = vpop.f32.mrb[0].mxu0
      %v801 = vadd.f32 %v716, %v800
      %v802 = vpop.f32.mrb[0].mxu0
      %803 = vmatprep.mubr.f32.mxu0 0.0
      %804 = vmatmul.mubr.f32.gmra.mrb[0].mxu0 %v720
      %v805 = vpop.f32.mrb[0].mxu0
      %v806 = vadd.f32 %v716, %v805
      %v807 = vpop.f32.mrb[0].mxu0
      %808 = vmatprep.mubr.f32.mxu0 0.0
      %809 = vmatmul.mubr.f32.gmra.mrb[0].mxu0 %v722
      %v810 = vpop.f32.mrb[0].mxu0
      %v811 = vadd.f32 %v716, %v810
      %v812 = vpop.f32.mrb[0].mxu0
      %813 = vmatprep.mubr.f32.mxu0 0.0
      %814 = vmatmul.mubr.f32.gmra.mrb[0].mxu0 %v724
      %v815 = vpop.f32.mrb[0].mxu0
      %v816 = vadd.f32 %v716, %v815
      %v817 = vpop.f32.mrb[0].mxu0
      %818 = vmatprep.mubr.f32.mxu0 0.0
      %819 = vmatmul.mubr.f32.gmra.mrb[0].mxu0 %v726
      %v820 = vpop.f32.mrb[0].mxu0
      %v821 = vadd.f32 %v716, %v820
      %v822 = vpop.f32.mrb[0].mxu0
      %823 = vmatprep.mubr.f32.mxu0 0.0
      %824 = vmatmul.mubr.f32.gmra.mrb[0].mxu0 %v728
      %v825 = vpop.f32.mrb[0].mxu0
      %v826 = vadd.f32 %v716, %v825
      %v827 = vpop.f32.mrb[0].mxu0
      %828 = vmatprep.mubr.f32.mxu0 0.0
      %829 = vmatmul.mubr.f32.gmra.mrb[0].mxu0 %v730
      %v830 = vpop.f32.mrb[0].mxu0
      %v831 = vadd.f32 %v716, %v830
      %v832 = vpop.f32.mrb[0].mxu0
      %833 = vmatprep.mubr.f32.mxu0 0.0
      %834 = vmatmul.mubr.f32.gmra.mrb[0].mxu0 %v732
      %v835 = vpop.f32.mrb[0].mxu0
      %v836 = vadd.f32 %v716, %v835
      %v837 = vpop.f32.mrb[0].mxu0
      %838 = vdwg.mxu0
      %v839 = vmul.f32 %v801, 0.17677669
      %v840 = vmul.f32 %v806, 0.17677669
      %v841 = vmul.f32 %v811, 0.17677669
      %v842 = vmul.f32 %v816, 0.17677669
      %v843 = vmul.f32 %v821, 0.17677669
      %v844 = vmul.f32 %v826, 0.17677669
      %v845 = vmul.f32 %v831, 0.17677669
      %v846 = vmul.f32 %v836, 0.17677669
      %vm847 = vcmask 531456
      %v848 = vsel %vm847, %v839, -inf
      %849 = vmax.xlane.f32.xlu0 %v848
      %v850 = vpop.xlane.xlu0 %849
      %v851 = vsel %vm847, %v840, -inf
      %852 = vmax.xlane.f32.xlu0 %v851
      %v853 = vpop.xlane.xlu0 %852
      %v854 = vsel %vm847, %v841, -inf
      %855 = vmax.xlane.f32.xlu0 %v854
      %v856 = vpop.xlane.xlu0 %855
      %v857 = vsel %vm847, %v842, -inf
      %858 = vmax.xlane.f32.xlu0 %v857
      %v859 = vpop.xlane.xlu0 %858
      %v860 = vsel %vm847, %v843, -inf
      %861 = vmax.xlane.f32.xlu0 %v860
      %v862 = vpop.xlane.xlu0 %861
      %v863 = vsel %vm847, %v844, -inf
      %864 = vmax.xlane.f32.xlu0 %v863
      %v865 = vpop.xlane.xlu0 %864
      %v866 = vsel %vm847, %v845, -inf
      %867 = vmax.xlane.f32.xlu0 %v866
      %v868 = vpop.xlane.xlu0 %867
      %v869 = vsel %vm847, %v846, -inf
      %870 = vmax.xlane.f32.xlu0 %v869
      %v871 = vpop.xlane.xlu0 %870
      %v872 = vsub.f32 %v839, %v850
      %v873 = vsub.f32 %v840, %v853
      %v874 = vsub.f32 %v841, %v856
      %v875 = vsub.f32 %v842, %v859
      %v876 = vsub.f32 %v843, %v862
      %v877 = vsub.f32 %v844, %v865
      %v878 = vsub.f32 %v845, %v868
      %v879 = vsub.f32 %v846, %v871
      %v880 = vmul.f32 %v872, 1.442695
      %v881 = vpow.pop %v880
      %v882 = vmul.f32 %v873, 1.442695
      %v883 = vpow.pop %v882
      %v884 = vmul.f32 %v874, 1.442695
      %v885 = vpow.pop %v884
      %v886 = vmul.f32 %v875, 1.442695
      %v887 = vpow.pop %v886
      %v888 = vmul.f32 %v876, 1.442695
      %v889 = vpow.pop %v888
      %v890 = vmul.f32 %v877, 1.442695
      %v891 = vpow.pop %v890
      %v892 = vmul.f32 %v878, 1.442695
      %v893 = vpow.pop %v892
      %v894 = vmul.f32 %v879, 1.442695
      %v895 = vpow.pop %v894
      %v896 = vsel %vm847, %v881, 0.0
      %897 = vadd.xlane.f32.xlu0 %v896
      %v898 = vpop.xlane.xlu0 %897
      %v899 = vsel %vm847, %v883, 0.0
      %900 = vadd.xlane.f32.xlu0 %v899
      %v901 = vpop.xlane.xlu0 %900
      %v902 = vsel %vm847, %v885, 0.0
      %903 = vadd.xlane.f32.xlu0 %v902
      %v904 = vpop.xlane.xlu0 %903
      %v905 = vsel %vm847, %v887, 0.0
      %906 = vadd.xlane.f32.xlu0 %v905
      %v907 = vpop.xlane.xlu0 %906
      %v908 = vsel %vm847, %v889, 0.0
      %909 = vadd.xlane.f32.xlu0 %v908
      %v910 = vpop.xlane.xlu0 %909
      %v911 = vsel %vm847, %v891, 0.0
      %912 = vadd.xlane.f32.xlu0 %v911
      %v913 = vpop.xlane.xlu0 %912
      %v914 = vsel %vm847, %v893, 0.0
      %915 = vadd.xlane.f32.xlu0 %v914
      %v916 = vpop.xlane.xlu0 %915
      %v917 = vsel %vm847, %v895, 0.0
      %918 = vadd.xlane.f32.xlu0 %v917
      %v919 = vpop.xlane.xlu0 %918
      %v920 = vrcp.pop %v898
      %v921 = vrcp.pop %v901
      %v922 = vrcp.pop %v904
      %v923 = vrcp.pop %v907
      %v924 = vrcp.pop %v910
      %v925 = vrcp.pop %v913
      %v926 = vrcp.pop %v916
      %v927 = vrcp.pop %v919
      %v928 = vmul.f32 %v881, %v920
      %v929 = vmul.f32 %v883, %v921
      %v930 = vmul.f32 %v885, %v922
      %v931 = vmul.f32 %v887, %v923
      %v932 = vmul.f32 %v889, %v924
      %v933 = vmul.f32 %v891, %v925
      %v934 = vmul.f32 %v893, %v926
      %v935 = vmul.f32 %v895, %v927
      %936 = vst.msk [vmem:[%s381] sm:$0xff] %vm847, %v928
      %937 = vst.msk [vmem:[%s381 + $0x8] sm:$0xff] %vm847, %v929
      %938 = vst.msk [vmem:[%s381 + $0x10] sm:$0xff] %vm847, %v930
      %939 = vst.msk [vmem:[%s381 + $0x18] sm:$0xff] %vm847, %v931
      %940 = vst.msk [vmem:[%s381 + $0x20] sm:$0xff] %vm847, %v932
      %941 = vst.msk [vmem:[%s381 + $0x28] sm:$0xff] %vm847, %v933
      %942 = vst.msk [vmem:[%s381 + $0x30] sm:$0xff] %vm847, %v934
      %943 = vst.msk [vmem:[%s381 + $0x38] sm:$0xff] %vm847, %v935
      %944 = vst.msk [vmem:[%s381 + $0x40] sm:$0x1] %vm697, %v398
      %945 = vst.msk [vmem:[%s374] sm:$0x1] %vm697, %v708
      %vm946 = vcmp.eq.f32.partialorder 0.0, 0.0
      %v947 = vsel %vm946, 1, 0
      %v948 = vcvt.s32.f32 %v947
      %v949 = vmul.f32 %v708, %v948
      %950 = vst.msk [vmem:[#allocation2] sm:$0x1] %vm697, %v949
      %v951 = vmul.f32 %v708, %v398
      %v952 = vsel %vm697, %v951, 0.0
      %953 = vadd.xlane.f32.xlu0 %v952
      %v954 = vpop.xlane.xlu0 %953
      %vm955 = vcmp.gt.f32.partialorder %v954, 0.6
      %v956 = vsel %vm955, 1, 0
      %v957 = vcvt.s32.f32 %v956
      %v958 = vadd.f32 %v957, 0.0
      %v959 = vmul.f32 %v954, %v398
      %vm960 = vcmask 523264
      %v962 = vsel %vm960, %v708, 0
      %964 = vmatprep.subr.mxu0 0.0
      %965 = vmatpush1.msra.mxu0 %v928
      %966 = vmatprep.subr.mxu0 0.0
      %967 = vmatpush1.msra.mxu0 %v929
      %968 = vmatprep.subr.mxu0 0.0
      %969 = vmatpush1.msra.mxu0 %v930
      %970 = vmatprep.subr.mxu0 0.0
      %971 = vmatpush1.msra.mxu0 %v931
      %972 = vmatprep.subr.mxu0 0.0
      %973 = vmatpush1.msra.mxu0 %v932
      %974 = vmatprep.subr.mxu0 0.0
      %975 = vmatpush1.msra.mxu0 %v933
      %976 = vmatprep.subr.mxu0 0.0
      %977 = vmatpush1.msra.mxu0 %v934
      %978 = vmatprep.subr.mxu0 0.0
      %979 = vmatpush1.msra.mxu0 %v935
      %980 = vmatprep.subr.mxu0 0.0
      %981 = vmatpush1.msra.mxu0 0.0
      %982 = vmatprep.subr.mxu0 0.0
      %983 = vmatpush1.msra.mxu0 0.0
      %984 = vmatprep.subr.mxu0 0.0
      %985 = vmatpush1.msra.mxu0 0.0
      %986 = vmatprep.subr.mxu0 0.0
      %987 = vmatpush1.msra.mxu0 0.0
      %988 = vmatprep.subr.mxu0 0.0
      %989 = vmatpush1.msra.mxu0 0.0
      %990 = vmatprep.subr.mxu0 0.0
      %991 = vmatpush1.msra.mxu0 0.0
      %992 = vmatprep.subr.mxu0 0.0
      %993 = vmatpush1.msra.mxu0 0.0
      %994 = vmatprep.subr.mxu0 0.0
      %995 = vmatpush1.msra.mxu0 0.0
      %996 = vmatprep.subr.mxu0 0.0
      %997 = vmatpush1.msra.mxu0 0.0
      %998 = vmatprep.subr.mxu0 0.0
      %999 = vmatpush1.msra.mxu0 0.0
      %1000 = vmatprep.subr.mxu0 0.0
      %1001 = vmatpush1.msra.mxu0 0.0
      %1002 = vmatprep.subr.mxu0 0.0
      %1003 = vmatpush1.msra.mxu0 0.0
      %1004 = vmatprep.subr.mxu0 0.0
      %1005 = vmatpush1.msra.mxu0 0.0
      %1006 = vmatprep.subr.mxu0 0.0
      %1007 = vmatpush1.msra.mxu0 0.0
      %1008 = vmatprep.subr.mxu0 0.0
      %1009 = vmatpush1.msra.mxu0 0.0
      %1010 = vmatprep.subr.mxu0 0.0
      %1011 = vmatpush1.msra.mxu0 0.0
      %1012 = vmatprep.subr.mxu0 0.0
      %1013 = vmatpush1.msra.mxu0 0.0
      %1014 = vmatprep.subr.mxu0 0.0
      %1015 = vmatpush1.msra.mxu0 0.0
      %1016 = vmatprep.subr.mxu0 0.0
      %1017 = vmatpush1.msra.mxu0 0.0
      %1018 = vmatprep.subr.mxu0 0.0
      %1019 = vmatpush1.msra.mxu0 0.0
      %1020 = vmatprep.subr.mxu0 0.0
      %1021 = vmatpush1.msra.mxu0 0.0
      %1022 = vmatprep.subr.mxu0 0.0
      %1023 = vmatpush1.msra.mxu0 0.0
      %1024 = vmatprep.subr.mxu0 0.0
      %1025 = vmatpush1.msra.mxu0 0.0
      %1026 = vmatprep.subr.mxu0 0.0
      %1027 = vmatpush1.msra.mxu0 0.0
      %1028 = vmatprep.mubr.f32.mxu0 0.0
      %1029 = vmatmul.mubr.f32.gmra.mrb[0].mxu0 %v962
      %v1030 = vpop.f32.mrb[0].mxu0
      %v1031 = vadd.f32 %v959, %v1030
      %v1032 = vpop.f32.mrb[0].mxu0
      %1033 = vdwg.mxu0
      %1034 = vst.msk [vmem:[%s374 + $0x1] sm:$0x1] %vm697, %v1031
      %vm1035 = vcmp.eq.f32.partialorder %v958, 0.0
      %v1036 = vsel %vm1035, 1, 0
      %v1037 = vcvt.s32.f32 %v1036
      %v1038 = vmul.f32 %v1031, %v1037
      %1039 = vst.msk [vmem:[#allocation2 + $0x1] sm:$0x1] %vm697, %v1038
      %v1040 = vmul.f32 %v1031, %v398
      %v1041 = vsel %vm697, %v1040, 0.0
      %1042 = vadd.xlane.f32.xlu0 %v1041
      %v1043 = vpop.xlane.xlu0 %1042
      %vm1044 = vcmp.gt.f32.partialorder %v1043, 0.6
      %v1045 = vsel %vm1044, 1, 0
      %v1046 = vcvt.s32.f32 %v1045
      %v1047 = vadd.f32 %v958, %v1046
      %v1048 = vmul.f32 %v1043, %v398
      %v1050 = vsel %vm960, %v1031, 0
      %1052 = vmatprep.subr.mxu0 0.0
      %1053 = vmatpush1.msra.mxu0 %v928
      %1054 = vmatprep.subr.mxu0 0.0
      %1055 = vmatpush1.msra.mxu0 %v929
      %1056 = vmatprep.subr.mxu0 0.0
      %1057 = vmatpush1.msra.mxu0 %v930
      %1058 = vmatprep.subr.mxu0 0.0
      %1059 = vmatpush1.msra.mxu0 %v931
      %1060 = vmatprep.subr.mxu0 0.0
      %1061 = vmatpush1.msra.mxu0 %v932
      %1062 = vmatprep.subr.mxu0 0.0
      %1063 = vmatpush1.msra.mxu0 %v933
      %1064 = vmatprep.subr.mxu0 0.0
      %1065 = vmatpush1.msra.mxu0 %v934
      %1066 = vmatprep.subr.mxu0 0.0
      %1067 = vmatpush1.msra.mxu0 %v935
      %1068 = vmatprep.subr.mxu0 0.0
      %1069 = vmatpush1.msra.mxu0 0.0
      %1070 = vmatprep.subr.mxu0 0.0
      %1071 = vmatpush1.msra.mxu0 0.0
      %1072 = vmatprep.subr.mxu0 0.0
      %1073 = vmatpush1.msra.mxu0 0.0
      %1074 = vmatprep.subr.mxu0 0.0
      %1075 = vmatpush1.msra.mxu0 0.0
      %1076 = vmatprep.subr.mxu0 0.0
      %1077 = vmatpush1.msra.mxu0 0.0
      %1078 = vmatprep.subr.mxu0 0.0
      %1079 = vmatpush1.msra.mxu0 0.0
      %1080 = vmatprep.subr.mxu0 0.0
      %1081 = vmatpush1.msra.mxu0 0.0
      %1082 = vmatprep.subr.mxu0 0.0
      %1083 = vmatpush1.msra.mxu0 0.0
      %1084 = vmatprep.subr.mxu0 0.0
      %1085 = vmatpush1.msra.mxu0 0.0
      %1086 = vmatprep.subr.mxu0 0.0
      %1087 = vmatpush1.msra.mxu0 0.0
      %1088 = vmatprep.subr.mxu0 0.0
      %1089 = vmatpush1.msra.mxu0 0.0
      %1090 = vmatprep.subr.mxu0 0.0
      %1091 = vmatpush1.msra.mxu0 0.0
      %1092 = vmatprep.subr.mxu0 0.0
      %1093 = vmatpush1.msra.mxu0 0.0
      %1094 = vmatprep.subr.mxu0 0.0
      %1095 = vmatpush1.msra.mxu0 0.0
      %1096 = vmatprep.subr.mxu0 0.0
      %1097 = vmatpush1.msra.mxu0 0.0
      %1098 = vmatprep.subr.mxu0 0.0
      %1099 = vmatpush1.msra.mxu0 0.0
      %1100 = vmatprep.subr.mxu0 0.0
      %1101 = vmatpush1.msra.mxu0 0.0
      %1102 = vmatprep.subr.mxu0 0.0
      %1103 = vmatpush1.msra.mxu0 0.0
      %1104 = vmatprep.subr.mxu0 0.0
      %1105 = vmatpush1.msra.mxu0 0.0
      %1106 = vmatprep.subr.mxu0 0.0
      %1107 = vmatpush1.msra.mxu0 0.0
      %1108 = vmatprep.subr.mxu0 0.0
      %1109 = vmatpush1.msra.mxu0 0.0
      %1110 = vmatprep.subr.mxu0 0.0
      %1111 = vmatpush1.msra.mxu0 0.0
      %1112 = vmatprep.subr.mxu0 0.0
      %1113 = vmatpush1.msra.mxu0 0.0
      %1114 = vmatprep.subr.mxu0 0.0
      %1115 = vmatpush1.msra.mxu0 0.0
      %1116 = vmatprep.mubr.f32.mxu0 0.0
      %1117 = vmatmul.mubr.f32.gmra.mrb[0].mxu0 %v1050
      %v1118 = vpop.f32.mrb[0].mxu0
      %v1119 = vadd.f32 %v1048, %v1118
      %v1120 = vpop.f32.mrb[0].mxu0
      %1121 = vdwg.mxu0
      %1122 = vst.msk [vmem:[%s374 + $0x2] sm:$0x1] %vm697, %v1119
      %vm1123 = vcmp.eq.f32.partialorder %v1047, 0.0
      %v1124 = vsel %vm1123, 1, 0
      %v1125 = vcvt.s32.f32 %v1124
      %v1126 = vmul.f32 %v1119, %v1125
      %1127 = vst.msk [vmem:[#allocation2 + $0x2] sm:$0x1] %vm697, %v1126
      %v1128 = vmul.f32 %v1119, %v398
      %v1129 = vsel %vm697, %v1128, 0.0
      %1130 = vadd.xlane.f32.xlu0 %v1129
      %v1131 = vpop.xlane.xlu0 %1130
      %vm1132 = vcmp.gt.f32.partialorder %v1131, 0.6
      %v1133 = vsel %vm1132, 1, 0
      %v1134 = vcvt.s32.f32 %v1133
      %v1135 = vadd.f32 %v1047, %v1134
      %v1136 = vmul.f32 %v1131, %v398
      %v1138 = vsel %vm960, %v1119, 0
      %1140 = vmatprep.subr.mxu0 0.0
      %1141 = vmatpush1.msra.mxu0 %v928
      %1142 = vmatprep.subr.mxu0 0.0
      %1143 = vmatpush1.msra.mxu0 %v929
      %1144 = vmatprep.subr.mxu0 0.0
      %1145 = vmatpush1.msra.mxu0 %v930
      %1146 = vmatprep.subr.mxu0 0.0
      %1147 = vmatpush1.msra.mxu0 %v931
      %1148 = vmatprep.subr.mxu0 0.0
      %1149 = vmatpush1.msra.mxu0 %v932
      %1150 = vmatprep.subr.mxu0 0.0
      %1151 = vmatpush1.msra.mxu0 %v933
      %1152 = vmatprep.subr.mxu0 0.0
      %1153 = vmatpush1.msra.mxu0 %v934
      %1154 = vmatprep.subr.mxu0 0.0
      %1155 = vmatpush1.msra.mxu0 %v935
      %1156 = vmatprep.subr.mxu0 0.0
      %1157 = vmatpush1.msra.mxu0 0.0
      %1158 = vmatprep.subr.mxu0 0.0
      %1159 = vmatpush1.msra.mxu0 0.0
      %1160 = vmatprep.subr.mxu0 0.0
      %1161 = vmatpush1.msra.mxu0 0.0
      %1162 = vmatprep.subr.mxu0 0.0
      %1163 = vmatpush1.msra.mxu0 0.0
      %1164 = vmatprep.subr.mxu0 0.0
      %1165 = vmatpush1.msra.mxu0 0.0
      %1166 = vmatprep.subr.mxu0 0.0
      %1167 = vmatpush1.msra.mxu0 0.0
      %1168 = vmatprep.subr.mxu0 0.0
      %1169 = vmatpush1.msra.mxu0 0.0
      %1170 = vmatprep.subr.mxu0 0.0
      %1171 = vmatpush1.msra.mxu0 0.0
      %1172 = vmatprep.subr.mxu0 0.0
      %1173 = vmatpush1.msra.mxu0 0.0
      %1174 = vmatprep.subr.mxu0 0.0
      %1175 = vmatpush1.msra.mxu0 0.0
      %1176 = vmatprep.subr.mxu0 0.0
      %1177 = vmatpush1.msra.mxu0 0.0
      %1178 = vmatprep.subr.mxu0 0.0
      %1179 = vmatpush1.msra.mxu0 0.0
      %1180 = vmatprep.subr.mxu0 0.0
      %1181 = vmatpush1.msra.mxu0 0.0
      %1182 = vmatprep.subr.mxu0 0.0
      %1183 = vmatpush1.msra.mxu0 0.0
      %1184 = vmatprep.subr.mxu0 0.0
      %1185 = vmatpush1.msra.mxu0 0.0
      %1186 = vmatprep.subr.mxu0 0.0
      %1187 = vmatpush1.msra.mxu0 0.0
      %1188 = vmatprep.subr.mxu0 0.0
      %1189 = vmatpush1.msra.mxu0 0.0
      %1190 = vmatprep.subr.mxu0 0.0
      %1191 = vmatpush1.msra.mxu0 0.0
      %1192 = vmatprep.subr.mxu0 0.0
      %1193 = vmatpush1.msra.mxu0 0.0
      %1194 = vmatprep.subr.mxu0 0.0
      %1195 = vmatpush1.msra.mxu0 0.0
      %1196 = vmatprep.subr.mxu0 0.0
      %1197 = vmatpush1.msra.mxu0 0.0
      %1198 = vmatprep.subr.mxu0 0.0
      %1199 = vmatpush1.msra.mxu0 0.0
      %1200 = vmatprep.subr.mxu0 0.0
      %1201 = vmatpush1.msra.mxu0 0.0
      %1202 = vmatprep.subr.mxu0 0.0
      %1203 = vmatpush1.msra.mxu0 0.0
      %1204 = vmatprep.mubr.f32.mxu0 0.0
      %1205 = vmatmul.mubr.f32.gmra.mrb[0].mxu0 %v1138
      %v1206 = vpop.f32.mrb[0].mxu0
      %v1207 = vadd.f32 %v1136, %v1206
      %v1208 = vpop.f32.mrb[0].mxu0
      %1209 = vdwg.mxu0
      %1210 = vst.msk [vmem:[%s374 + $0x3] sm:$0x1] %vm697, %v1207
      %vm1211 = vcmp.eq.f32.partialorder %v1135, 0.0
      %v1212 = vsel %vm1211, 1, 0
      %v1213 = vcvt.s32.f32 %v1212
      %v1214 = vmul.f32 %v1207, %v1213
      %1215 = vst.msk [vmem:[#allocation2 + $0x3] sm:$0x1] %vm697, %v1214
      %v1216 = vmul.f32 %v1207, %v398
      %v1217 = vsel %vm697, %v1216, 0.0
      %1218 = vadd.xlane.f32.xlu0 %v1217
      %v1219 = vpop.xlane.xlu0 %1218
      %vm1220 = vcmp.gt.f32.partialorder %v1219, 0.6
      %v1221 = vsel %vm1220, 1, 0
      %v1222 = vcvt.s32.f32 %v1221
      %v1223 = vadd.f32 %v1135, %v1222
      %v1224 = vmul.f32 %v1219, %v398
      %v1226 = vsel %vm960, %v1207, 0
      %1228 = vmatprep.subr.mxu0 0.0
      %1229 = vmatpush1.msra.mxu0 %v928
      %1230 = vmatprep.subr.mxu0 0.0
      %1231 = vmatpush1.msra.mxu0 %v929
      %1232 = vmatprep.subr.mxu0 0.0
      %1233 = vmatpush1.msra.mxu0 %v930
      %1234 = vmatprep.subr.mxu0 0.0
      %1235 = vmatpush1.msra.mxu0 %v931
      %1236 = vmatprep.subr.mxu0 0.0
      %1237 = vmatpush1.msra.mxu0 %v932
      %1238 = vmatprep.subr.mxu0 0.0
      %1239 = vmatpush1.msra.mxu0 %v933
      %1240 = vmatprep.subr.mxu0 0.0
      %1241 = vmatpush1.msra.mxu0 %v934
      %1242 = vmatprep.subr.mxu0 0.0
      %1243 = vmatpush1.msra.mxu0 %v935
      %1244 = vmatprep.subr.mxu0 0.0
      %1245 = vmatpush1.msra.mxu0 0.0
      %1246 = vmatprep.subr.mxu0 0.0
      %1247 = vmatpush1.msra.mxu0 0.0
      %1248 = vmatprep.subr.mxu0 0.0
      %1249 = vmatpush1.msra.mxu0 0.0
      %1250 = vmatprep.subr.mxu0 0.0
      %1251 = vmatpush1.msra.mxu0 0.0
      %1252 = vmatprep.subr.mxu0 0.0
      %1253 = vmatpush1.msra.mxu0 0.0
      %1254 = vmatprep.subr.mxu0 0.0
      %1255 = vmatpush1.msra.mxu0 0.0
      %1256 = vmatprep.subr.mxu0 0.0
      %1257 = vmatpush1.msra.mxu0 0.0
      %1258 = vmatprep.subr.mxu0 0.0
      %1259 = vmatpush1.msra.mxu0 0.0
      %1260 = vmatprep.subr.mxu0 0.0
      %1261 = vmatpush1.msra.mxu0 0.0
      %1262 = vmatprep.subr.mxu0 0.0
      %1263 = vmatpush1.msra.mxu0 0.0
      %1264 = vmatprep.subr.mxu0 0.0
      %1265 = vmatpush1.msra.mxu0 0.0
      %1266 = vmatprep.subr.mxu0 0.0
      %1267 = vmatpush1.msra.mxu0 0.0
      %1268 = vmatprep.subr.mxu0 0.0
      %1269 = vmatpush1.msra.mxu0 0.0
      %1270 = vmatprep.subr.mxu0 0.0
      %1271 = vmatpush1.msra.mxu0 0.0
      %1272 = vmatprep.subr.mxu0 0.0
      %1273 = vmatpush1.msra.mxu0 0.0
      %1274 = vmatprep.subr.mxu0 0.0
      %1275 = vmatpush1.msra.mxu0 0.0
      %1276 = vmatprep.subr.mxu0 0.0
      %1277 = vmatpush1.msra.mxu0 0.0
      %1278 = vmatprep.subr.mxu0 0.0
      %1279 = vmatpush1.msra.mxu0 0.0
      %1280 = vmatprep.subr.mxu0 0.0
      %1281 = vmatpush1.msra.mxu0 0.0
      %1282 = vmatprep.subr.mxu0 0.0
      %1283 = vmatpush1.msra.mxu0 0.0
      %1284 = vmatprep.subr.mxu0 0.0
      %1285 = vmatpush1.msra.mxu0 0.0
      %1286 = vmatprep.subr.mxu0 0.0
      %1287 = vmatpush1.msra.mxu0 0.0
      %1288 = vmatprep.subr.mxu0 0.0
      %1289 = vmatpush1.msra.mxu0 0.0
      %1290 = vmatprep.subr.mxu0 0.0
      %1291 = vmatpush1.msra.mxu0 0.0
      %1292 = vmatprep.mubr.f32.mxu0 0.0
      %1293 = vmatmul.mubr.f32.gmra.mrb[0].mxu0 %v1226
      %v1294 = vpop.f32.mrb[0].mxu0
      %v1295 = vadd.f32 %v1224, %v1294
      %v1296 = vpop.f32.mrb[0].mxu0
      %1297 = vdwg.mxu0
      %1298 = vst.msk [vmem:[%s374 + $0x4] sm:$0x1] %vm697, %v1295
      %vm1299 = vcmp.eq.f32.partialorder %v1223, 0.0
      %v1300 = vsel %vm1299, 1, 0
      %v1301 = vcvt.s32.f32 %v1300
      %v1302 = vmul.f32 %v1295, %v1301
      %1303 = vst.msk [vmem:[#allocation2 + $0x4] sm:$0x1] %vm697, %v1302
      %v1304 = vmul.f32 %v1295, %v398
      %v1305 = vsel %vm697, %v1304, 0.0
      %1306 = vadd.xlane.f32.xlu0 %v1305
      %v1307 = vpop.xlane.xlu0 %1306
      %vm1308 = vcmp.gt.f32.partialorder %v1307, 0.6
      %v1309 = vsel %vm1308, 1, 0
      %v1310 = vcvt.s32.f32 %v1309
      %v1311 = vadd.f32 %v1223, %v1310
      %v1312 = vmul.f32 %v1307, %v398
      %v1314 = vsel %vm960, %v1295, 0
      %1316 = vmatprep.subr.mxu0 0.0
      %1317 = vmatpush1.msra.mxu0 %v928
      %1318 = vmatprep.subr.mxu0 0.0
      %1319 = vmatpush1.msra.mxu0 %v929
      %1320 = vmatprep.subr.mxu0 0.0
      %1321 = vmatpush1.msra.mxu0 %v930
      %1322 = vmatprep.subr.mxu0 0.0
      %1323 = vmatpush1.msra.mxu0 %v931
      %1324 = vmatprep.subr.mxu0 0.0
      %1325 = vmatpush1.msra.mxu0 %v932
      %1326 = vmatprep.subr.mxu0 0.0
      %1327 = vmatpush1.msra.mxu0 %v933
      %1328 = vmatprep.subr.mxu0 0.0
      %1329 = vmatpush1.msra.mxu0 %v934
      %1330 = vmatprep.subr.mxu0 0.0
      %1331 = vmatpush1.msra.mxu0 %v935
      %1332 = vmatprep.subr.mxu0 0.0
      %1333 = vmatpush1.msra.mxu0 0.0
      %1334 = vmatprep.subr.mxu0 0.0
      %1335 = vmatpush1.msra.mxu0 0.0
      %1336 = vmatprep.subr.mxu0 0.0
      %1337 = vmatpush1.msra.mxu0 0.0
      %1338 = vmatprep.subr.mxu0 0.0
      %1339 = vmatpush1.msra.mxu0 0.0
      %1340 = vmatprep.subr.mxu0 0.0
      %1341 = vmatpush1.msra.mxu0 0.0
      %1342 = vmatprep.subr.mxu0 0.0
      %1343 = vmatpush1.msra.mxu0 0.0
      %1344 = vmatprep.subr.mxu0 0.0
      %1345 = vmatpush1.msra.mxu0 0.0
      %1346 = vmatprep.subr.mxu0 0.0
      %1347 = vmatpush1.msra.mxu0 0.0
      %1348 = vmatprep.subr.mxu0 0.0
      %1349 = vmatpush1.msra.mxu0 0.0
      %1350 = vmatprep.subr.mxu0 0.0
      %1351 = vmatpush1.msra.mxu0 0.0
      %1352 = vmatprep.subr.mxu0 0.0
      %1353 = vmatpush1.msra.mxu0 0.0
      %1354 = vmatprep.subr.mxu0 0.0
      %1355 = vmatpush1.msra.mxu0 0.0
      %1356 = vmatprep.subr.mxu0 0.0
      %1357 = vmatpush1.msra.mxu0 0.0
      %1358 = vmatprep.subr.mxu0 0.0
      %1359 = vmatpush1.msra.mxu0 0.0
      %1360 = vmatprep.subr.mxu0 0.0
      %1361 = vmatpush1.msra.mxu0 0.0
      %1362 = vmatprep.subr.mxu0 0.0
      %1363 = vmatpush1.msra.mxu0 0.0
      %1364 = vmatprep.subr.mxu0 0.0
      %1365 = vmatpush1.msra.mxu0 0.0
      %1366 = vmatprep.subr.mxu0 0.0
      %1367 = vmatpush1.msra.mxu0 0.0
      %1368 = vmatprep.subr.mxu0 0.0
      %1369 = vmatpush1.msra.mxu0 0.0
      %1370 = vmatprep.subr.mxu0 0.0
      %1371 = vmatpush1.msra.mxu0 0.0
      %1372 = vmatprep.subr.mxu0 0.0
      %1373 = vmatpush1.msra.mxu0 0.0
      %1374 = vmatprep.subr.mxu0 0.0
      %1375 = vmatpush1.msra.mxu0 0.0
      %1376 = vmatprep.subr.mxu0 0.0
      %1377 = vmatpush1.msra.mxu0 0.0
      %1378 = vmatprep.subr.mxu0 0.0
      %1379 = vmatpush1.msra.mxu0 0.0
      %1380 = vmatprep.mubr.f32.mxu0 0.0
      %1381 = vmatmul.mubr.f32.gmra.mrb[0].mxu0 %v1314
      %v1382 = vpop.f32.mrb[0].mxu0
      %v1383 = vadd.f32 %v1312, %v1382
      %v1384 = vpop.f32.mrb[0].mxu0
      %1385 = vdwg.mxu0
      %1386 = vst.msk [vmem:[%s374 + $0x5] sm:$0x1] %vm697, %v1383
      %vm1387 = vcmp.eq.f32.partialorder %v1311, 0.0
      %v1388 = vsel %vm1387, 1, 0
      %v1389 = vcvt.s32.f32 %v1388
      %v1390 = vmul.f32 %v1383, %v1389
      %1391 = vst.msk [vmem:[#allocation2 + $0x5] sm:$0x1] %vm697, %v1390
      %v1392 = vld [vmem:[#allocation2] sm:$0x3f]
      %v1394 = vsel %vm847, %v1392, 0
      %vm1396 = vcmask 1040384
      %v1397 = vsel %vm1396, %v407, 0
      %1399 = vmatprep.subr.mxu0 0.0
      %1400 = vmatpush1.msra.mxu0 %v399
      %1401 = vmatprep.subr.mxu0 0.0
      %1402 = vmatpush1.msra.mxu0 %v400
      %1403 = vmatprep.subr.mxu0 0.0
      %1404 = vmatpush1.msra.mxu0 %v401
      %1405 = vmatprep.subr.mxu0 0.0
      %1406 = vmatpush1.msra.mxu0 %v402
      %1407 = vmatprep.subr.mxu0 0.0
      %1408 = vmatpush1.msra.mxu0 %v403
      %1409 = vmatprep.subr.mxu0 0.0
      %1410 = vmatpush1.msra.mxu0 %v404
      %1411 = vmatprep.subr.mxu0 0.0
      %1412 = vmatpush1.msra.mxu0 %v405
      %1413 = vmatprep.subr.mxu0 0.0
      %1414 = vmatpush1.msra.mxu0 %v406
      %1415 = vmatprep.subr.mxu0 0.0
      %1416 = vmatpush1.msra.mxu0 %v1397
      %1417 = vmatprep.subr.mxu0 0.0
      %1418 = vmatpush1.msra.mxu0 0.0
      %1419 = vmatprep.subr.mxu0 0.0
      %1420 = vmatpush1.msra.mxu0 0.0
      %1421 = vmatprep.subr.mxu0 0.0
      %1422 = vmatpush1.msra.mxu0 0.0
      %1423 = vmatprep.subr.mxu0 0.0
      %1424 = vmatpush1.msra.mxu0 0.0
      %1425 = vmatprep.subr.mxu0 0.0
      %1426 = vmatpush1.msra.mxu0 0.0
      %1427 = vmatprep.subr.mxu0 0.0
      %1428 = vmatpush1.msra.mxu0 0.0
      %1429 = vmatprep.subr.mxu0 0.0
      %1430 = vmatpush1.msra.mxu0 0.0
      %1431 = vmatprep.subr.mxu0 0.0
      %1432 = vmatpush1.msra.mxu0 0.0
      %1433 = vmatprep.subr.mxu0 0.0
      %1434 = vmatpush1.msra.mxu0 0.0
      %1435 = vmatprep.subr.mxu0 0.0
      %1436 = vmatpush1.msra.mxu0 0.0
      %1437 = vmatprep.subr.mxu0 0.0
      %1438 = vmatpush1.msra.mxu0 0.0
      %1439 = vmatprep.subr.mxu0 0.0
      %1440 = vmatpush1.msra.mxu0 0.0
      %1441 = vmatprep.subr.mxu0 0.0
      %1442 = vmatpush1.msra.mxu0 0.0
      %1443 = vmatprep.subr.mxu0 0.0
      %1444 = vmatpush1.msra.mxu0 0.0
      %1445 = vmatprep.subr.mxu0 0.0
      %1446 = vmatpush1.msra.mxu0 0.0
      %1447 = vmatprep.subr.mxu0 0.0
      %1448 = vmatpush1.msra.mxu0 0.0
      %1449 = vmatprep.subr.mxu0 0.0
      %1450 = vmatpush1.msra.mxu0 0.0
      %1451 = vmatprep.subr.mxu0 0.0
      %1452 = vmatpush1.msra.mxu0 0.0
      %1453 = vmatprep.subr.mxu0 0.0
      %1454 = vmatpush1.msra.mxu0 0.0
      %1455 = vmatprep.subr.mxu0 0.0
      %1456 = vmatpush1.msra.mxu0 0.0
      %1457 = vmatprep.subr.mxu0 0.0
      %1458 = vmatpush1.msra.mxu0 0.0
      %1459 = vmatprep.subr.mxu0 0.0
      %1460 = vmatpush1.msra.mxu0 0.0
      %1461 = vmatprep.subr.mxu0 0.0
      %1462 = vmatpush1.msra.mxu0 0.0
      %1463 = vmatprep.mubr.f32.mxu0 0.0
      %1464 = vmatmul.mubr.f32.gmra.mrb[0].mxu0 %v1394
      %v1465 = vpop.f32.mrb[0].mxu0
      %v1466 = vadd.f32 0.0, %v1465
      %v1467 = vpop.f32.mrb[0].mxu0
      %1468 = vdwg.mxu0
      %vm1469 = vcmask 259072
      %1470 = vst.msk [vmem:[%s368] sm:$0x3f] %vm1469, %v1466
      %v1472 = vlaneseq
      %v1473 = vshrl.u32 %v1472, 7
      %v1474 = vsub.s32 0, %v1473
      %v1475 = vrot.slane %v392, %v1474
      %v1478 = vsel %vm414, %v1466, 0
      %1480 = vmatprep.subr.mxu0 0.0
      %1481 = vmatpush1.msra.mxu0 %v388
      %1482 = vmatprep.subr.mxu0 0.0
      %1483 = vmatpush1.msra.mxu0 %v389
      %1484 = vmatprep.subr.mxu0 0.0
      %1485 = vmatpush1.msra.mxu0 %v390
      %1486 = vmatprep.subr.mxu0 0.0
      %1487 = vmatpush1.msra.mxu0 %v391
      %1488 = vmatprep.subr.mxu0 0.0
      %1489 = vmatpush1.msra.mxu0 0.0
      %1490 = vmatprep.subr.mxu0 0.0
      %1491 = vmatpush1.msra.mxu0 0.0
      %1492 = vmatprep.subr.mxu0 0.0
      %1493 = vmatpush1.msra.mxu0 0.0
      %1494 = vmatprep.subr.mxu0 0.0
      %1495 = vmatpush1.msra.mxu0 0.0
      %1496 = vmatprep.subr.mxu0 0.0
      %1497 = vmatpush1.msra.mxu0 0.0
      %1498 = vmatprep.subr.mxu0 0.0
      %1499 = vmatpush1.msra.mxu0 0.0
      %1500 = vmatprep.subr.mxu0 0.0
      %1501 = vmatpush1.msra.mxu0 0.0
      %1502 = vmatprep.subr.mxu0 0.0
      %1503 = vmatpush1.msra.mxu0 0.0
      %1504 = vmatprep.subr.mxu0 0.0
      %1505 = vmatpush1.msra.mxu0 0.0
      %1506 = vmatprep.subr.mxu0 0.0
      %1507 = vmatpush1.msra.mxu0 0.0
      %1508 = vmatprep.subr.mxu0 0.0
      %1509 = vmatpush1.msra.mxu0 0.0
      %1510 = vmatprep.subr.mxu0 0.0
      %1511 = vmatpush1.msra.mxu0 0.0
      %1512 = vmatprep.subr.mxu0 0.0
      %1513 = vmatpush1.msra.mxu0 0.0
      %1514 = vmatprep.subr.mxu0 0.0
      %1515 = vmatpush1.msra.mxu0 0.0
      %1516 = vmatprep.subr.mxu0 0.0
      %1517 = vmatpush1.msra.mxu0 0.0
      %1518 = vmatprep.subr.mxu0 0.0
      %1519 = vmatpush1.msra.mxu0 0.0
      %1520 = vmatprep.subr.mxu0 0.0
      %1521 = vmatpush1.msra.mxu0 0.0
      %1522 = vmatprep.subr.mxu0 0.0
      %1523 = vmatpush1.msra.mxu0 0.0
      %1524 = vmatprep.subr.mxu0 0.0
      %1525 = vmatpush1.msra.mxu0 0.0
      %1526 = vmatprep.subr.mxu0 0.0
      %1527 = vmatpush1.msra.mxu0 0.0
      %1528 = vmatprep.subr.mxu0 0.0
      %1529 = vmatpush1.msra.mxu0 0.0
      %1530 = vmatprep.subr.mxu0 0.0
      %1531 = vmatpush1.msra.mxu0 0.0
      %1532 = vmatprep.subr.mxu0 0.0
      %1533 = vmatpush1.msra.mxu0 0.0
      %1534 = vmatprep.subr.mxu0 0.0
      %1535 = vmatpush1.msra.mxu0 0.0
      %1536 = vmatprep.subr.mxu0 0.0
      %1537 = vmatpush1.msra.mxu0 0.0
      %1538 = vmatprep.subr.mxu0 0.0
      %1539 = vmatpush1.msra.mxu0 0.0
      %1540 = vmatprep.subr.mxu0 0.0
      %1541 = vmatpush1.msra.mxu0 0.0
      %1542 = vmatprep.subr.mxu0 0.0
      %1543 = vmatpush1.msra.mxu0 0.0
      %1544 = vmatprep.mubr.f32.mxu0 0.0
      %1545 = vmatmul.mubr.f32.gmra.mrb[0].mxu0 %v1478
      %v1546 = vpop.f32.mrb[0].mxu0
      %v1547 = vadd.f32 %v1475, %v1546
      %v1548 = vpop.f32.mrb[0].mxu0
      %1549 = vdwg.mxu0
      %vm1550 = vcmask 128000
      %1551 = vst.msk [vmem:[%s362] sm:$0x3f] %vm1550, %v1547
      %s1552 = scalar_lea.vmem %s356, 72
      %v1553 = vld [vmem:[%s1552] sm:$0xff]
      %v1554 = vld [vmem:[%s1552 + $0x8] sm:$0xff]
      %v1555 = vld [vmem:[%s1552 + $0x10] sm:$0xff]
      %v1556 = vld [vmem:[%s1552 + $0x18] sm:$0xff]
      %v1557 = vld [vmem:[%s1552 + $0x20] sm:$0xff]
      %v1558 = vld [vmem:[%s1552 + $0x28] sm:$0xff]
      %v1559 = vld [vmem:[%s1552 + $0x30] sm:$0xff]
      %v1560 = vld [vmem:[%s1552 + $0x38] sm:$0xff]
      %v1561 = vld [vmem:[%s1552 + $0x40] sm:$0x1]
      %v1563 = vsel %vm414, %v1553, 0
      %v1566 = vsel %vm414, %v1554, 0
      %v1569 = vsel %vm414, %v1555, 0
      %v1572 = vsel %vm414, %v1556, 0
      %v1575 = vsel %vm414, %v1557, 0
      %v1578 = vsel %vm414, %v1558, 0
      %v1581 = vsel %vm414, %v1559, 0
      %v1584 = vsel %vm414, %v1560, 0
      %v1587 = vsel %vm414, %v1561, 0
      %1589 = vmatprep.subr.mxu0 0.0
      %1590 = vmatpush1.msra.mxu0 %v383
      %1591 = vmatprep.subr.mxu0 0.0
      %1592 = vmatpush1.msra.mxu0 %v384
      %1593 = vmatprep.subr.mxu0 0.0
      %1594 = vmatpush1.msra.mxu0 %v385
      %1595 = vmatprep.subr.mxu0 0.0
      %1596 = vmatpush1.msra.mxu0 %v386
      %1597 = vmatprep.subr.mxu0 0.0
      %1598 = vmatpush1.msra.mxu0 0.0
      %1599 = vmatprep.subr.mxu0 0.0
      %1600 = vmatpush1.msra.mxu0 0.0
      %1601 = vmatprep.subr.mxu0 0.0
      %1602 = vmatpush1.msra.mxu0 0.0
      %1603 = vmatprep.subr.mxu0 0.0
      %1604 = vmatpush1.msra.mxu0 0.0
      %1605 = vmatprep.subr.mxu0 0.0
      %1606 = vmatpush1.msra.mxu0 0.0
      %1607 = vmatprep.subr.mxu0 0.0
      %1608 = vmatpush1.msra.mxu0 0.0
      %1609 = vmatprep.subr.mxu0 0.0
      %1610 = vmatpush1.msra.mxu0 0.0
      %1611 = vmatprep.subr.mxu0 0.0
      %1612 = vmatpush1.msra.mxu0 0.0
      %1613 = vmatprep.subr.mxu0 0.0
      %1614 = vmatpush1.msra.mxu0 0.0
      %1615 = vmatprep.subr.mxu0 0.0
      %1616 = vmatpush1.msra.mxu0 0.0
      %1617 = vmatprep.subr.mxu0 0.0
      %1618 = vmatpush1.msra.mxu0 0.0
      %1619 = vmatprep.subr.mxu0 0.0
      %1620 = vmatpush1.msra.mxu0 0.0
      %1621 = vmatprep.subr.mxu0 0.0
      %1622 = vmatpush1.msra.mxu0 0.0
      %1623 = vmatprep.subr.mxu0 0.0
      %1624 = vmatpush1.msra.mxu0 0.0
      %1625 = vmatprep.subr.mxu0 0.0
      %1626 = vmatpush1.msra.mxu0 0.0
      %1627 = vmatprep.subr.mxu0 0.0
      %1628 = vmatpush1.msra.mxu0 0.0
      %1629 = vmatprep.subr.mxu0 0.0
      %1630 = vmatpush1.msra.mxu0 0.0
      %1631 = vmatprep.subr.mxu0 0.0
      %1632 = vmatpush1.msra.mxu0 0.0
      %1633 = vmatprep.subr.mxu0 0.0
      %1634 = vmatpush1.msra.mxu0 0.0
      %1635 = vmatprep.subr.mxu0 0.0
      %1636 = vmatpush1.msra.mxu0 0.0
      %1637 = vmatprep.subr.mxu0 0.0
      %1638 = vmatpush1.msra.mxu0 0.0
      %1639 = vmatprep.subr.mxu0 0.0
      %1640 = vmatpush1.msra.mxu0 0.0
      %1641 = vmatprep.subr.mxu0 0.0
      %1642 = vmatpush1.msra.mxu0 0.0
      %1643 = vmatprep.subr.mxu0 0.0
      %1644 = vmatpush1.msra.mxu0 0.0
      %1645 = vmatprep.subr.mxu0 0.0
      %1646 = vmatpush1.msra.mxu0 0.0
      %1647 = vmatprep.subr.mxu0 0.0
      %1648 = vmatpush1.msra.mxu0 0.0
      %1649 = vmatprep.subr.mxu0 0.0
      %1650 = vmatpush1.msra.mxu0 0.0
      %1651 = vmatprep.subr.mxu0 0.0
      %1652 = vmatpush1.msra.mxu0 0.0
      %1653 = vmatprep.mubr.f32.mxu0 0.0
      %1654 = vmatmul.mubr.f32.gmra.mrb[0].mxu0 %v1563
      %v1655 = vpop.f32.mrb[0].mxu0
      %v1656 = vadd.f32 %v412, %v1655
      %v1657 = vpop.f32.mrb[0].mxu0
      %1658 = vmatprep.mubr.f32.mxu0 0.0
      %1659 = vmatmul.mubr.f32.gmra.mrb[0].mxu0 %v1566
      %v1660 = vpop.f32.mrb[0].mxu0
      %v1661 = vadd.f32 %v412, %v1660
      %v1662 = vpop.f32.mrb[0].mxu0
      %1663 = vmatprep.mubr.f32.mxu0 0.0
      %1664 = vmatmul.mubr.f32.gmra.mrb[0].mxu0 %v1569
      %v1665 = vpop.f32.mrb[0].mxu0
      %v1666 = vadd.f32 %v412, %v1665
      %v1667 = vpop.f32.mrb[0].mxu0
      %1668 = vmatprep.mubr.f32.mxu0 0.0
      %1669 = vmatmul.mubr.f32.gmra.mrb[0].mxu0 %v1572
      %v1670 = vpop.f32.mrb[0].mxu0
      %v1671 = vadd.f32 %v412, %v1670
      %v1672 = vpop.f32.mrb[0].mxu0
      %1673 = vmatprep.mubr.f32.mxu0 0.0
      %1674 = vmatmul.mubr.f32.gmra.mrb[0].mxu0 %v1575
      %v1675 = vpop.f32.mrb[0].mxu0
      %v1676 = vadd.f32 %v412, %v1675
      %v1677 = vpop.f32.mrb[0].mxu0
      %1678 = vmatprep.mubr.f32.mxu0 0.0
      %1679 = vmatmul.mubr.f32.gmra.mrb[0].mxu0 %v1578
      %v1680 = vpop.f32.mrb[0].mxu0
      %v1681 = vadd.f32 %v412, %v1680
      %v1682 = vpop.f32.mrb[0].mxu0
      %1683 = vmatprep.mubr.f32.mxu0 0.0
      %1684 = vmatmul.mubr.f32.gmra.mrb[0].mxu0 %v1581
      %v1685 = vpop.f32.mrb[0].mxu0
      %v1686 = vadd.f32 %v412, %v1685
      %v1687 = vpop.f32.mrb[0].mxu0
      %1688 = vmatprep.mubr.f32.mxu0 0.0
      %1689 = vmatmul.mubr.f32.gmra.mrb[0].mxu0 %v1584
      %v1690 = vpop.f32.mrb[0].mxu0
      %v1691 = vadd.f32 %v412, %v1690
      %v1692 = vpop.f32.mrb[0].mxu0
      %1693 = vmatprep.mubr.f32.mxu0 0.0
      %1694 = vmatmul.mubr.f32.gmra.mrb[0].mxu0 %v1587
      %v1695 = vpop.f32.mrb[0].mxu0
      %v1696 = vadd.f32 %v412, %v1695
      %v1697 = vpop.f32.mrb[0].mxu0
      %1698 = vdwg.mxu0
      %v1699 = vsel %vm552, %v1656, 0.0
      %v1700 = vsel %vm552, %v1661, 0.0
      %v1701 = vadd.f32 %v1699, %v1700
      %v1702 = vsel %vm552, %v1666, 0.0
      %v1703 = vadd.f32 %v1701, %v1702
      %v1704 = vsel %vm552, %v1671, 0.0
      %v1705 = vadd.f32 %v1703, %v1704
      %v1706 = vsel %vm552, %v1676, 0.0
      %v1707 = vadd.f32 %v1705, %v1706
      %v1708 = vsel %vm552, %v1681, 0.0
      %v1709 = vadd.f32 %v1707, %v1708
      %v1710 = vsel %vm552, %v1686, 0.0
      %v1711 = vadd.f32 %v1709, %v1710
      %v1712 = vsel %vm552, %v1691, 0.0
      %v1713 = vadd.f32 %v1711, %v1712
      %v1714 = vrot.slane %v1713, 4
      %v1715 = vadd.f32 %v1713, %v1714
      %v1716 = vrot.slane %v1715, 2
      %v1717 = vadd.f32 %v1715, %v1716
      %v1718 = vrot.slane %v1717, 1
      %v1719 = vadd.f32 %v1717, %v1718
      %v1720 = vmul.f32 %v1719, %v574
      %1722 = vrot.lane.b32.xlu0 %v1720, 96
      %v1723 = vpop.permute.xlu0 %1722
      %1733 = vrot.lane.b32.xlu0 %v1656, 64
      %v1734 = vpop.permute.xlu0 %1733
      %1735 = vrot.lane.b32.xlu0 %v1661, 64
      %v1736 = vpop.permute.xlu0 %1735
      %1737 = vrot.lane.b32.xlu0 %v1666, 64
      %v1738 = vpop.permute.xlu0 %1737
      %1739 = vrot.lane.b32.xlu0 %v1671, 64
      %v1740 = vpop.permute.xlu0 %1739
      %1741 = vrot.lane.b32.xlu0 %v1676, 64
      %v1742 = vpop.permute.xlu0 %1741
      %1743 = vrot.lane.b32.xlu0 %v1681, 64
      %v1744 = vpop.permute.xlu0 %1743
      %1745 = vrot.lane.b32.xlu0 %v1686, 64
      %v1746 = vpop.permute.xlu0 %1745
      %1747 = vrot.lane.b32.xlu0 %v1691, 64
      %v1748 = vpop.permute.xlu0 %1747
      %1749 = vrot.lane.b32.xlu0 %v1696, 64
      %v1750 = vpop.permute.xlu0 %1749
      %v1751 = vsel %vm414, %v1723, 0
      %v1753 = vsel %vm414, %v1734, 0
      %v1755 = vsel %vm414, %v1736, 0
      %v1757 = vsel %vm414, %v1738, 0
      %v1759 = vsel %vm414, %v1740, 0
      %v1761 = vsel %vm414, %v1742, 0
      %v1763 = vsel %vm414, %v1744, 0
      %v1765 = vsel %vm414, %v1746, 0
      %v1767 = vsel %vm414, %v1748, 0
      %v1769 = vsel %vm414, %v1750, 0
      %1771 = vmatprep.subr.mxu0 0.0
      %1772 = vmatpush1.xpose.msra.mxu0 %v1753
      %1773 = vmatprep.subr.mxu0 0.0
      %1774 = vmatpush1.xpose.msra.mxu0 %v1755
      %1775 = vmatprep.subr.mxu0 0.0
      %1776 = vmatpush1.xpose.msra.mxu0 %v1757
      %1777 = vmatprep.subr.mxu0 0.0
      %1778 = vmatpush1.xpose.msra.mxu0 %v1759
      %1779 = vmatprep.subr.mxu0 0.0
      %1780 = vmatpush1.xpose.msra.mxu0 %v1761
      %1781 = vmatprep.subr.mxu0 0.0
      %1782 = vmatpush1.xpose.msra.mxu0 %v1763
      %1783 = vmatprep.subr.mxu0 0.0
      %1784 = vmatpush1.xpose.msra.mxu0 %v1765
      %1785 = vmatprep.subr.mxu0 0.0
      %1786 = vmatpush1.xpose.msra.mxu0 %v1767
      %1787 = vmatprep.subr.mxu0 0.0
      %1788 = vmatpush1.xpose.msra.mxu0 %v1769
      %1789 = vmatprep.subr.mxu0 0.0
      %1790 = vmatpush1.xpose.msra.mxu0 0.0
      %1791 = vmatprep.subr.mxu0 0.0
      %1792 = vmatpush1.xpose.msra.mxu0 0.0
      %1793 = vmatprep.subr.mxu0 0.0
      %1794 = vmatpush1.xpose.msra.mxu0 0.0
      %1795 = vmatprep.subr.mxu0 0.0
      %1796 = vmatpush1.xpose.msra.mxu0 0.0
      %1797 = vmatprep.subr.mxu0 0.0
      %1798 = vmatpush1.xpose.msra.mxu0 0.0
      %1799 = vmatprep.subr.mxu0 0.0
      %1800 = vmatpush1.xpose.msra.mxu0 0.0
      %1801 = vmatprep.subr.mxu0 0.0
      %1802 = vmatpush1.xpose.msra.mxu0 0.0
      %1803 = vmatprep.subr.mxu0 0.0
      %1804 = vmatpush1.xpose.msra.mxu0 0.0
      %1805 = vmatprep.subr.mxu0 0.0
      %1806 = vmatpush1.xpose.msra.mxu0 0.0
      %1807 = vmatprep.subr.mxu0 0.0
      %1808 = vmatpush1.xpose.msra.mxu0 0.0
      %1809 = vmatprep.subr.mxu0 0.0
      %1810 = vmatpush1.xpose.msra.mxu0 0.0
      %1811 = vmatprep.subr.mxu0 0.0
      %1812 = vmatpush1.xpose.msra.mxu0 0.0
      %1813 = vmatprep.subr.mxu0 0.0
      %1814 = vmatpush1.xpose.msra.mxu0 0.0
      %1815 = vmatprep.subr.mxu0 0.0
      %1816 = vmatpush1.xpose.msra.mxu0 0.0
      %1817 = vmatprep.subr.mxu0 0.0
      %1818 = vmatpush1.xpose.msra.mxu0 0.0
      %1819 = vmatprep.subr.mxu0 0.0
      %1820 = vmatpush1.xpose.msra.mxu0 0.0
      %1821 = vmatprep.subr.mxu0 0.0
      %1822 = vmatpush1.xpose.msra.mxu0 0.0
      %1823 = vmatprep.subr.mxu0 0.0
      %1824 = vmatpush1.xpose.msra.mxu0 0.0
      %1825 = vmatprep.subr.mxu0 0.0
      %1826 = vmatpush1.xpose.msra.mxu0 0.0
      %1827 = vmatprep.subr.mxu0 0.0
      %1828 = vmatpush1.xpose.msra.mxu0 0.0
      %1829 = vmatprep.subr.mxu0 0.0
      %1830 = vmatpush1.xpose.msra.mxu0 0.0
      %1831 = vmatprep.subr.mxu0 0.0
      %1832 = vmatpush1.xpose.msra.mxu0 0.0
      %1833 = vmatprep.subr.mxu0 0.0
      %1834 = vmatpush1.xpose.msra.mxu0 0.0
      %1835 = vmatprep.mubr.f32.mxu0 0.0
      %1836 = vmatmul.mubr.f32.gmra.mrb[0].mxu0 %v1751
      %v1837 = vpop.f32.mrb[0].mxu0
      %v1838 = vadd.f32 0.0, %v1837
      %v1839 = vpop.f32.mrb[0].mxu0
      %1840 = vdwg.mxu0
      %v1841 = vmul.f32 %v1838, 0.17677669
      %v1842 = vsel %vm697, %v1841, -inf
      %1843 = vmax.xlane.f32.xlu0 %v1842
      %v1844 = vpop.xlane.xlu0 %1843
      %v1845 = vsub.f32 %v1841, %v1844
      %v1846 = vmul.f32 %v1845, 1.442695
      %v1847 = vpow.pop %v1846
      %v1848 = vsel %vm697, %v1847, 0.0
      %1849 = vadd.xlane.f32.xlu0 %v1848
      %v1850 = vpop.xlane.xlu0 %1849
      %v1851 = vrcp.pop %v1850
      %v1852 = vmul.f32 %v1847, %v1851
      %v1853 = vsel %vm414, %v1656, 0
      %v1855 = vsel %vm414, %v1661, 0
      %v1857 = vsel %vm414, %v1666, 0
      %v1859 = vsel %vm414, %v1671, 0
      %v1861 = vsel %vm414, %v1676, 0
      %v1863 = vsel %vm414, %v1681, 0
      %v1865 = vsel %vm414, %v1686, 0
      %v1867 = vsel %vm414, %v1691, 0
      %1869 = vmatprep.subr.mxu0 0.0
      %1870 = vmatpush1.xpose.msra.mxu0 %v1753
      %1871 = vmatprep.subr.mxu0 0.0
      %1872 = vmatpush1.xpose.msra.mxu0 %v1755
      %1873 = vmatprep.subr.mxu0 0.0
      %1874 = vmatpush1.xpose.msra.mxu0 %v1757
      %1875 = vmatprep.subr.mxu0 0.0
      %1876 = vmatpush1.xpose.msra.mxu0 %v1759
      %1877 = vmatprep.subr.mxu0 0.0
      %1878 = vmatpush1.xpose.msra.mxu0 %v1761
      %1879 = vmatprep.subr.mxu0 0.0
      %1880 = vmatpush1.xpose.msra.mxu0 %v1763
      %1881 = vmatprep.subr.mxu0 0.0
      %1882 = vmatpush1.xpose.msra.mxu0 %v1765
      %1883 = vmatprep.subr.mxu0 0.0
      %1884 = vmatpush1.xpose.msra.mxu0 %v1767
      %1885 = vmatprep.subr.mxu0 0.0
      %1886 = vmatpush1.xpose.msra.mxu0 %v1769
      %1887 = vmatprep.subr.mxu0 0.0
      %1888 = vmatpush1.xpose.msra.mxu0 0.0
      %1889 = vmatprep.subr.mxu0 0.0
      %1890 = vmatpush1.xpose.msra.mxu0 0.0
      %1891 = vmatprep.subr.mxu0 0.0
      %1892 = vmatpush1.xpose.msra.mxu0 0.0
      %1893 = vmatprep.subr.mxu0 0.0
      %1894 = vmatpush1.xpose.msra.mxu0 0.0
      %1895 = vmatprep.subr.mxu0 0.0
      %1896 = vmatpush1.xpose.msra.mxu0 0.0
      %1897 = vmatprep.subr.mxu0 0.0
      %1898 = vmatpush1.xpose.msra.mxu0 0.0
      %1899 = vmatprep.subr.mxu0 0.0
      %1900 = vmatpush1.xpose.msra.mxu0 0.0
      %1901 = vmatprep.subr.mxu0 0.0
      %1902 = vmatpush1.xpose.msra.mxu0 0.0
      %1903 = vmatprep.subr.mxu0 0.0
      %1904 = vmatpush1.xpose.msra.mxu0 0.0
      %1905 = vmatprep.subr.mxu0 0.0
      %1906 = vmatpush1.xpose.msra.mxu0 0.0
      %1907 = vmatprep.subr.mxu0 0.0
      %1908 = vmatpush1.xpose.msra.mxu0 0.0
      %1909 = vmatprep.subr.mxu0 0.0
      %1910 = vmatpush1.xpose.msra.mxu0 0.0
      %1911 = vmatprep.subr.mxu0 0.0
      %1912 = vmatpush1.xpose.msra.mxu0 0.0
      %1913 = vmatprep.subr.mxu0 0.0
      %1914 = vmatpush1.xpose.msra.mxu0 0.0
      %1915 = vmatprep.subr.mxu0 0.0
      %1916 = vmatpush1.xpose.msra.mxu0 0.0
      %1917 = vmatprep.subr.mxu0 0.0
      %1918 = vmatpush1.xpose.msra.mxu0 0.0
      %1919 = vmatprep.subr.mxu0 0.0
      %1920 = vmatpush1.xpose.msra.mxu0 0.0
      %1921 = vmatprep.subr.mxu0 0.0
      %1922 = vmatpush1.xpose.msra.mxu0 0.0
      %1923 = vmatprep.subr.mxu0 0.0
      %1924 = vmatpush1.xpose.msra.mxu0 0.0
      %1925 = vmatprep.subr.mxu0 0.0
      %1926 = vmatpush1.xpose.msra.mxu0 0.0
      %1927 = vmatprep.subr.mxu0 0.0
      %1928 = vmatpush1.xpose.msra.mxu0 0.0
      %1929 = vmatprep.subr.mxu0 0.0
      %1930 = vmatpush1.xpose.msra.mxu0 0.0
      %1931 = vmatprep.subr.mxu0 0.0
      %1932 = vmatpush1.xpose.msra.mxu0 0.0
      %1933 = vmatprep.mubr.f32.mxu0 0.0
      %1934 = vmatmul.mubr.f32.gmra.mrb[0].mxu0 %v1853
      %v1935 = vpop.f32.mrb[0].mxu0
      %v1936 = vadd.f32 %v716, %v1935
      %v1937 = vpop.f32.mrb[0].mxu0
      %1938 = vmatprep.mubr.f32.mxu0 0.0
      %1939 = vmatmul.mubr.f32.gmra.mrb[0].mxu0 %v1855
      %v1940 = vpop.f32.mrb[0].mxu0
      %v1941 = vadd.f32 %v716, %v1940
      %v1942 = vpop.f32.mrb[0].mxu0
      %1943 = vmatprep.mubr.f32.mxu0 0.0
      %1944 = vmatmul.mubr.f32.gmra.mrb[0].mxu0 %v1857
      %v1945 = vpop.f32.mrb[0].mxu0
      %v1946 = vadd.f32 %v716, %v1945
      %v1947 = vpop.f32.mrb[0].mxu0
      %1948 = vmatprep.mubr.f32.mxu0 0.0
      %1949 = vmatmul.mubr.f32.gmra.mrb[0].mxu0 %v1859
      %v1950 = vpop.f32.mrb[0].mxu0
      %v1951 = vadd.f32 %v716, %v1950
      %v1952 = vpop.f32.mrb[0].mxu0
      %1953 = vmatprep.mubr.f32.mxu0 0.0
      %1954 = vmatmul.mubr.f32.gmra.mrb[0].mxu0 %v1861
      %v1955 = vpop.f32.mrb[0].mxu0
      %v1956 = vadd.f32 %v716, %v1955
      %v1957 = vpop.f32.mrb[0].mxu0
      %1958 = vmatprep.mubr.f32.mxu0 0.0
      %1959 = vmatmul.mubr.f32.gmra.mrb[0].mxu0 %v1863
      %v1960 = vpop.f32.mrb[0].mxu0
      %v1961 = vadd.f32 %v716, %v1960
      %v1962 = vpop.f32.mrb[0].mxu0
      %1963 = vmatprep.mubr.f32.mxu0 0.0
      %1964 = vmatmul.mubr.f32.gmra.mrb[0].mxu0 %v1865
      %v1965 = vpop.f32.mrb[0].mxu0
      %v1966 = vadd.f32 %v716, %v1965
      %v1967 = vpop.f32.mrb[0].mxu0
      %1968 = vmatprep.mubr.f32.mxu0 0.0
      %1969 = vmatmul.mubr.f32.gmra.mrb[0].mxu0 %v1867
      %v1970 = vpop.f32.mrb[0].mxu0
      %v1971 = vadd.f32 %v716, %v1970
      %v1972 = vpop.f32.mrb[0].mxu0
      %1973 = vdwg.mxu0
      %v1974 = vmul.f32 %v1936, 0.17677669
      %v1975 = vmul.f32 %v1941, 0.17677669
      %v1976 = vmul.f32 %v1946, 0.17677669
      %v1977 = vmul.f32 %v1951, 0.17677669
      %v1978 = vmul.f32 %v1956, 0.17677669
      %v1979 = vmul.f32 %v1961, 0.17677669
      %v1980 = vmul.f32 %v1966, 0.17677669
      %v1981 = vmul.f32 %v1971, 0.17677669
      %v1982 = vsel %vm847, %v1974, -inf
      %1983 = vmax.xlane.f32.xlu0 %v1982
      %v1984 = vpop.xlane.xlu0 %1983
      %v1985 = vsel %vm847, %v1975, -inf
      %1986 = vmax.xlane.f32.xlu0 %v1985
      %v1987 = vpop.xlane.xlu0 %1986
      %v1988 = vsel %vm847, %v1976, -inf
      %1989 = vmax.xlane.f32.xlu0 %v1988
      %v1990 = vpop.xlane.xlu0 %1989
      %v1991 = vsel %vm847, %v1977, -inf
      %1992 = vmax.xlane.f32.xlu0 %v1991
      %v1993 = vpop.xlane.xlu0 %1992
      %v1994 = vsel %vm847, %v1978, -inf
      %1995 = vmax.xlane.f32.xlu0 %v1994
      %v1996 = vpop.xlane.xlu0 %1995
      %v1997 = vsel %vm847, %v1979, -inf
      %1998 = vmax.xlane.f32.xlu0 %v1997
      %v1999 = vpop.xlane.xlu0 %1998
      %v2000 = vsel %vm847, %v1980, -inf
      %2001 = vmax.xlane.f32.xlu0 %v2000
      %v2002 = vpop.xlane.xlu0 %2001
      %v2003 = vsel %vm847, %v1981, -inf
      %2004 = vmax.xlane.f32.xlu0 %v2003
      %v2005 = vpop.xlane.xlu0 %2004
      %v2006 = vsub.f32 %v1974, %v1984
      %v2007 = vsub.f32 %v1975, %v1987
      %v2008 = vsub.f32 %v1976, %v1990
      %v2009 = vsub.f32 %v1977, %v1993
      %v2010 = vsub.f32 %v1978, %v1996
      %v2011 = vsub.f32 %v1979, %v1999
      %v2012 = vsub.f32 %v1980, %v2002
      %v2013 = vsub.f32 %v1981, %v2005
      %v2014 = vmul.f32 %v2006, 1.442695
      %v2015 = vpow.pop %v2014
      %v2016 = vmul.f32 %v2007, 1.442695
      %v2017 = vpow.pop %v2016
      %v2018 = vmul.f32 %v2008, 1.442695
      %v2019 = vpow.pop %v2018
      %v2020 = vmul.f32 %v2009, 1.442695
      %v2021 = vpow.pop %v2020
      %v2022 = vmul.f32 %v2010, 1.442695
      %v2023 = vpow.pop %v2022
      %v2024 = vmul.f32 %v2011, 1.442695
      %v2025 = vpow.pop %v2024
      %v2026 = vmul.f32 %v2012, 1.442695
      %v2027 = vpow.pop %v2026
      %v2028 = vmul.f32 %v2013, 1.442695
      %v2029 = vpow.pop %v2028
      %v2030 = vsel %vm847, %v2015, 0.0
      %2031 = vadd.xlane.f32.xlu0 %v2030
      %v2032 = vpop.xlane.xlu0 %2031
      %v2033 = vsel %vm847, %v2017, 0.0
      %2034 = vadd.xlane.f32.xlu0 %v2033
      %v2035 = vpop.xlane.xlu0 %2034
      %v2036 = vsel %vm847, %v2019, 0.0
      %2037 = vadd.xlane.f32.xlu0 %v2036
      %v2038 = vpop.xlane.xlu0 %2037
      %v2039 = vsel %vm847, %v2021, 0.0
      %2040 = vadd.xlane.f32.xlu0 %v2039
      %v2041 = vpop.xlane.xlu0 %2040
      %v2042 = vsel %vm847, %v2023, 0.0
      %2043 = vadd.xlane.f32.xlu0 %v2042
      %v2044 = vpop.xlane.xlu0 %2043
      %v2045 = vsel %vm847, %v2025, 0.0
      %2046 = vadd.xlane.f32.xlu0 %v2045
      %v2047 = vpop.xlane.xlu0 %2046
      %v2048 = vsel %vm847, %v2027, 0.0
      %2049 = vadd.xlane.f32.xlu0 %v2048
      %v2050 = vpop.xlane.xlu0 %2049
      %v2051 = vsel %vm847, %v2029, 0.0
      %2052 = vadd.xlane.f32.xlu0 %v2051
      %v2053 = vpop.xlane.xlu0 %2052
      %v2054 = vrcp.pop %v2032
      %v2055 = vrcp.pop %v2035
      %v2056 = vrcp.pop %v2038
      %v2057 = vrcp.pop %v2041
      %v2058 = vrcp.pop %v2044
      %v2059 = vrcp.pop %v2047
      %v2060 = vrcp.pop %v2050
      %v2061 = vrcp.pop %v2053
      %v2062 = vmul.f32 %v2015, %v2054
      %v2063 = vmul.f32 %v2017, %v2055
      %v2064 = vmul.f32 %v2019, %v2056
      %v2065 = vmul.f32 %v2021, %v2057
      %v2066 = vmul.f32 %v2023, %v2058
      %v2067 = vmul.f32 %v2025, %v2059
      %v2068 = vmul.f32 %v2027, %v2060
      %v2069 = vmul.f32 %v2029, %v2061
      %s2070 = scalar_lea.vmem %s381, 72
      %2071 = vst.msk [vmem:[%s2070] sm:$0xff] %vm847, %v2062
      %2072 = vst.msk [vmem:[%s2070 + $0x8] sm:$0xff] %vm847, %v2063
      %2073 = vst.msk [vmem:[%s2070 + $0x10] sm:$0xff] %vm847, %v2064
      %2074 = vst.msk [vmem:[%s2070 + $0x18] sm:$0xff] %vm847, %v2065
      %2075 = vst.msk [vmem:[%s2070 + $0x20] sm:$0xff] %vm847, %v2066
      %2076 = vst.msk [vmem:[%s2070 + $0x28] sm:$0xff] %vm847, %v2067
      %2077 = vst.msk [vmem:[%s2070 + $0x30] sm:$0xff] %vm847, %v2068
      %2078 = vst.msk [vmem:[%s2070 + $0x38] sm:$0xff] %vm847, %v2069
      %2079 = vst.msk [vmem:[%s2070 + $0x40] sm:$0x1] %vm697, %v398
      %s2080 = scalar_lea.vmem %s374, 8
      %2081 = vst.msk [vmem:[%s2080] sm:$0x1] %vm697, %v1852
      %v2082 = vmul.f32 %v1852, %v948
      %2083 = vst.msk [vmem:[#allocation2] sm:$0x1] %vm697, %v2082
      %v2084 = vmul.f32 %v1852, %v398
      %v2085 = vsel %vm697, %v2084, 0.0
      %2086 = vadd.xlane.f32.xlu0 %v2085
      %v2087 = vpop.xlane.xlu0 %2086
      %vm2088 = vcmp.gt.f32.partialorder %v2087, 0.6
      %v2089 = vsel %vm2088, 1, 0
      %v2090 = vcvt.s32.f32 %v2089
      %v2091 = vadd.f32 %v2090, 0.0
      %v2092 = vmul.f32 %v2087, %v398
      %v2094 = vsel %vm960, %v1852, 0
      %2096 = vmatprep.subr.mxu0 0.0
      %2097 = vmatpush1.msra.mxu0 %v2062
      %2098 = vmatprep.subr.mxu0 0.0
      %2099 = vmatpush1.msra.mxu0 %v2063
      %2100 = vmatprep.subr.mxu0 0.0
      %2101 = vmatpush1.msra.mxu0 %v2064
      %2102 = vmatprep.subr.mxu0 0.0
      %2103 = vmatpush1.msra.mxu0 %v2065
      %2104 = vmatprep.subr.mxu0 0.0
      %2105 = vmatpush1.msra.mxu0 %v2066
      %2106 = vmatprep.subr.mxu0 0.0
      %2107 = vmatpush1.msra.mxu0 %v2067
      %2108 = vmatprep.subr.mxu0 0.0
      %2109 = vmatpush1.msra.mxu0 %v2068
      %2110 = vmatprep.subr.mxu0 0.0
      %2111 = vmatpush1.msra.mxu0 %v2069
      %2112 = vmatprep.subr.mxu0 0.0
      %2113 = vmatpush1.msra.mxu0 0.0
      %2114 = vmatprep.subr.mxu0 0.0
      %2115 = vmatpush1.msra.mxu0 0.0
      %2116 = vmatprep.subr.mxu0 0.0
      %2117 = vmatpush1.msra.mxu0 0.0
      %2118 = vmatprep.subr.mxu0 0.0
      %2119 = vmatpush1.msra.mxu0 0.0
      %2120 = vmatprep.subr.mxu0 0.0
      %2121 = vmatpush1.msra.mxu0 0.0
      %2122 = vmatprep.subr.mxu0 0.0
      %2123 = vmatpush1.msra.mxu0 0.0
      %2124 = vmatprep.subr.mxu0 0.0
      %2125 = vmatpush1.msra.mxu0 0.0
      %2126 = vmatprep.subr.mxu0 0.0
      %2127 = vmatpush1.msra.mxu0 0.0
      %2128 = vmatprep.subr.mxu0 0.0
      %2129 = vmatpush1.msra.mxu0 0.0
      %2130 = vmatprep.subr.mxu0 0.0
      %2131 = vmatpush1.msra.mxu0 0.0
      %2132 = vmatprep.subr.mxu0 0.0
      %2133 = vmatpush1.msra.mxu0 0.0
      %2134 = vmatprep.subr.mxu0 0.0
      %2135 = vmatpush1.msra.mxu0 0.0
      %2136 = vmatprep.subr.mxu0 0.0
      %2137 = vmatpush1.msra.mxu0 0.0
      %2138 = vmatprep.subr.mxu0 0.0
      %2139 = vmatpush1.msra.mxu0 0.0
      %2140 = vmatprep.subr.mxu0 0.0
      %2141 = vmatpush1.msra.mxu0 0.0
      %2142 = vmatprep.subr.mxu0 0.0
      %2143 = vmatpush1.msra.mxu0 0.0
      %2144 = vmatprep.subr.mxu0 0.0
      %2145 = vmatpush1.msra.mxu0 0.0
      %2146 = vmatprep.subr.mxu0 0.0
      %2147 = vmatpush1.msra.mxu0 0.0
      %2148 = vmatprep.subr.mxu0 0.0
      %2149 = vmatpush1.msra.mxu0 0.0
      %2150 = vmatprep.subr.mxu0 0.0
      %2151 = vmatpush1.msra.mxu0 0.0
      %2152 = vmatprep.subr.mxu0 0.0
      %2153 = vmatpush1.msra.mxu0 0.0
      %2154 = vmatprep.subr.mxu0 0.0
      %2155 = vmatpush1.msra.mxu0 0.0
      %2156 = vmatprep.subr.mxu0 0.0
      %2157 = vmatpush1.msra.mxu0 0.0
      %2158 = vmatprep.subr.mxu0 0.0
      %2159 = vmatpush1.msra.mxu0 0.0
      %2160 = vmatprep.mubr.f32.mxu0 0.0
      %2161 = vmatmul.mubr.f32.gmra.mrb[0].mxu0 %v2094
      %v2162 = vpop.f32.mrb[0].mxu0
      %v2163 = vadd.f32 %v2092, %v2162
      %v2164 = vpop.f32.mrb[0].mxu0
      %2165 = vdwg.mxu0
      %2166 = vst.msk [vmem:[%s2080 + $0x1] sm:$0x1] %vm697, %v2163
      %vm2167 = vcmp.eq.f32.partialorder %v2091, 0.0
      %v2168 = vsel %vm2167, 1, 0
      %v2169 = vcvt.s32.f32 %v2168
      %v2170 = vmul.f32 %v2163, %v2169
      %2171 = vst.msk [vmem:[#allocation2 + $0x1] sm:$0x1] %vm697, %v2170
      %v2172 = vmul.f32 %v2163, %v398
      %v2173 = vsel %vm697, %v2172, 0.0
      %2174 = vadd.xlane.f32.xlu0 %v2173
      %v2175 = vpop.xlane.xlu0 %2174
      %vm2176 = vcmp.gt.f32.partialorder %v2175, 0.6
      %v2177 = vsel %vm2176, 1, 0
      %v2178 = vcvt.s32.f32 %v2177
      %v2179 = vadd.f32 %v2091, %v2178
      %v2180 = vmul.f32 %v2175, %v398
      %v2182 = vsel %vm960, %v2163, 0
      %2184 = vmatprep.subr.mxu0 0.0
      %2185 = vmatpush1.msra.mxu0 %v2062
      %2186 = vmatprep.subr.mxu0 0.0
      %2187 = vmatpush1.msra.mxu0 %v2063
      %2188 = vmatprep.subr.mxu0 0.0
      %2189 = vmatpush1.msra.mxu0 %v2064
      %2190 = vmatprep.subr.mxu0 0.0
      %2191 = vmatpush1.msra.mxu0 %v2065
      %2192 = vmatprep.subr.mxu0 0.0
      %2193 = vmatpush1.msra.mxu0 %v2066
      %2194 = vmatprep.subr.mxu0 0.0
      %2195 = vmatpush1.msra.mxu0 %v2067
      %2196 = vmatprep.subr.mxu0 0.0
      %2197 = vmatpush1.msra.mxu0 %v2068
      %2198 = vmatprep.subr.mxu0 0.0
      %2199 = vmatpush1.msra.mxu0 %v2069
      %2200 = vmatprep.subr.mxu0 0.0
      %2201 = vmatpush1.msra.mxu0 0.0
      %2202 = vmatprep.subr.mxu0 0.0
      %2203 = vmatpush1.msra.mxu0 0.0
      %2204 = vmatprep.subr.mxu0 0.0
      %2205 = vmatpush1.msra.mxu0 0.0
      %2206 = vmatprep.subr.mxu0 0.0
      %2207 = vmatpush1.msra.mxu0 0.0
      %2208 = vmatprep.subr.mxu0 0.0
      %2209 = vmatpush1.msra.mxu0 0.0
      %2210 = vmatprep.subr.mxu0 0.0
      %2211 = vmatpush1.msra.mxu0 0.0
      %2212 = vmatprep.subr.mxu0 0.0
      %2213 = vmatpush1.msra.mxu0 0.0
      %2214 = vmatprep.subr.mxu0 0.0
      %2215 = vmatpush1.msra.mxu0 0.0
      %2216 = vmatprep.subr.mxu0 0.0
      %2217 = vmatpush1.msra.mxu0 0.0
      %2218 = vmatprep.subr.mxu0 0.0
      %2219 = vmatpush1.msra.mxu0 0.0
      %2220 = vmatprep.subr.mxu0 0.0
      %2221 = vmatpush1.msra.mxu0 0.0
      %2222 = vmatprep.subr.mxu0 0.0
      %2223 = vmatpush1.msra.mxu0 0.0
      %2224 = vmatprep.subr.mxu0 0.0
      %2225 = vmatpush1.msra.mxu0 0.0
      %2226 = vmatprep.subr.mxu0 0.0
      %2227 = vmatpush1.msra.mxu0 0.0
      %2228 = vmatprep.subr.mxu0 0.0
      %2229 = vmatpush1.msra.mxu0 0.0
      %2230 = vmatprep.subr.mxu0 0.0
      %2231 = vmatpush1.msra.mxu0 0.0
      %2232 = vmatprep.subr.mxu0 0.0
      %2233 = vmatpush1.msra.mxu0 0.0
      %2234 = vmatprep.subr.mxu0 0.0
      %2235 = vmatpush1.msra.mxu0 0.0
      %2236 = vmatprep.subr.mxu0 0.0
      %2237 = vmatpush1.msra.mxu0 0.0
      %2238 = vmatprep.subr.mxu0 0.0
      %2239 = vmatpush1.msra.mxu0 0.0
      %2240 = vmatprep.subr.mxu0 0.0
      %2241 = vmatpush1.msra.mxu0 0.0
      %2242 = vmatprep.subr.mxu0 0.0
      %2243 = vmatpush1.msra.mxu0 0.0
      %2244 = vmatprep.subr.mxu0 0.0
      %2245 = vmatpush1.msra.mxu0 0.0
      %2246 = vmatprep.subr.mxu0 0.0
      %2247 = vmatpush1.msra.mxu0 0.0
      %2248 = vmatprep.mubr.f32.mxu0 0.0
      %2249 = vmatmul.mubr.f32.gmra.mrb[0].mxu0 %v2182
      %v2250 = vpop.f32.mrb[0].mxu0
      %v2251 = vadd.f32 %v2180, %v2250
      %v2252 = vpop.f32.mrb[0].mxu0
      %2253 = vdwg.mxu0
      %2254 = vst.msk [vmem:[%s2080 + $0x2] sm:$0x1] %vm697, %v2251
      %vm2255 = vcmp.eq.f32.partialorder %v2179, 0.0
      %v2256 = vsel %vm2255, 1, 0
      %v2257 = vcvt.s32.f32 %v2256
      %v2258 = vmul.f32 %v2251, %v2257
      %2259 = vst.msk [vmem:[#allocation2 + $0x2] sm:$0x1] %vm697, %v2258
      %v2260 = vmul.f32 %v2251, %v398
      %v2261 = vsel %vm697, %v2260, 0.0
      %2262 = vadd.xlane.f32.xlu0 %v2261
      %v2263 = vpop.xlane.xlu0 %2262
      %vm2264 = vcmp.gt.f32.partialorder %v2263, 0.6
      %v2265 = vsel %vm2264, 1, 0
      %v2266 = vcvt.s32.f32 %v2265
      %v2267 = vadd.f32 %v2179, %v2266
      %v2268 = vmul.f32 %v2263, %v398
      %v2270 = vsel %vm960, %v2251, 0
      %2272 = vmatprep.subr.mxu0 0.0
      %2273 = vmatpush1.msra.mxu0 %v2062
      %2274 = vmatprep.subr.mxu0 0.0
      %2275 = vmatpush1.msra.mxu0 %v2063
      %2276 = vmatprep.subr.mxu0 0.0
      %2277 = vmatpush1.msra.mxu0 %v2064
      %2278 = vmatprep.subr.mxu0 0.0
      %2279 = vmatpush1.msra.mxu0 %v2065
      %2280 = vmatprep.subr.mxu0 0.0
      %2281 = vmatpush1.msra.mxu0 %v2066
      %2282 = vmatprep.subr.mxu0 0.0
      %2283 = vmatpush1.msra.mxu0 %v2067
      %2284 = vmatprep.subr.mxu0 0.0
      %2285 = vmatpush1.msra.mxu0 %v2068
      %2286 = vmatprep.subr.mxu0 0.0
      %2287 = vmatpush1.msra.mxu0 %v2069
      %2288 = vmatprep.subr.mxu0 0.0
      %2289 = vmatpush1.msra.mxu0 0.0
      %2290 = vmatprep.subr.mxu0 0.0
      %2291 = vmatpush1.msra.mxu0 0.0
      %2292 = vmatprep.subr.mxu0 0.0
      %2293 = vmatpush1.msra.mxu0 0.0
      %2294 = vmatprep.subr.mxu0 0.0
      %2295 = vmatpush1.msra.mxu0 0.0
      %2296 = vmatprep.subr.mxu0 0.0
      %2297 = vmatpush1.msra.mxu0 0.0
      %2298 = vmatprep.subr.mxu0 0.0
      %2299 = vmatpush1.msra.mxu0 0.0
      %2300 = vmatprep.subr.mxu0 0.0
      %2301 = vmatpush1.msra.mxu0 0.0
      %2302 = vmatprep.subr.mxu0 0.0
      %2303 = vmatpush1.msra.mxu0 0.0
      %2304 = vmatprep.subr.mxu0 0.0
      %2305 = vmatpush1.msra.mxu0 0.0
      %2306 = vmatprep.subr.mxu0 0.0
      %2307 = vmatpush1.msra.mxu0 0.0
      %2308 = vmatprep.subr.mxu0 0.0
      %2309 = vmatpush1.msra.mxu0 0.0
      %2310 = vmatprep.subr.mxu0 0.0
      %2311 = vmatpush1.msra.mxu0 0.0
      %2312 = vmatprep.subr.mxu0 0.0
      %2313 = vmatpush1.msra.mxu0 0.0
      %2314 = vmatprep.subr.mxu0 0.0
      %2315 = vmatpush1.msra.mxu0 0.0
      %2316 = vmatprep.subr.mxu0 0.0
      %2317 = vmatpush1.msra.mxu0 0.0
      %2318 = vmatprep.subr.mxu0 0.0
      %2319 = vmatpush1.msra.mxu0 0.0
      %2320 = vmatprep.subr.mxu0 0.0
      %2321 = vmatpush1.msra.mxu0 0.0
      %2322 = vmatprep.subr.mxu0 0.0
      %2323 = vmatpush1.msra.mxu0 0.0
      %2324 = vmatprep.subr.mxu0 0.0
      %2325 = vmatpush1.msra.mxu0 0.0
      %2326 = vmatprep.subr.mxu0 0.0
      %2327 = vmatpush1.msra.mxu0 0.0
      %2328 = vmatprep.subr.mxu0 0.0
      %2329 = vmatpush1.msra.mxu0 0.0
      %2330 = vmatprep.subr.mxu0 0.0
      %2331 = vmatpush1.msra.mxu0 0.0
      %2332 = vmatprep.subr.mxu0 0.0
      %2333 = vmatpush1.msra.mxu0 0.0
      %2334 = vmatprep.subr.mxu0 0.0
      %2335 = vmatpush1.msra.mxu0 0.0
      %2336 = vmatprep.mubr.f32.mxu0 0.0
      %2337 = vmatmul.mubr.f32.gmra.mrb[0].mxu0 %v2270
      %v2338 = vpop.f32.mrb[0].mxu0
      %v2339 = vadd.f32 %v2268, %v2338
      %v2340 = vpop.f32.mrb[0].mxu0
      %2341 = vdwg.mxu0
      %2342 = vst.msk [vmem:[%s2080 + $0x3] sm:$0x1] %vm697, %v2339
      %vm2343 = vcmp.eq.f32.partialorder %v2267, 0.0
      %v2344 = vsel %vm2343, 1, 0
      %v2345 = vcvt.s32.f32 %v2344
      %v2346 = vmul.f32 %v2339, %v2345
      %2347 = vst.msk [vmem:[#allocation2 + $0x3] sm:$0x1] %vm697, %v2346
      %v2348 = vmul.f32 %v2339, %v398
      %v2349 = vsel %vm697, %v2348, 0.0
      %2350 = vadd.xlane.f32.xlu0 %v2349
      %v2351 = vpop.xlane.xlu0 %2350
      %vm2352 = vcmp.gt.f32.partialorder %v2351, 0.6
      %v2353 = vsel %vm2352, 1, 0
      %v2354 = vcvt.s32.f32 %v2353
      %v2355 = vadd.f32 %v2267, %v2354
      %v2356 = vmul.f32 %v2351, %v398
      %v2358 = vsel %vm960, %v2339, 0
      %2360 = vmatprep.subr.mxu0 0.0
      %2361 = vmatpush1.msra.mxu0 %v2062
      %2362 = vmatprep.subr.mxu0 0.0
      %2363 = vmatpush1.msra.mxu0 %v2063
      %2364 = vmatprep.subr.mxu0 0.0
      %2365 = vmatpush1.msra.mxu0 %v2064
      %2366 = vmatprep.subr.mxu0 0.0
      %2367 = vmatpush1.msra.mxu0 %v2065
      %2368 = vmatprep.subr.mxu0 0.0
      %2369 = vmatpush1.msra.mxu0 %v2066
      %2370 = vmatprep.subr.mxu0 0.0
      %2371 = vmatpush1.msra.mxu0 %v2067
      %2372 = vmatprep.subr.mxu0 0.0
      %2373 = vmatpush1.msra.mxu0 %v2068
      %2374 = vmatprep.subr.mxu0 0.0
      %2375 = vmatpush1.msra.mxu0 %v2069
      %2376 = vmatprep.subr.mxu0 0.0
      %2377 = vmatpush1.msra.mxu0 0.0
      %2378 = vmatprep.subr.mxu0 0.0
      %2379 = vmatpush1.msra.mxu0 0.0
      %2380 = vmatprep.subr.mxu0 0.0
      %2381 = vmatpush1.msra.mxu0 0.0
      %2382 = vmatprep.subr.mxu0 0.0
      %2383 = vmatpush1.msra.mxu0 0.0
      %2384 = vmatprep.subr.mxu0 0.0
      %2385 = vmatpush1.msra.mxu0 0.0
      %2386 = vmatprep.subr.mxu0 0.0
      %2387 = vmatpush1.msra.mxu0 0.0
      %2388 = vmatprep.subr.mxu0 0.0
      %2389 = vmatpush1.msra.mxu0 0.0
      %2390 = vmatprep.subr.mxu0 0.0
      %2391 = vmatpush1.msra.mxu0 0.0
      %2392 = vmatprep.subr.mxu0 0.0
      %2393 = vmatpush1.msra.mxu0 0.0
      %2394 = vmatprep.subr.mxu0 0.0
      %2395 = vmatpush1.msra.mxu0 0.0
      %2396 = vmatprep.subr.mxu0 0.0
      %2397 = vmatpush1.msra.mxu0 0.0
      %2398 = vmatprep.subr.mxu0 0.0
      %2399 = vmatpush1.msra.mxu0 0.0
      %2400 = vmatprep.subr.mxu0 0.0
      %2401 = vmatpush1.msra.mxu0 0.0
      %2402 = vmatprep.subr.mxu0 0.0
      %2403 = vmatpush1.msra.mxu0 0.0
      %2404 = vmatprep.subr.mxu0 0.0
      %2405 = vmatpush1.msra.mxu0 0.0
      %2406 = vmatprep.subr.mxu0 0.0
      %2407 = vmatpush1.msra.mxu0 0.0
      %2408 = vmatprep.subr.mxu0 0.0
      %2409 = vmatpush1.msra.mxu0 0.0
      %2410 = vmatprep.subr.mxu0 0.0
      %2411 = vmatpush1.msra.mxu0 0.0
      %2412 = vmatprep.subr.mxu0 0.0
      %2413 = vmatpush1.msra.mxu0 0.0
      %2414 = vmatprep.subr.mxu0 0.0
      %2415 = vmatpush1.msra.mxu0 0.0
      %2416 = vmatprep.subr.mxu0 0.0
      %2417 = vmatpush1.msra.mxu0 0.0
      %2418 = vmatprep.subr.mxu0 0.0
      %2419 = vmatpush1.msra.mxu0 0.0
      %2420 = vmatprep.subr.mxu0 0.0
      %2421 = vmatpush1.msra.mxu0 0.0
      %2422 = vmatprep.subr.mxu0 0.0
      %2423 = vmatpush1.msra.mxu0 0.0
      %2424 = vmatprep.mubr.f32.mxu0 0.0
      %2425 = vmatmul.mubr.f32.gmra.mrb[0].mxu0 %v2358
      %v2426 = vpop.f32.mrb[0].mxu0
      %v2427 = vadd.f32 %v2356, %v2426
      %v2428 = vpop.f32.mrb[0].mxu0
      %2429 = vdwg.mxu0
      %2430 = vst.msk [vmem:[%s2080 + $0x4] sm:$0x1] %vm697, %v2427
      %vm2431 = vcmp.eq.f32.partialorder %v2355, 0.0
      %v2432 = vsel %vm2431, 1, 0
      %v2433 = vcvt.s32.f32 %v2432
      %v2434 = vmul.f32 %v2427, %v2433
      %2435 = vst.msk [vmem:[#allocation2 + $0x4] sm:$0x1] %vm697, %v2434
      %v2436 = vmul.f32 %v2427, %v398
      %v2437 = vsel %vm697, %v2436, 0.0
      %2438 = vadd.xlane.f32.xlu0 %v2437
      %v2439 = vpop.xlane.xlu0 %2438
      %vm2440 = vcmp.gt.f32.partialorder %v2439, 0.6
      %v2441 = vsel %vm2440, 1, 0
      %v2442 = vcvt.s32.f32 %v2441
      %v2443 = vadd.f32 %v2355, %v2442
      %v2444 = vmul.f32 %v2439, %v398
      %v2446 = vsel %vm960, %v2427, 0
      %2448 = vmatprep.subr.mxu0 0.0
      %2449 = vmatpush1.msra.mxu0 %v2062
      %2450 = vmatprep.subr.mxu0 0.0
      %2451 = vmatpush1.msra.mxu0 %v2063
      %2452 = vmatprep.subr.mxu0 0.0
      %2453 = vmatpush1.msra.mxu0 %v2064
      %2454 = vmatprep.subr.mxu0 0.0
      %2455 = vmatpush1.msra.mxu0 %v2065
      %2456 = vmatprep.subr.mxu0 0.0
      %2457 = vmatpush1.msra.mxu0 %v2066
      %2458 = vmatprep.subr.mxu0 0.0
      %2459 = vmatpush1.msra.mxu0 %v2067
      %2460 = vmatprep.subr.mxu0 0.0
      %2461 = vmatpush1.msra.mxu0 %v2068
      %2462 = vmatprep.subr.mxu0 0.0
      %2463 = vmatpush1.msra.mxu0 %v2069
      %2464 = vmatprep.subr.mxu0 0.0
      %2465 = vmatpush1.msra.mxu0 0.0
      %2466 = vmatprep.subr.mxu0 0.0
      %2467 = vmatpush1.msra.mxu0 0.0
      %2468 = vmatprep.subr.mxu0 0.0
      %2469 = vmatpush1.msra.mxu0 0.0
      %2470 = vmatprep.subr.mxu0 0.0
      %2471 = vmatpush1.msra.mxu0 0.0
      %2472 = vmatprep.subr.mxu0 0.0
      %2473 = vmatpush1.msra.mxu0 0.0
      %2474 = vmatprep.subr.mxu0 0.0
      %2475 = vmatpush1.msra.mxu0 0.0
      %2476 = vmatprep.subr.mxu0 0.0
      %2477 = vmatpush1.msra.mxu0 0.0
      %2478 = vmatprep.subr.mxu0 0.0
      %2479 = vmatpush1.msra.mxu0 0.0
      %2480 = vmatprep.subr.mxu0 0.0
      %2481 = vmatpush1.msra.mxu0 0.0
      %2482 = vmatprep.subr.mxu0 0.0
      %2483 = vmatpush1.msra.mxu0 0.0
      %2484 = vmatprep.subr.mxu0 0.0
      %2485 = vmatpush1.msra.mxu0 0.0
      %2486 = vmatprep.subr.mxu0 0.0
      %2487 = vmatpush1.msra.mxu0 0.0
      %2488 = vmatprep.subr.mxu0 0.0
      %2489 = vmatpush1.msra.mxu0 0.0
      %2490 = vmatprep.subr.mxu0 0.0
      %2491 = vmatpush1.msra.mxu0 0.0
      %2492 = vmatprep.subr.mxu0 0.0
      %2493 = vmatpush1.msra.mxu0 0.0
      %2494 = vmatprep.subr.mxu0 0.0
      %2495 = vmatpush1.msra.mxu0 0.0
      %2496 = vmatprep.subr.mxu0 0.0
      %2497 = vmatpush1.msra.mxu0 0.0
      %2498 = vmatprep.subr.mxu0 0.0
      %2499 = vmatpush1.msra.mxu0 0.0
      %2500 = vmatprep.subr.mxu0 0.0
      %2501 = vmatpush1.msra.mxu0 0.0
      %2502 = vmatprep.subr.mxu0 0.0
      %2503 = vmatpush1.msra.mxu0 0.0
      %2504 = vmatprep.subr.mxu0 0.0
      %2505 = vmatpush1.msra.mxu0 0.0
      %2506 = vmatprep.subr.mxu0 0.0
      %2507 = vmatpush1.msra.mxu0 0.0
      %2508 = vmatprep.subr.mxu0 0.0
      %2509 = vmatpush1.msra.mxu0 0.0
      %2510 = vmatprep.subr.mxu0 0.0
      %2511 = vmatpush1.msra.mxu0 0.0
      %2512 = vmatprep.mubr.f32.mxu0 0.0
      %2513 = vmatmul.mubr.f32.gmra.mrb[0].mxu0 %v2446
      %v2514 = vpop.f32.mrb[0].mxu0
      %v2515 = vadd.f32 %v2444, %v2514
      %v2516 = vpop.f32.mrb[0].mxu0
      %2517 = vdwg.mxu0
      %2518 = vst.msk [vmem:[%s2080 + $0x5] sm:$0x1] %vm697, %v2515
      %vm2519 = vcmp.eq.f32.partialorder %v2443, 0.0
      %v2520 = vsel %vm2519, 1, 0
      %v2521 = vcvt.s32.f32 %v2520
      %v2522 = vmul.f32 %v2515, %v2521
      %2523 = vst.msk [vmem:[#allocation2 + $0x5] sm:$0x1] %vm697, %v2522
      %v2524 = vld [vmem:[#allocation2] sm:$0x3f]
      %v2526 = vsel %vm847, %v2524, 0
      %v2528 = vsel %vm1396, %v1561, 0
      %2530 = vmatprep.subr.mxu0 0.0
      %2531 = vmatpush1.msra.mxu0 %v1553
      %2532 = vmatprep.subr.mxu0 0.0
      %2533 = vmatpush1.msra.mxu0 %v1554
      %2534 = vmatprep.subr.mxu0 0.0
      %2535 = vmatpush1.msra.mxu0 %v1555
      %2536 = vmatprep.subr.mxu0 0.0
      %2537 = vmatpush1.msra.mxu0 %v1556
      %2538 = vmatprep.subr.mxu0 0.0
      %2539 = vmatpush1.msra.mxu0 %v1557
      %2540 = vmatprep.subr.mxu0 0.0
      %2541 = vmatpush1.msra.mxu0 %v1558
      %2542 = vmatprep.subr.mxu0 0.0
      %2543 = vmatpush1.msra.mxu0 %v1559
      %2544 = vmatprep.subr.mxu0 0.0
      %2545 = vmatpush1.msra.mxu0 %v1560
      %2546 = vmatprep.subr.mxu0 0.0
      %2547 = vmatpush1.msra.mxu0 %v2528
      %2548 = vmatprep.subr.mxu0 0.0
      %2549 = vmatpush1.msra.mxu0 0.0
      %2550 = vmatprep.subr.mxu0 0.0
      %2551 = vmatpush1.msra.mxu0 0.0
      %2552 = vmatprep.subr.mxu0 0.0
      %2553 = vmatpush1.msra.mxu0 0.0
      %2554 = vmatprep.subr.mxu0 0.0
      %2555 = vmatpush1.msra.mxu0 0.0
      %2556 = vmatprep.subr.mxu0 0.0
      %2557 = vmatpush1.msra.mxu0 0.0
      %2558 = vmatprep.subr.mxu0 0.0
      %2559 = vmatpush1.msra.mxu0 0.0
      %2560 = vmatprep.subr.mxu0 0.0
      %2561 = vmatpush1.msra.mxu0 0.0
      %2562 = vmatprep.subr.mxu0 0.0
      %2563 = vmatpush1.msra.mxu0 0.0
      %2564 = vmatprep.subr.mxu0 0.0
      %2565 = vmatpush1.msra.mxu0 0.0
      %2566 = vmatprep.subr.mxu0 0.0
      %2567 = vmatpush1.msra.mxu0 0.0
      %2568 = vmatprep.subr.mxu0 0.0
      %2569 = vmatpush1.msra.mxu0 0.0
      %2570 = vmatprep.subr.mxu0 0.0
      %2571 = vmatpush1.msra.mxu0 0.0
      %2572 = vmatprep.subr.mxu0 0.0
      %2573 = vmatpush1.msra.mxu0 0.0
      %2574 = vmatprep.subr.mxu0 0.0
      %2575 = vmatpush1.msra.mxu0 0.0
      %2576 = vmatprep.subr.mxu0 0.0
      %2577 = vmatpush1.msra.mxu0 0.0
      %2578 = vmatprep.subr.mxu0 0.0
      %2579 = vmatpush1.msra.mxu0 0.0
      %2580 = vmatprep.subr.mxu0 0.0
      %2581 = vmatpush1.msra.mxu0 0.0
      %2582 = vmatprep.subr.mxu0 0.0
      %2583 = vmatpush1.msra.mxu0 0.0
      %2584 = vmatprep.subr.mxu0 0.0
      %2585 = vmatpush1.msra.mxu0 0.0
      %2586 = vmatprep.subr.mxu0 0.0
      %2587 = vmatpush1.msra.mxu0 0.0
      %2588 = vmatprep.subr.mxu0 0.0
      %2589 = vmatpush1.msra.mxu0 0.0
      %2590 = vmatprep.subr.mxu0 0.0
      %2591 = vmatpush1.msra.mxu0 0.0
      %2592 = vmatprep.subr.mxu0 0.0
      %2593 = vmatpush1.msra.mxu0 0.0
      %2594 = vmatprep.mubr.f32.mxu0 0.0
      %2595 = vmatmul.mubr.f32.gmra.mrb[0].mxu0 %v2526
      %v2596 = vpop.f32.mrb[0].mxu0
      %v2597 = vadd.f32 0.0, %v2596
      %v2598 = vpop.f32.mrb[0].mxu0
      %2599 = vdwg.mxu0
      %s2600 = scalar_lea.vmem %s368, 8
      %2601 = vst.msk [vmem:[%s2600] sm:$0x3f] %vm1469, %v2597
      %v2603 = vsel %vm414, %v2597, 0
      %2605 = vmatprep.subr.mxu0 0.0
      %2606 = vmatpush1.msra.mxu0 %v388
      %2607 = vmatprep.subr.mxu0 0.0
      %2608 = vmatpush1.msra.mxu0 %v389
      %2609 = vmatprep.subr.mxu0 0.0
      %2610 = vmatpush1.msra.mxu0 %v390
      %2611 = vmatprep.subr.mxu0 0.0
      %2612 = vmatpush1.msra.mxu0 %v391
      %2613 = vmatprep.subr.mxu0 0.0
      %2614 = vmatpush1.msra.mxu0 0.0
      %2615 = vmatprep.subr.mxu0 0.0
      %2616 = vmatpush1.msra.mxu0 0.0
      %2617 = vmatprep.subr.mxu0 0.0
      %2618 = vmatpush1.msra.mxu0 0.0
      %2619 = vmatprep.subr.mxu0 0.0
      %2620 = vmatpush1.msra.mxu0 0.0
      %2621 = vmatprep.subr.mxu0 0.0
      %2622 = vmatpush1.msra.mxu0 0.0
      %2623 = vmatprep.subr.mxu0 0.0
      %2624 = vmatpush1.msra.mxu0 0.0
      %2625 = vmatprep.subr.mxu0 0.0
      %2626 = vmatpush1.msra.mxu0 0.0
      %2627 = vmatprep.subr.mxu0 0.0
      %2628 = vmatpush1.msra.mxu0 0.0
      %2629 = vmatprep.subr.mxu0 0.0
      %2630 = vmatpush1.msra.mxu0 0.0
      %2631 = vmatprep.subr.mxu0 0.0
      %2632 = vmatpush1.msra.mxu0 0.0
      %2633 = vmatprep.subr.mxu0 0.0
      %2634 = vmatpush1.msra.mxu0 0.0
      %2635 = vmatprep.subr.mxu0 0.0
      %2636 = vmatpush1.msra.mxu0 0.0
      %2637 = vmatprep.subr.mxu0 0.0
      %2638 = vmatpush1.msra.mxu0 0.0
      %2639 = vmatprep.subr.mxu0 0.0
      %2640 = vmatpush1.msra.mxu0 0.0
      %2641 = vmatprep.subr.mxu0 0.0
      %2642 = vmatpush1.msra.mxu0 0.0
      %2643 = vmatprep.subr.mxu0 0.0
      %2644 = vmatpush1.msra.mxu0 0.0
      %2645 = vmatprep.subr.mxu0 0.0
      %2646 = vmatpush1.msra.mxu0 0.0
      %2647 = vmatprep.subr.mxu0 0.0
      %2648 = vmatpush1.msra.mxu0 0.0
      %2649 = vmatprep.subr.mxu0 0.0
      %2650 = vmatpush1.msra.mxu0 0.0
      %2651 = vmatprep.subr.mxu0 0.0
      %2652 = vmatpush1.msra.mxu0 0.0
      %2653 = vmatprep.subr.mxu0 0.0
      %2654 = vmatpush1.msra.mxu0 0.0
      %2655 = vmatprep.subr.mxu0 0.0
      %2656 = vmatpush1.msra.mxu0 0.0
      %2657 = vmatprep.subr.mxu0 0.0
      %2658 = vmatpush1.msra.mxu0 0.0
      %2659 = vmatprep.subr.mxu0 0.0
      %2660 = vmatpush1.msra.mxu0 0.0
      %2661 = vmatprep.subr.mxu0 0.0
      %2662 = vmatpush1.msra.mxu0 0.0
      %2663 = vmatprep.subr.mxu0 0.0
      %2664 = vmatpush1.msra.mxu0 0.0
      %2665 = vmatprep.subr.mxu0 0.0
      %2666 = vmatpush1.msra.mxu0 0.0
      %2667 = vmatprep.subr.mxu0 0.0
      %2668 = vmatpush1.msra.mxu0 0.0
      %2669 = vmatprep.mubr.f32.mxu0 0.0
      %2670 = vmatmul.mubr.f32.gmra.mrb[0].mxu0 %v2603
      %v2671 = vpop.f32.mrb[0].mxu0
      %v2672 = vadd.f32 %v1475, %v2671
      %v2673 = vpop.f32.mrb[0].mxu0
      %2674 = vdwg.mxu0
      %s2675 = scalar_lea.vmem %s362, 8
      %2676 = vst.msk [vmem:[%s2675] sm:$0x3f] %vm1550, %v2672
      %s2677 = smul.u32 2, %s23
      %p2678 = scmp.lt.s32.totalorder %s2677, 7
      %s2679 = scalar_select %p2678, %s2677, 7
      %s2680 = smul.addr %s2679, 8
      %s2681 = scalar_lea.vmem %s6, %s2680
      %s2682 = smul.u32 2, %s23
      %p2683 = scmp.lt.s32.totalorder %s2682, 7
      %s2684 = scalar_select %p2683, %s2682, 7
      %s2685 = smul.addr %s2684, 8
      %s2686 = scalar_lea.vmem %s7, %s2685
      %s2687 = smul.u32 2, %s23
      %p2688 = scmp.lt.s32.totalorder %s2687, 7
      %s2689 = scalar_select %p2688, %s2687, 7
      %s2690 = smul.addr %s2689, 8
      %s2691 = scalar_lea.vmem %s8, %s2690
      %s2692 = smul.u32 2, %s23
      %p2693 = scmp.lt.s32.totalorder %s2692, 7
      %s2694 = scalar_select %p2693, %s2692, 7
      %s2695 = smul.addr %s2694, 9
      %s2696 = smul.addr %s2695, 8
      %s2697 = scalar_lea.vmem %s9, %s2696
      // Predicated region
      $region45: #{tpu_custom_call.1} parent=43 // pred_check
        %p2698 = pneg %p172
      $region46: #{tpu_custom_call.1} parent=43 // pred_check_branch
        %2700 = sbr.rel (%p2698) target = $region48
      $region47: #{tpu_custom_call.1} parent=43 // pred_region
        %s2701 = smul.u32 2, %s23
      $region48: #{tpu_custom_call.1} parent=43 // pred_fallthru
        _
      // Predicated region
      $region49: #{tpu_custom_call.1} parent=43 // pred_check
        %p2702 = pneg %p198
      $region50: #{tpu_custom_call.1} parent=43 // pred_check_branch
        %2704 = sbr.rel (%p2702) target = $region52
      $region51: #{tpu_custom_call.1} parent=43 // pred_region
        %s2705 = smul.u32 2, %s23
      $region52: #{tpu_custom_call.1} parent=43 // pred_fallthru
        _
      // Predicated region
      $region53: #{tpu_custom_call.1} parent=43 // pred_check
        %p2706 = pneg %p224
      $region54: #{tpu_custom_call.1} parent=43 // pred_check_branch
        %2708 = sbr.rel (%p2706) target = $region56
      $region55: #{tpu_custom_call.1} parent=43 // pred_region
        %s2709 = smul.u32 2, %s23
      $region56: #{tpu_custom_call.1} parent=43 // pred_fallthru
        _
      // Predicated region
      $region57: #{tpu_custom_call.1} parent=43 // pred_check
        %p2710 = pneg %p250
      $region58: #{tpu_custom_call.1} parent=43 // pred_check_branch
        %2712 = sbr.rel (%p2710) target = $region60
      $region59: #{tpu_custom_call.1} parent=43 // pred_region
        %s2713 = smul.u32 2, %s23
      $region60: #{tpu_custom_call.1} parent=43 // pred_fallthru
        _
    $region44: #{tpu_custom_call.1} parent=5 // pred_fallthru
      _
    %p2714 = scmp.le.s32.totalorder 2, %s18
    // Predicated region
    $region61: #{tpu_custom_call.1} parent=5 // pred_check
      %p2715 = pneg %p2714
    $region62: #{tpu_custom_call.1} parent=5 // pred_check_branch
      %2717 = sbr.rel (%p2715) target = $region64
    $region63: #{tpu_custom_call.1} parent=5 // pred_region
      %s2718 = ssub.s32 %s18, 2
      // Predicated region
      $region65: #{tpu_custom_call.1} parent=63 // pred_check
        %p2719 = pneg %p178
      $region66: #{tpu_custom_call.1} parent=63 // pred_check_branch
        %2721 = sbr.rel (%p2719) target = $region68
      $region67: #{tpu_custom_call.1} parent=63 // pred_region
        %s2722 = smul.u32 2, %s24
        %p2723 = scmp.lt.s32.totalorder %s2722, 7
        %s2724 = scalar_select %p2723, %s2722, 7
        %s2725 = smul.addr %s2724, 8
        %s2726 = scalar_lea.vmem %s6, %s2725
      $region68: #{tpu_custom_call.1} parent=63 // pred_fallthru
        _
      // Predicated region
      $region69: #{tpu_custom_call.1} parent=63 // pred_check
        %p2727 = pneg %p204
      $region70: #{tpu_custom_call.1} parent=63 // pred_check_branch
        %2729 = sbr.rel (%p2727) target = $region72
      $region71: #{tpu_custom_call.1} parent=63 // pred_region
        %s2730 = smul.u32 2, %s24
        %p2731 = scmp.lt.s32.totalorder %s2730, 7
        %s2732 = scalar_select %p2731, %s2730, 7
        %s2733 = smul.addr %s2732, 8
        %s2734 = scalar_lea.vmem %s7, %s2733
      $region72: #{tpu_custom_call.1} parent=63 // pred_fallthru
        _
      // Predicated region
      $region73: #{tpu_custom_call.1} parent=63 // pred_check
        %p2735 = pneg %p230
      $region74: #{tpu_custom_call.1} parent=63 // pred_check_branch
        %2737 = sbr.rel (%p2735) target = $region76
      $region75: #{tpu_custom_call.1} parent=63 // pred_region
        %s2738 = smul.u32 2, %s24
        %p2739 = scmp.lt.s32.totalorder %s2738, 7
        %s2740 = scalar_select %p2739, %s2738, 7
        %s2741 = smul.addr %s2740, 8
        %s2742 = scalar_lea.vmem %s8, %s2741
      $region76: #{tpu_custom_call.1} parent=63 // pred_fallthru
        _
      // Predicated region
      $region77: #{tpu_custom_call.1} parent=63 // pred_check
        %p2743 = pneg %p256
      $region78: #{tpu_custom_call.1} parent=63 // pred_check_branch
        %2745 = sbr.rel (%p2743) target = $region80
      $region79: #{tpu_custom_call.1} parent=63 // pred_region
        %s2746 = smul.u32 2, %s24
        %p2747 = scmp.lt.s32.totalorder %s2746, 7
        %s2748 = scalar_select %p2747, %s2746, 7
        %s2749 = smul.addr %s2748, 9
        %s2750 = smul.addr %s2749, 8
        %s2751 = scalar_lea.vmem %s9, %s2750
      $region80: #{tpu_custom_call.1} parent=63 // pred_fallthru
        _
    $region64: #{tpu_custom_call.1} parent=5 // pred_fallthru
      _
  $region6: #{tpu_custom_call.1} parent=0 // loop_footer
    %s22 = sadd.s32 1, %s18
  $region7: #{tpu_custom_call.1} parent=0 // loop_footer_branch
    %17 = sbr.rel target = $region3
  $region8: #{tpu_custom_call.1} parent=0 // loop_exit
    _

</llo_original>
